<compile_context>
chip_gen: v7x
topology: tpu7x:2x2x1
jax: 0.10.0
libtpu: 0.0.40
codegen_flags: <defaults>
</compile_context>

<pallas_src>
import functools

import jax
import jax.numpy as jnp
from jax.experimental import pallas as pl
from jax.experimental.pallas import tpu as pltpu


def decoder_kernel(x_ref, mel_ref,
                   pw1_ref, pb1_ref, pw2_ref, pb2_ref,
                   rpwx_ref, rpwp_ref, rpb_ref,
                   g0wih_ref, g0whh_ref, g0bi_ref, g0bhn_ref,
                   g1wih_ref, g1whh_ref, g1bi_ref, g1bhn_ref,
                   mw_ref, mb_ref,
                   out_ref,
                   d_scr, gi0_scr, h_scr):
    TB, BB, Dx = x_ref.shape
    M = mel_ref.shape[-1]
    H = g0whh_ref.shape[0]

    # initialize(): zero hidden states at the first time block of each batch block.
    @pl.when(pl.program_id(1) == 0)
    def _():
        h_scr[...] = jnp.zeros_like(h_scr)

    # ---- phase 1: everything independent of the hidden state, batched over
    #      all TB*BB rows (Prenet, rnn_projection, GRU0 input-gate half). ----
    mel_flat = mel_ref[...].reshape(TB * BB, M)
    x_flat = x_ref[...].reshape(TB * BB, Dx)
    # Prenet: two Linear + ReLU (dropout omitted -> deterministic).
    p = jnp.maximum(
        jnp.dot(mel_flat, pw1_ref[...], preferred_element_type=jnp.float32)
        + pb1_ref[...], 0.0)
    p = jnp.maximum(
        jnp.dot(p, pw2_ref[...], preferred_element_type=jnp.float32)
        + pb2_ref[...], 0.0)
    # rnn_projection(concat([x, p], -1)) as a split matmul (no lane concat).
    d_all = (jnp.dot(x_flat, rpwx_ref[...], preferred_element_type=jnp.float32)
             + jnp.dot(p, rpwp_ref[...], preferred_element_type=jnp.float32)
             + rpb_ref[...])
    # GRU0 input half of the gates: also hidden-state independent.
    gi0_all = (jnp.dot(d_all, g0wih_ref[...], preferred_element_type=jnp.float32)
               + g0bi_ref[...])
    d_scr[...] = d_all.reshape(TB, BB, H)
    gi0_scr[...] = gi0_all.reshape(TB, BB, 3 * H)

    # Hoist weight / bias vreg loads out of the recurrent loop.
    w0hh = g0whh_ref[...]
    w1ih = g1wih_ref[...]
    w1hh = g1whh_ref[...]
    b1i = jnp.broadcast_to(g1bi_ref[...], (BB, 3 * H))
    b0hn = jnp.broadcast_to(g0bhn_ref[...], (BB, H))
    b1hn = jnp.broadcast_to(g1bhn_ref[...], (BB, H))

    # ---- phase 2: serial GRU recurrence; hidden states carried in vregs. ----
    # Only 3 MXU pushes remain on the per-step serial chain:
    #   h0 @ whh0,  (d + h0) @ wih1,  h1 @ whh1
    def step(t, carry):
        h0, h1 = carry

        # GRUCell 0 (r/z hidden biases pre-folded into gi0; n-gate keeps b_hn).
        gi0 = gi0_scr[t]
        gh0 = jnp.dot(h0, w0hh, preferred_element_type=jnp.float32)
        r = jax.nn.sigmoid(gi0[:, :H] + gh0[:, :H])
        z = jax.nn.sigmoid(gi0[:, H:2 * H] + gh0[:, H:2 * H])
        n = jnp.tanh(gi0[:, 2 * H:] + r * (gh0[:, 2 * H:] + b0hn))
        h0 = (1.0 - z) * n + z * h0
        d1 = d_scr[t] + h0                       # residual add

        # GRUCell 1.
        gi1 = jnp.dot(d1, w1ih, preferred_element_type=jnp.float32) + b1i
        gh1 = jnp.dot(h1, w1hh, preferred_element_type=jnp.float32)
        r = jax.nn.sigmoid(gi1[:, :H] + gh1[:, :H])
        z = jax.nn.sigmoid(gi1[:, H:2 * H] + gh1[:, H:2 * H])
        n = jnp.tanh(gi1[:, 2 * H:] + r * (gh1[:, 2 * H:] + b1hn))
        h1 = (1.0 - z) * n + z * h1

        d_scr[t] = d1 + h1                       # per-step decoder output
        return (h0, h1)

    h_final = jax.lax.fori_loop(0, TB, step, (h_scr[0], h_scr[1]),
                                unroll=TB <= 16)
    h_scr[0] = h_final[0]                        # carry across time blocks
    h_scr[1] = h_final[1]

    # ---- phase 3: deferred mel_projection as one batched GEMM + one store. ----
    d_out = d_scr[...].reshape(TB * BB, H)
    mel_out = (jnp.dot(d_out, mw_ref[...], preferred_element_type=jnp.float32)
               + mb_ref[...])
    out_ref[...] = mel_out.reshape(out_ref.shape)


def decoder_forward(params, x, mel_inputs, *, decoder_size, reduction, mel_size,
                    time_block=64):
    B, T, Dx = x.shape
    assert mel_inputs.shape[0] == B and mel_inputs.shape[1] >= T, \
        "kernel implements the teacher-forcing path (mel_inputs time dim >= T)"
    H, R, M = decoder_size, reduction, mel_size

    BB = 8                                       # sublane-aligned batch block
    TB = T if T <= time_block else time_block
    B_pad = ((B + BB - 1) // BB) * BB
    T_pad = ((T + TB - 1) // TB) * TB

    # time-major (PyTorch transpose(0,1)), f32, zero-padded batch / time.
    x_tm = jnp.transpose(x, (1, 0, 2)).astype(jnp.float32)                 # (T, B, Dx)
    mel_tm = jnp.transpose(mel_inputs, (1, 0, 2))[:T].astype(jnp.float32)  # (T, B, M)
    x_tm = jnp.pad(x_tm, ((0, T_pad - T), (0, B_pad - B), (0, 0)))
    mel_tm = jnp.pad(mel_tm, ((0, T_pad - T), (0, B_pad - B), (0, 0)))

    # Pre-fold the r/z hidden biases into the input biases; the n-gate hidden
    # bias must stay separate because of the r * (Whh h + b_hn) term.
    def fold(bih, bhh):
        mask = jnp.concatenate(
            [jnp.ones((1, 2 * H), jnp.float32), jnp.zeros((1, H), jnp.float32)],
            axis=1)
        return ((bih + bhh * mask).astype(jnp.float32),
                bhh[:, 2 * H:].astype(jnp.float32))

    g0_bi, g0_bhn = fold(params["g0_bih"], params["g0_bhh"])
    g1_bi, g1_bhn = fold(params["g1_bih"], params["g1_bhh"])

    weights = [params["pw1"], params["pb1"], params["pw2"], params["pb2"],
               params["rpw_x"], params["rpw_p"], params["rpb"],
               params["g0_wih"], params["g0_whh"], g0_bi, g0_bhn,
               params["g1_wih"], params["g1_whh"], g1_bi, g1_bhn,
               params["mw"], params["mb"]]
    weights = [w.astype(jnp.float32) for w in weights]

    def const_map(b, t, nd):
        return (0,) * nd

    w_specs = [pl.BlockSpec(w.shape, functools.partial(const_map, nd=w.ndim))
               for w in weights]

    grid = (B_pad // BB, T_pad // TB)
    grid_spec = pltpu.PrefetchScalarGridSpec(
        num_scalar_prefetch=0,
        grid=grid,
        in_specs=[pl.BlockSpec((TB, BB, Dx), lambda b, t: (t, b, 0)),
                  pl.BlockSpec((TB, BB, M), lambda b, t: (t, b, 0))] + w_specs,
        out_specs=pl.BlockSpec((TB, BB, R * M), lambda b, t: (t, b, 0)),
        scratch_shapes=[pltpu.VMEM((TB, BB, H), jnp.float32),       # d / d_out slab
                        pltpu.VMEM((TB, BB, 3 * H), jnp.float32),   # precomputed GRU0 gi
                        pltpu.VMEM((2, BB, H), jnp.float32)],       # h0/h1 block carry
    )

    out = pl.pallas_call(
        decoder_kernel,
        out_shape=jax.ShapeDtypeStruct((T_pad, B_pad, R * M), jnp.float32),
        grid_spec=grid_spec,
        compiler_params=pltpu.CompilerParams(
            dimension_semantics=("parallel", "arbitrary")),
    )(x_tm, mel_tm, *weights)

    # Drop padding; then replicate PyTorch: per-step .view(R, -1, M), cat over
    # time, transpose(0, 1):  (T, B, R*M) -> (T*R, B, M) -> (B, T*R, M)
    out = out[:T, :B].reshape(T * R, B, M)
    return jnp.transpose(out, (1, 0, 2))


def decoder_reference(params, x, mel_inputs, *, decoder_size, reduction, mel_size):
    """Pure-JAX mirror of the PyTorch forward (teacher forcing, no dropout)."""
    B, T, Dx = x.shape
    H, R, M = decoder_size, reduction, mel_size
    x_tm = jnp.transpose(x, (1, 0, 2))
    mel_tm = jnp.transpose(mel_inputs, (1, 0, 2))
    h = [jnp.zeros((B, H), jnp.float32), jnp.zeros((B, H), jnp.float32)]
    mel_input = mel_tm[0]
    outs = []
    for i in range(T):
        p = jax.nn.relu(mel_input @ params["pw1"] + params["pb1"])
        p = jax.nn.relu(p @ params["pw2"] + params["pb2"])
        d = x_tm[i] @ params["rpw_x"] + p @ params["rpw_p"] + params["rpb"]
        for l in range(2):
            wih, whh = params[f"g{l}_wih"], params[f"g{l}_whh"]
            bih, bhh = params[f"g{l}_bih"], params[f"g{l}_bhh"]
            gi = d @ wih + bih
            gh = h[l] @ whh + bhh
            r = jax.nn.sigmoid(gi[:, :H] + gh[:, :H])
            z = jax.nn.sigmoid(gi[:, H:2 * H] + gh[:, H:2 * H])
            n = jnp.tanh(gi[:, 2 * H:] + r * gh[:, 2 * H:])
            h[l] = (1.0 - z) * n + z * h[l]
            d = d + h[l]
        mo = d @ params["mw"] + params["mb"]          # (B, R*M)
        outs.append(mo.reshape(R, B, M))              # PyTorch .view(R, -1, M)
        if mel_tm.shape[0] > 1 and i < mel_tm.shape[0] - 1:
            mel_input = mel_tm[i + 1]
    return jnp.transpose(jnp.concatenate(outs, axis=0), (1, 0, 2))


def init_params(key, *, mel_size, prenet_sizes, x_dim, decoder_size, reduction):
    P0, P1 = prenet_sizes
    H, R, M = decoder_size, reduction, mel_size
    keys = jax.random.split(key, 17)
    s = 0.1

    def w(k, shape):
        return s * jax.random.normal(k, shape, jnp.float32)

    # GRU gate weights stacked on lanes as [r | z | n].
    return {
        "pw1": w(keys[0], (M, P0)),        "pb1": w(keys[1], (1, P0)),
        "pw2": w(keys[2], (P0, P1)),       "pb2": w(keys[3], (1, P1)),
        "rpw_x": w(keys[4], (x_dim, H)),   "rpw_p": w(keys[5], (P1, H)),
        "rpb": w(keys[6], (1, H)),
        "g0_wih": w(keys[7], (H, 3 * H)),  "g0_whh": w(keys[8], (H, 3 * H)),
        "g0_bih": w(keys[9], (1, 3 * H)),  "g0_bhh": w(keys[10], (1, 3 * H)),
        "g1_wih": w(keys[11], (H, 3 * H)), "g1_whh": w(keys[12], (H, 3 * H)),
        "g1_bih": w(keys[13], (1, 3 * H)), "g1_bhh": w(keys[14], (1, 3 * H)),
        "mw": w(keys[15], (H, R * M)),     "mb": w(keys[16], (1, R * M)),
    }


if __name__ == "__main__":
    # config: mel_size=16, dur_prenet_size=(32,16), dur_alignment_size=13,
    #         acoustic_embedded=False -> x_dim = 13 + 3 = 16,
    #         dur_decoder_size=32, dur_reduction=2
    MEL, PRENET, X_DIM, DEC, RED = 16, (32, 16), 16, 32, 2
    B, T = 2, 8

    key = jax.random.PRNGKey(0)
    kp, kx, km = jax.random.split(key, 3)
    params = init_params(kp, mel_size=MEL, prenet_sizes=PRENET, x_dim=X_DIM,
                         decoder_size=DEC, reduction=RED)
    x = jax.random.normal(kx, (B, T, X_DIM), jnp.float32)
    mel_inputs = jax.random.normal(km, (B, T, MEL), jnp.float32)

    out = decoder_forward(params, x, mel_inputs,
                          decoder_size=DEC, reduction=RED, mel_size=MEL)
    out = jax.block_until_ready(out)
    assert out.shape == (B, T * RED, MEL), out.shape

    ref = decoder_reference(params, x, mel_inputs,
                            decoder_size=DEC, reduction=RED, mel_size=MEL)
    ref = jax.block_until_ready(ref)
    assert jnp.allclose(out, ref, atol=1e-3, rtol=1e-3), (
        float(jnp.max(jnp.abs(out - ref))))

    print("KERNEL_OK")
</pallas_src>

<mosaic_0001>
module attributes {stable_mosaic.version = 11 : i64} {
  func.func @decoder_kernel(%arg0: i32, %arg1: i32, %arg2: memref<8x8x16xf32, #tpu.memory_space<vmem>>, %arg3: memref<8x8x16xf32, #tpu.memory_space<vmem>>, %arg4: memref<16x32xf32, #tpu.memory_space<vmem>>, %arg5: memref<1x32xf32, #tpu.memory_space<vmem>>, %arg6: memref<32x16xf32, #tpu.memory_space<vmem>>, %arg7: memref<1x16xf32, #tpu.memory_space<vmem>>, %arg8: memref<16x32xf32, #tpu.memory_space<vmem>>, %arg9: memref<16x32xf32, #tpu.memory_space<vmem>>, %arg10: memref<1x32xf32, #tpu.memory_space<vmem>>, %arg11: memref<32x96xf32, #tpu.memory_space<vmem>>, %arg12: memref<32x96xf32, #tpu.memory_space<vmem>>, %arg13: memref<1x96xf32, #tpu.memory_space<vmem>>, %arg14: memref<1x32xf32, #tpu.memory_space<vmem>>, %arg15: memref<32x96xf32, #tpu.memory_space<vmem>>, %arg16: memref<32x96xf32, #tpu.memory_space<vmem>>, %arg17: memref<1x96xf32, #tpu.memory_space<vmem>>, %arg18: memref<1x32xf32, #tpu.memory_space<vmem>>, %arg19: memref<32x32xf32, #tpu.memory_space<vmem>>, %arg20: memref<1x32xf32, #tpu.memory_space<vmem>>, %arg21: memref<8x8x32xf32, #tpu.memory_space<vmem>>, %arg22: memref<8x8x32xf32, #tpu.memory_space<vmem>>, %arg23: memref<8x8x96xf32, #tpu.memory_space<vmem>>, %arg24: memref<2x8x32xf32, #tpu.memory_space<vmem>>) attributes {dimension_semantics = [#tpu.dimension_semantics<parallel>, #tpu.dimension_semantics<arbitrary>], iteration_bounds = array<i64: 1, 1>, scalar_prefetch = 0 : i64, scratch_operands = 3 : i64, tpu.core_type = #tpu.core_type<tc>, window_params = [{transform_indices = @transform_0, window_bounds = array<i64: 8, 8, 16>}, {transform_indices = @transform_1, window_bounds = array<i64: 8, 8, 16>}, {pipeline_mode = #tpu.pipeline_mode<synchronous>, transform_indices = @transform_2, window_bounds = array<i64: 16, 32>}, {pipeline_mode = #tpu.pipeline_mode<synchronous>, transform_indices = @transform_3, window_bounds = array<i64: 1, 32>}, {pipeline_mode = #tpu.pipeline_mode<synchronous>, transform_indices = @transform_4, window_bounds = array<i64: 32, 16>}, {pipeline_mode = #tpu.pipeline_mode<synchronous>, transform_indices = @transform_5, window_bounds = array<i64: 1, 16>}, {pipeline_mode = #tpu.pipeline_mode<synchronous>, transform_indices = @transform_6, window_bounds = array<i64: 16, 32>}, {pipeline_mode = #tpu.pipeline_mode<synchronous>, transform_indices = @transform_7, window_bounds = array<i64: 16, 32>}, {pipeline_mode = #tpu.pipeline_mode<synchronous>, transform_indices = @transform_8, window_bounds = array<i64: 1, 32>}, {pipeline_mode = #tpu.pipeline_mode<synchronous>, transform_indices = @transform_9, window_bounds = array<i64: 32, 96>}, {pipeline_mode = #tpu.pipeline_mode<synchronous>, transform_indices = @transform_10, window_bounds = array<i64: 32, 96>}, {pipeline_mode = #tpu.pipeline_mode<synchronous>, transform_indices = @transform_11, window_bounds = array<i64: 1, 96>}, {pipeline_mode = #tpu.pipeline_mode<synchronous>, transform_indices = @transform_12, window_bounds = array<i64: 1, 32>}, {pipeline_mode = #tpu.pipeline_mode<synchronous>, transform_indices = @transform_13, window_bounds = array<i64: 32, 96>}, {pipeline_mode = #tpu.pipeline_mode<synchronous>, transform_indices = @transform_14, window_bounds = array<i64: 32, 96>}, {pipeline_mode = #tpu.pipeline_mode<synchronous>, transform_indices = @transform_15, window_bounds = array<i64: 1, 96>}, {pipeline_mode = #tpu.pipeline_mode<synchronous>, transform_indices = @transform_16, window_bounds = array<i64: 1, 32>}, {pipeline_mode = #tpu.pipeline_mode<synchronous>, transform_indices = @transform_17, window_bounds = array<i64: 32, 32>}, {pipeline_mode = #tpu.pipeline_mode<synchronous>, transform_indices = @transform_18, window_bounds = array<i64: 1, 32>}, {transform_indices = @transform_19, window_bounds = array<i64: 8, 8, 32>}]} {
    %c0_i32 = arith.constant 0 : i32
    %0 = arith.cmpi eq, %arg1, %c0_i32 : i32
    %1 = arith.extui %0 : i1 to i32
    %c0_i32_0 = arith.constant 0 : i32
    %2 = arith.cmpi ne, %1, %c0_i32_0 : i32
    scf.if %2 {
      %cst_191 = arith.constant 0.000000e+00 : f32
      %629 = vector.broadcast %cst_191 : f32 to vector<2x8x32xf32>
      %c0_192 = arith.constant 0 : index
      %c0_193 = arith.constant 0 : index
      %c0_194 = arith.constant 0 : index
      %630 = vector.load %arg24[%c0_192, %c0_193, %c0_194] : memref<2x8x32xf32, #tpu.memory_space<vmem>>, vector<2x8x32xf32>
      tpu.vector_store %arg24[%c0_192, %c0_193, %c0_194], %629 {strides = array<i32>} : memref<2x8x32xf32, #tpu.memory_space<vmem>>, vector<2x8x32xf32>,
    } else {
    }
    %c0 = arith.constant 0 : index
    %c0_1 = arith.constant 0 : index
    %c0_2 = arith.constant 0 : index
    %3 = vector.load %arg3[%c0, %c0_1, %c0_2] : memref<8x8x16xf32, #tpu.memory_space<vmem>>, vector<8x8x16xf32>
    %4 = vector.shape_cast %3 : vector<8x8x16xf32> to vector<64x16xf32>
    %c0_3 = arith.constant 0 : index
    %c0_4 = arith.constant 0 : index
    %c0_5 = arith.constant 0 : index
    %5 = vector.load %arg2[%c0_3, %c0_4, %c0_5] : memref<8x8x16xf32, #tpu.memory_space<vmem>>, vector<8x8x16xf32>
    %6 = vector.shape_cast %5 : vector<8x8x16xf32> to vector<64x16xf32>
    %c0_6 = arith.constant 0 : index
    %c0_7 = arith.constant 0 : index
    %7 = vector.load %arg4[%c0_6, %c0_7] : memref<16x32xf32, #tpu.memory_space<vmem>>, vector<16x32xf32>
    %cst = arith.constant dense<0.000000e+00> : vector<64x32xf32>
    %8 = tpu.matmul %4, %7, %cst {dimension_numbers = #tpu.dot_dimension_numbers<[1], [0], [0], [1], [0, 0, 1, 1], [], []>} : vector<64x16xf32>, vector<16x32xf32>, vector<64x32xf32> -> vector<64x32xf32>
    %c0_8 = arith.constant 0 : index
    %c0_9 = arith.constant 0 : index
    %9 = vector.load %arg5[%c0_8, %c0_9] : memref<1x32xf32, #tpu.memory_space<vmem>>, vector<1x32xf32>
    %10 = vector.broadcast %9 : vector<1x32xf32> to vector<64x32xf32>
    %11 = arith.addf %8, %10 : vector<64x32xf32>
    %cst_10 = arith.constant 0.000000e+00 : f32
    %12 = vector.broadcast %cst_10 : f32 to vector<64x32xf32>
    %13 = arith.maximumf %11, %12 : vector<64x32xf32>
    %c0_11 = arith.constant 0 : index
    %c0_12 = arith.constant 0 : index
    %14 = vector.load %arg6[%c0_11, %c0_12] : memref<32x16xf32, #tpu.memory_space<vmem>>, vector<32x16xf32>
    %cst_13 = arith.constant dense<0.000000e+00> : vector<64x16xf32>
    %15 = tpu.matmul %13, %14, %cst_13 {dimension_numbers = #tpu.dot_dimension_numbers<[1], [0], [0], [1], [0, 0, 1, 1], [], []>} : vector<64x32xf32>, vector<32x16xf32>, vector<64x16xf32> -> vector<64x16xf32>
    %c0_14 = arith.constant 0 : index
    %c0_15 = arith.constant 0 : index
    %16 = vector.load %arg7[%c0_14, %c0_15] : memref<1x16xf32, #tpu.memory_space<vmem>>, vector<1x16xf32>
    %17 = vector.broadcast %16 : vector<1x16xf32> to vector<64x16xf32>
    %18 = arith.addf %15, %17 : vector<64x16xf32>
    %cst_16 = arith.constant 0.000000e+00 : f32
    %19 = vector.broadcast %cst_16 : f32 to vector<64x16xf32>
    %20 = arith.maximumf %18, %19 : vector<64x16xf32>
    %c0_17 = arith.constant 0 : index
    %c0_18 = arith.constant 0 : index
    %21 = vector.load %arg8[%c0_17, %c0_18] : memref<16x32xf32, #tpu.memory_space<vmem>>, vector<16x32xf32>
    %cst_19 = arith.constant dense<0.000000e+00> : vector<64x32xf32>
    %22 = tpu.matmul %6, %21, %cst_19 {dimension_numbers = #tpu.dot_dimension_numbers<[1], [0], [0], [1], [0, 0, 1, 1], [], []>} : vector<64x16xf32>, vector<16x32xf32>, vector<64x32xf32> -> vector<64x32xf32>
    %c0_20 = arith.constant 0 : index
    %c0_21 = arith.constant 0 : index
    %23 = vector.load %arg9[%c0_20, %c0_21] : memref<16x32xf32, #tpu.memory_space<vmem>>, vector<16x32xf32>
    %cst_22 = arith.constant dense<0.000000e+00> : vector<64x32xf32>
    %24 = tpu.matmul %20, %23, %cst_22 {dimension_numbers = #tpu.dot_dimension_numbers<[1], [0], [0], [1], [0, 0, 1, 1], [], []>} : vector<64x16xf32>, vector<16x32xf32>, vector<64x32xf32> -> vector<64x32xf32>
    %25 = arith.addf %22, %24 : vector<64x32xf32>
    %c0_23 = arith.constant 0 : index
    %c0_24 = arith.constant 0 : index
    %26 = vector.load %arg10[%c0_23, %c0_24] : memref<1x32xf32, #tpu.memory_space<vmem>>, vector<1x32xf32>
    %27 = vector.broadcast %26 : vector<1x32xf32> to vector<64x32xf32>
    %28 = arith.addf %25, %27 : vector<64x32xf32>
    %c0_25 = arith.constant 0 : index
    %c0_26 = arith.constant 0 : index
    %29 = vector.load %arg11[%c0_25, %c0_26] : memref<32x96xf32, #tpu.memory_space<vmem>>, vector<32x96xf32>
    %cst_27 = arith.constant dense<0.000000e+00> : vector<64x96xf32>
    %30 = tpu.matmul %28, %29, %cst_27 {dimension_numbers = #tpu.dot_dimension_numbers<[1], [0], [0], [1], [0, 0, 1, 1], [], []>} : vector<64x32xf32>, vector<32x96xf32>, vector<64x96xf32> -> vector<64x96xf32>
    %c0_28 = arith.constant 0 : index
    %c0_29 = arith.constant 0 : index
    %31 = vector.load %arg13[%c0_28, %c0_29] : memref<1x96xf32, #tpu.memory_space<vmem>>, vector<1x96xf32>
    %32 = vector.broadcast %31 : vector<1x96xf32> to vector<64x96xf32>
    %33 = arith.addf %30, %32 : vector<64x96xf32>
    %34 = vector.shape_cast %28 : vector<64x32xf32> to vector<8x8x32xf32>
    %c0_30 = arith.constant 0 : index
    %c0_31 = arith.constant 0 : index
    %c0_32 = arith.constant 0 : index
    %35 = vector.load %arg22[%c0_30, %c0_31, %c0_32] : memref<8x8x32xf32, #tpu.memory_space<vmem>>, vector<8x8x32xf32>
    tpu.vector_store %arg22[%c0_30, %c0_31, %c0_32], %34 {strides = array<i32>} : memref<8x8x32xf32, #tpu.memory_space<vmem>>, vector<8x8x32xf32>,
    %36 = vector.shape_cast %33 : vector<64x96xf32> to vector<8x8x96xf32>
    %c0_33 = arith.constant 0 : index
    %c0_34 = arith.constant 0 : index
    %c0_35 = arith.constant 0 : index
    %37 = vector.load %arg23[%c0_33, %c0_34, %c0_35] : memref<8x8x96xf32, #tpu.memory_space<vmem>>, vector<8x8x96xf32>
    tpu.vector_store %arg23[%c0_33, %c0_34, %c0_35], %36 {strides = array<i32>} : memref<8x8x96xf32, #tpu.memory_space<vmem>>, vector<8x8x96xf32>,
    %c0_36 = arith.constant 0 : index
    %c0_37 = arith.constant 0 : index
    %38 = vector.load %arg12[%c0_36, %c0_37] : memref<32x96xf32, #tpu.memory_space<vmem>>, vector<32x96xf32>
    %c0_38 = arith.constant 0 : index
    %c0_39 = arith.constant 0 : index
    %39 = vector.load %arg15[%c0_38, %c0_39] : memref<32x96xf32, #tpu.memory_space<vmem>>, vector<32x96xf32>
    %c0_40 = arith.constant 0 : index
    %c0_41 = arith.constant 0 : index
    %40 = vector.load %arg16[%c0_40, %c0_41] : memref<32x96xf32, #tpu.memory_space<vmem>>, vector<32x96xf32>
    %c0_42 = arith.constant 0 : index
    %c0_43 = arith.constant 0 : index
    %41 = vector.load %arg17[%c0_42, %c0_43] : memref<1x96xf32, #tpu.memory_space<vmem>>, vector<1x96xf32>
    %42 = vector.shape_cast %41 : vector<1x96xf32> to vector<1x96xf32>
    %43 = vector.broadcast %42 : vector<1x96xf32> to vector<8x96xf32>
    %c0_44 = arith.constant 0 : index
    %c0_45 = arith.constant 0 : index
    %44 = vector.load %arg14[%c0_44, %c0_45] : memref<1x32xf32, #tpu.memory_space<vmem>>, vector<1x32xf32>
    %45 = vector.shape_cast %44 : vector<1x32xf32> to vector<1x32xf32>
    %46 = vector.broadcast %45 : vector<1x32xf32> to vector<8x32xf32>
    %c0_46 = arith.constant 0 : index
    %c0_47 = arith.constant 0 : index
    %47 = vector.load %arg18[%c0_46, %c0_47] : memref<1x32xf32, #tpu.memory_space<vmem>>, vector<1x32xf32>
    %48 = vector.shape_cast %47 : vector<1x32xf32> to vector<1x32xf32>
    %49 = vector.broadcast %48 : vector<1x32xf32> to vector<8x32xf32>
    %c0_48 = arith.constant 0 : index
    %c0_49 = arith.constant 0 : index
    %c0_50 = arith.constant 0 : index
    %50 = vector.load %arg24[%c0_48, %c0_49, %c0_50] : memref<2x8x32xf32, #tpu.memory_space<vmem>>, vector<1x8x32xf32>
    %51 = vector.shape_cast %50 : vector<1x8x32xf32> to vector<8x32xf32>
    %c1 = arith.constant 1 : index
    %c0_51 = arith.constant 0 : index
    %c0_52 = arith.constant 0 : index
    %52 = vector.load %arg24[%c1, %c0_51, %c0_52] : memref<2x8x32xf32, #tpu.memory_space<vmem>>, vector<1x8x32xf32>
    %53 = vector.shape_cast %52 : vector<1x8x32xf32> to vector<8x32xf32>
    %c0_i32_53 = arith.constant 0 : i32
    %54 = arith.index_cast %c0_i32_53 : i32 to index
    %c0_54 = arith.constant 0 : index
    %c0_55 = arith.constant 0 : index
    %55 = vector.load %arg23[%54, %c0_54, %c0_55] : memref<8x8x96xf32, #tpu.memory_space<vmem>>, vector<1x8x96xf32>
    %56 = vector.shape_cast %55 : vector<1x8x96xf32> to vector<8x96xf32>
    %cst_56 = arith.constant dense<0.000000e+00> : vector<8x96xf32>
    %57 = tpu.matmul %51, %38, %cst_56 {dimension_numbers = #tpu.dot_dimension_numbers<[1], [0], [0], [1], [0, 0, 1, 1], [], []>} : vector<8x32xf32>, vector<32x96xf32>, vector<8x96xf32> -> vector<8x96xf32>
    %58 = vector.extract_strided_slice %56 {offsets = [0, 0], sizes = [8, 32], strides = [1, 1]} : vector<8x96xf32> to vector<8x32xf32>
    %59 = vector.extract_strided_slice %57 {offsets = [0, 0], sizes = [8, 32], strides = [1, 1]} : vector<8x96xf32> to vector<8x32xf32>
    %60 = arith.addf %58, %59 : vector<8x32xf32>
    %61 = arith.negf %60 : vector<8x32xf32>
    %62 = math.exp %61 : vector<8x32xf32>
    %cst_57 = arith.constant 1.000000e+00 : f32
    %63 = vector.broadcast %cst_57 : f32 to vector<8x32xf32>
    %64 = arith.addf %63, %62 : vector<8x32xf32>
    %65 = arith.divf %63, %64 : vector<8x32xf32>
    %66 = vector.extract_strided_slice %56 {offsets = [0, 32], sizes = [8, 32], strides = [1, 1]} : vector<8x96xf32> to vector<8x32xf32>
    %67 = vector.extract_strided_slice %57 {offsets = [0, 32], sizes = [8, 32], strides = [1, 1]} : vector<8x96xf32> to vector<8x32xf32>
    %68 = arith.addf %66, %67 : vector<8x32xf32>
    %69 = arith.negf %68 : vector<8x32xf32>
    %70 = math.exp %69 : vector<8x32xf32>
    %cst_58 = arith.constant 1.000000e+00 : f32
    %71 = vector.broadcast %cst_58 : f32 to vector<8x32xf32>
    %72 = arith.addf %71, %70 : vector<8x32xf32>
    %73 = arith.divf %71, %72 : vector<8x32xf32>
    %74 = vector.extract_strided_slice %56 {offsets = [0, 64], sizes = [8, 32], strides = [1, 1]} : vector<8x96xf32> to vector<8x32xf32>
    %75 = vector.extract_strided_slice %57 {offsets = [0, 64], sizes = [8, 32], strides = [1, 1]} : vector<8x96xf32> to vector<8x32xf32>
    %76 = arith.addf %75, %46 : vector<8x32xf32>
    %77 = arith.mulf %65, %76 : vector<8x32xf32>
    %78 = arith.addf %74, %77 : vector<8x32xf32>
    %79 = math.tanh %78 : vector<8x32xf32>
    %cst_59 = arith.constant 1.000000e+00 : f32
    %80 = vector.broadcast %cst_59 : f32 to vector<8x32xf32>
    %81 = arith.subf %80, %73 : vector<8x32xf32>
    %82 = arith.mulf %81, %79 : vector<8x32xf32>
    %83 = arith.mulf %73, %51 : vector<8x32xf32>
    %84 = arith.addf %82, %83 : vector<8x32xf32>
    %85 = arith.index_cast %c0_i32_53 : i32 to index
    %c0_60 = arith.constant 0 : index
    %c0_61 = arith.constant 0 : index
    %86 = vector.load %arg22[%85, %c0_60, %c0_61] : memref<8x8x32xf32, #tpu.memory_space<vmem>>, vector<1x8x32xf32>
    %87 = vector.shape_cast %86 : vector<1x8x32xf32> to vector<8x32xf32>
    %88 = arith.addf %87, %84 : vector<8x32xf32>
    %cst_62 = arith.constant dense<0.000000e+00> : vector<8x96xf32>
    %89 = tpu.matmul %88, %39, %cst_62 {dimension_numbers = #tpu.dot_dimension_numbers<[1], [0], [0], [1], [0, 0, 1, 1], [], []>} : vector<8x32xf32>, vector<32x96xf32>, vector<8x96xf32> -> vector<8x96xf32>
    %90 = arith.addf %89, %43 : vector<8x96xf32>
    %cst_63 = arith.constant dense<0.000000e+00> : vector<8x96xf32>
    %91 = tpu.matmul %53, %40, %cst_63 {dimension_numbers = #tpu.dot_dimension_numbers<[1], [0], [0], [1], [0, 0, 1, 1], [], []>} : vector<8x32xf32>, vector<32x96xf32>, vector<8x96xf32> -> vector<8x96xf32>
    %92 = vector.extract_strided_slice %90 {offsets = [0, 0], sizes = [8, 32], strides = [1, 1]} : vector<8x96xf32> to vector<8x32xf32>
    %93 = vector.extract_strided_slice %91 {offsets = [0, 0], sizes = [8, 32], strides = [1, 1]} : vector<8x96xf32> to vector<8x32xf32>
    %94 = arith.addf %92, %93 : vector<8x32xf32>
    %95 = arith.negf %94 : vector<8x32xf32>
    %96 = math.exp %95 : vector<8x32xf32>
    %cst_64 = arith.constant 1.000000e+00 : f32
    %97 = vector.broadcast %cst_64 : f32 to vector<8x32xf32>
    %98 = arith.addf %97, %96 : vector<8x32xf32>
    %99 = arith.divf %97, %98 : vector<8x32xf32>
    %100 = vector.extract_strided_slice %90 {offsets = [0, 32], sizes = [8, 32], strides = [1, 1]} : vector<8x96xf32> to vector<8x32xf32>
    %101 = vector.extract_strided_slice %91 {offsets = [0, 32], sizes = [8, 32], strides = [1, 1]} : vector<8x96xf32> to vector<8x32xf32>
    %102 = arith.addf %100, %101 : vector<8x32xf32>
    %103 = arith.negf %102 : vector<8x32xf32>
    %104 = math.exp %103 : vector<8x32xf32>
    %cst_65 = arith.constant 1.000000e+00 : f32
    %105 = vector.broadcast %cst_65 : f32 to vector<8x32xf32>
    %106 = arith.addf %105, %104 : vector<8x32xf32>
    %107 = arith.divf %105, %106 : vector<8x32xf32>
    %108 = vector.extract_strided_slice %90 {offsets = [0, 64], sizes = [8, 32], strides = [1, 1]} : vector<8x96xf32> to vector<8x32xf32>
    %109 = vector.extract_strided_slice %91 {offsets = [0, 64], sizes = [8, 32], strides = [1, 1]} : vector<8x96xf32> to vector<8x32xf32>
    %110 = arith.addf %109, %49 : vector<8x32xf32>
    %111 = arith.mulf %99, %110 : vector<8x32xf32>
    %112 = arith.addf %108, %111 : vector<8x32xf32>
    %113 = math.tanh %112 : vector<8x32xf32>
    %cst_66 = arith.constant 1.000000e+00 : f32
    %114 = vector.broadcast %cst_66 : f32 to vector<8x32xf32>
    %115 = arith.subf %114, %107 : vector<8x32xf32>
    %116 = arith.mulf %115, %113 : vector<8x32xf32>
    %117 = arith.mulf %107, %53 : vector<8x32xf32>
    %118 = arith.addf %116, %117 : vector<8x32xf32>
    %119 = arith.addf %88, %118 : vector<8x32xf32>
    %120 = arith.index_cast %c0_i32_53 : i32 to index
    %c0_67 = arith.constant 0 : index
    %c0_68 = arith.constant 0 : index
    %121 = vector.load %arg22[%120, %c0_67, %c0_68] : memref<8x8x32xf32, #tpu.memory_space<vmem>>, vector<1x8x32xf32>
    %122 = vector.shape_cast %121 : vector<1x8x32xf32> to vector<8x32xf32>
    %123 = vector.shape_cast %119 : vector<8x32xf32> to vector<1x8x32xf32>
    tpu.vector_store %arg22[%120, %c0_67, %c0_68], %123 {strides = array<i32>} : memref<8x8x32xf32, #tpu.memory_space<vmem>>, vector<1x8x32xf32>,
    %c1_i32 = arith.constant 1 : i32
    %124 = arith.index_cast %c1_i32 : i32 to index
    %c0_69 = arith.constant 0 : index
    %c0_70 = arith.constant 0 : index
    %125 = vector.load %arg23[%124, %c0_69, %c0_70] : memref<8x8x96xf32, #tpu.memory_space<vmem>>, vector<1x8x96xf32>
    %126 = vector.shape_cast %125 : vector<1x8x96xf32> to vector<8x96xf32>
    %cst_71 = arith.constant dense<0.000000e+00> : vector<8x96xf32>
    %127 = tpu.matmul %84, %38, %cst_71 {dimension_numbers = #tpu.dot_dimension_numbers<[1], [0], [0], [1], [0, 0, 1, 1], [], []>} : vector<8x32xf32>, vector<32x96xf32>, vector<8x96xf32> -> vector<8x96xf32>
    %128 = vector.extract_strided_slice %126 {offsets = [0, 0], sizes = [8, 32], strides = [1, 1]} : vector<8x96xf32> to vector<8x32xf32>
    %129 = vector.extract_strided_slice %127 {offsets = [0, 0], sizes = [8, 32], strides = [1, 1]} : vector<8x96xf32> to vector<8x32xf32>
    %130 = arith.addf %128, %129 : vector<8x32xf32>
    %131 = arith.negf %130 : vector<8x32xf32>
    %132 = math.exp %131 : vector<8x32xf32>
    %cst_72 = arith.constant 1.000000e+00 : f32
    %133 = vector.broadcast %cst_72 : f32 to vector<8x32xf32>
    %134 = arith.addf %133, %132 : vector<8x32xf32>
    %135 = arith.divf %133, %134 : vector<8x32xf32>
    %136 = vector.extract_strided_slice %126 {offsets = [0, 32], sizes = [8, 32], strides = [1, 1]} : vector<8x96xf32> to vector<8x32xf32>
    %137 = vector.extract_strided_slice %127 {offsets = [0, 32], sizes = [8, 32], strides = [1, 1]} : vector<8x96xf32> to vector<8x32xf32>
    %138 = arith.addf %136, %137 : vector<8x32xf32>
    %139 = arith.negf %138 : vector<8x32xf32>
    %140 = math.exp %139 : vector<8x32xf32>
    %cst_73 = arith.constant 1.000000e+00 : f32
    %141 = vector.broadcast %cst_73 : f32 to vector<8x32xf32>
    %142 = arith.addf %141, %140 : vector<8x32xf32>
    %143 = arith.divf %141, %142 : vector<8x32xf32>
    %144 = vector.extract_strided_slice %126 {offsets = [0, 64], sizes = [8, 32], strides = [1, 1]} : vector<8x96xf32> to vector<8x32xf32>
    %145 = vector.extract_strided_slice %127 {offsets = [0, 64], sizes = [8, 32], strides = [1, 1]} : vector<8x96xf32> to vector<8x32xf32>
    %146 = arith.addf %145, %46 : vector<8x32xf32>
    %147 = arith.mulf %135, %146 : vector<8x32xf32>
    %148 = arith.addf %144, %147 : vector<8x32xf32>
    %149 = math.tanh %148 : vector<8x32xf32>
    %cst_74 = arith.constant 1.000000e+00 : f32
    %150 = vector.broadcast %cst_74 : f32 to vector<8x32xf32>
    %151 = arith.subf %150, %143 : vector<8x32xf32>
    %152 = arith.mulf %151, %149 : vector<8x32xf32>
    %153 = arith.mulf %143, %84 : vector<8x32xf32>
    %154 = arith.addf %152, %153 : vector<8x32xf32>
    %155 = arith.index_cast %c1_i32 : i32 to index
    %c0_75 = arith.constant 0 : index
    %c0_76 = arith.constant 0 : index
    %156 = vector.load %arg22[%155, %c0_75, %c0_76] : memref<8x8x32xf32, #tpu.memory_space<vmem>>, vector<1x8x32xf32>
    %157 = vector.shape_cast %156 : vector<1x8x32xf32> to vector<8x32xf32>
    %158 = arith.addf %157, %154 : vector<8x32xf32>
    %cst_77 = arith.constant dense<0.000000e+00> : vector<8x96xf32>
    %159 = tpu.matmul %158, %39, %cst_77 {dimension_numbers = #tpu.dot_dimension_numbers<[1], [0], [0], [1], [0, 0, 1, 1], [], []>} : vector<8x32xf32>, vector<32x96xf32>, vector<8x96xf32> -> vector<8x96xf32>
    %160 = arith.addf %159, %43 : vector<8x96xf32>
    %cst_78 = arith.constant dense<0.000000e+00> : vector<8x96xf32>
    %161 = tpu.matmul %118, %40, %cst_78 {dimension_numbers = #tpu.dot_dimension_numbers<[1], [0], [0], [1], [0, 0, 1, 1], [], []>} : vector<8x32xf32>, vector<32x96xf32>, vector<8x96xf32> -> vector<8x96xf32>
    %162 = vector.extract_strided_slice %160 {offsets = [0, 0], sizes = [8, 32], strides = [1, 1]} : vector<8x96xf32> to vector<8x32xf32>
    %163 = vector.extract_strided_slice %161 {offsets = [0, 0], sizes = [8, 32], strides = [1, 1]} : vector<8x96xf32> to vector<8x32xf32>
    %164 = arith.addf %162, %163 : vector<8x32xf32>
    %165 = arith.negf %164 : vector<8x32xf32>
    %166 = math.exp %165 : vector<8x32xf32>
    %cst_79 = arith.constant 1.000000e+00 : f32
    %167 = vector.broadcast %cst_79 : f32 to vector<8x32xf32>
    %168 = arith.addf %167, %166 : vector<8x32xf32>
    %169 = arith.divf %167, %168 : vector<8x32xf32>
    %170 = vector.extract_strided_slice %160 {offsets = [0, 32], sizes = [8, 32], strides = [1, 1]} : vector<8x96xf32> to vector<8x32xf32>
    %171 = vector.extract_strided_slice %161 {offsets = [0, 32], sizes = [8, 32], strides = [1, 1]} : vector<8x96xf32> to vector<8x32xf32>
    %172 = arith.addf %170, %171 : vector<8x32xf32>
    %173 = arith.negf %172 : vector<8x32xf32>
    %174 = math.exp %173 : vector<8x32xf32>
    %cst_80 = arith.constant 1.000000e+00 : f32
    %175 = vector.broadcast %cst_80 : f32 to vector<8x32xf32>
    %176 = arith.addf %175, %174 : vector<8x32xf32>
    %177 = arith.divf %175, %176 : vector<8x32xf32>
    %178 = vector.extract_strided_slice %160 {offsets = [0, 64], sizes = [8, 32], strides = [1, 1]} : vector<8x96xf32> to vector<8x32xf32>
    %179 = vector.extract_strided_slice %161 {offsets = [0, 64], sizes = [8, 32], strides = [1, 1]} : vector<8x96xf32> to vector<8x32xf32>
    %180 = arith.addf %179, %49 : vector<8x32xf32>
    %181 = arith.mulf %169, %180 : vector<8x32xf32>
    %182 = arith.addf %178, %181 : vector<8x32xf32>
    %183 = math.tanh %182 : vector<8x32xf32>
    %cst_81 = arith.constant 1.000000e+00 : f32
    %184 = vector.broadcast %cst_81 : f32 to vector<8x32xf32>
    %185 = arith.subf %184, %177 : vector<8x32xf32>
    %186 = arith.mulf %185, %183 : vector<8x32xf32>
    %187 = arith.mulf %177, %118 : vector<8x32xf32>
    %188 = arith.addf %186, %187 : vector<8x32xf32>
    %189 = arith.addf %158, %188 : vector<8x32xf32>
    %190 = arith.index_cast %c1_i32 : i32 to index
    %c0_82 = arith.constant 0 : index
    %c0_83 = arith.constant 0 : index
    %191 = vector.load %arg22[%190, %c0_82, %c0_83] : memref<8x8x32xf32, #tpu.memory_space<vmem>>, vector<1x8x32xf32>
    %192 = vector.shape_cast %191 : vector<1x8x32xf32> to vector<8x32xf32>
    %193 = vector.shape_cast %189 : vector<8x32xf32> to vector<1x8x32xf32>
    tpu.vector_store %arg22[%190, %c0_82, %c0_83], %193 {strides = array<i32>} : memref<8x8x32xf32, #tpu.memory_space<vmem>>, vector<1x8x32xf32>,
    %c2_i32 = arith.constant 2 : i32
    %194 = arith.index_cast %c2_i32 : i32 to index
    %c0_84 = arith.constant 0 : index
    %c0_85 = arith.constant 0 : index
    %195 = vector.load %arg23[%194, %c0_84, %c0_85] : memref<8x8x96xf32, #tpu.memory_space<vmem>>, vector<1x8x96xf32>
    %196 = vector.shape_cast %195 : vector<1x8x96xf32> to vector<8x96xf32>
    %cst_86 = arith.constant dense<0.000000e+00> : vector<8x96xf32>
    %197 = tpu.matmul %154, %38, %cst_86 {dimension_numbers = #tpu.dot_dimension_numbers<[1], [0], [0], [1], [0, 0, 1, 1], [], []>} : vector<8x32xf32>, vector<32x96xf32>, vector<8x96xf32> -> vector<8x96xf32>
    %198 = vector.extract_strided_slice %196 {offsets = [0, 0], sizes = [8, 32], strides = [1, 1]} : vector<8x96xf32> to vector<8x32xf32>
    %199 = vector.extract_strided_slice %197 {offsets = [0, 0], sizes = [8, 32], strides = [1, 1]} : vector<8x96xf32> to vector<8x32xf32>
    %200 = arith.addf %198, %199 : vector<8x32xf32>
    %201 = arith.negf %200 : vector<8x32xf32>
    %202 = math.exp %201 : vector<8x32xf32>
    %cst_87 = arith.constant 1.000000e+00 : f32
    %203 = vector.broadcast %cst_87 : f32 to vector<8x32xf32>
    %204 = arith.addf %203, %202 : vector<8x32xf32>
    %205 = arith.divf %203, %204 : vector<8x32xf32>
    %206 = vector.extract_strided_slice %196 {offsets = [0, 32], sizes = [8, 32], strides = [1, 1]} : vector<8x96xf32> to vector<8x32xf32>
    %207 = vector.extract_strided_slice %197 {offsets = [0, 32], sizes = [8, 32], strides = [1, 1]} : vector<8x96xf32> to vector<8x32xf32>
    %208 = arith.addf %206, %207 : vector<8x32xf32>
    %209 = arith.negf %208 : vector<8x32xf32>
    %210 = math.exp %209 : vector<8x32xf32>
    %cst_88 = arith.constant 1.000000e+00 : f32
    %211 = vector.broadcast %cst_88 : f32 to vector<8x32xf32>
    %212 = arith.addf %211, %210 : vector<8x32xf32>
    %213 = arith.divf %211, %212 : vector<8x32xf32>
    %214 = vector.extract_strided_slice %196 {offsets = [0, 64], sizes = [8, 32], strides = [1, 1]} : vector<8x96xf32> to vector<8x32xf32>
    %215 = vector.extract_strided_slice %197 {offsets = [0, 64], sizes = [8, 32], strides = [1, 1]} : vector<8x96xf32> to vector<8x32xf32>
    %216 = arith.addf %215, %46 : vector<8x32xf32>
    %217 = arith.mulf %205, %216 : vector<8x32xf32>
    %218 = arith.addf %214, %217 : vector<8x32xf32>
    %219 = math.tanh %218 : vector<8x32xf32>
    %cst_89 = arith.constant 1.000000e+00 : f32
    %220 = vector.broadcast %cst_89 : f32 to vector<8x32xf32>
    %221 = arith.subf %220, %213 : vector<8x32xf32>
    %222 = arith.mulf %221, %219 : vector<8x32xf32>
    %223 = arith.mulf %213, %154 : vector<8x32xf32>
    %224 = arith.addf %222, %223 : vector<8x32xf32>
    %225 = arith.index_cast %c2_i32 : i32 to index
    %c0_90 = arith.constant 0 : index
    %c0_91 = arith.constant 0 : index
    %226 = vector.load %arg22[%225, %c0_90, %c0_91] : memref<8x8x32xf32, #tpu.memory_space<vmem>>, vector<1x8x32xf32>
    %227 = vector.shape_cast %226 : vector<1x8x32xf32> to vector<8x32xf32>
    %228 = arith.addf %227, %224 : vector<8x32xf32>
    %cst_92 = arith.constant dense<0.000000e+00> : vector<8x96xf32>
    %229 = tpu.matmul %228, %39, %cst_92 {dimension_numbers = #tpu.dot_dimension_numbers<[1], [0], [0], [1], [0, 0, 1, 1], [], []>} : vector<8x32xf32>, vector<32x96xf32>, vector<8x96xf32> -> vector<8x96xf32>
    %230 = arith.addf %229, %43 : vector<8x96xf32>
    %cst_93 = arith.constant dense<0.000000e+00> : vector<8x96xf32>
    %231 = tpu.matmul %188, %40, %cst_93 {dimension_numbers = #tpu.dot_dimension_numbers<[1], [0], [0], [1], [0, 0, 1, 1], [], []>} : vector<8x32xf32>, vector<32x96xf32>, vector<8x96xf32> -> vector<8x96xf32>
    %232 = vector.extract_strided_slice %230 {offsets = [0, 0], sizes = [8, 32], strides = [1, 1]} : vector<8x96xf32> to vector<8x32xf32>
    %233 = vector.extract_strided_slice %231 {offsets = [0, 0], sizes = [8, 32], strides = [1, 1]} : vector<8x96xf32> to vector<8x32xf32>
    %234 = arith.addf %232, %233 : vector<8x32xf32>
    %235 = arith.negf %234 : vector<8x32xf32>
    %236 = math.exp %235 : vector<8x32xf32>
    %cst_94 = arith.constant 1.000000e+00 : f32
    %237 = vector.broadcast %cst_94 : f32 to vector<8x32xf32>
    %238 = arith.addf %237, %236 : vector<8x32xf32>
    %239 = arith.divf %237, %238 : vector<8x32xf32>
    %240 = vector.extract_strided_slice %230 {offsets = [0, 32], sizes = [8, 32], strides = [1, 1]} : vector<8x96xf32> to vector<8x32xf32>
    %241 = vector.extract_strided_slice %231 {offsets = [0, 32], sizes = [8, 32], strides = [1, 1]} : vector<8x96xf32> to vector<8x32xf32>
    %242 = arith.addf %240, %241 : vector<8x32xf32>
    %243 = arith.negf %242 : vector<8x32xf32>
    %244 = math.exp %243 : vector<8x32xf32>
    %cst_95 = arith.constant 1.000000e+00 : f32
    %245 = vector.broadcast %cst_95 : f32 to vector<8x32xf32>
    %246 = arith.addf %245, %244 : vector<8x32xf32>
    %247 = arith.divf %245, %246 : vector<8x32xf32>
    %248 = vector.extract_strided_slice %230 {offsets = [0, 64], sizes = [8, 32], strides = [1, 1]} : vector<8x96xf32> to vector<8x32xf32>
    %249 = vector.extract_strided_slice %231 {offsets = [0, 64], sizes = [8, 32], strides = [1, 1]} : vector<8x96xf32> to vector<8x32xf32>
    %250 = arith.addf %249, %49 : vector<8x32xf32>
    %251 = arith.mulf %239, %250 : vector<8x32xf32>
    %252 = arith.addf %248, %251 : vector<8x32xf32>
    %253 = math.tanh %252 : vector<8x32xf32>
    %cst_96 = arith.constant 1.000000e+00 : f32
    %254 = vector.broadcast %cst_96 : f32 to vector<8x32xf32>
    %255 = arith.subf %254, %247 : vector<8x32xf32>
    %256 = arith.mulf %255, %253 : vector<8x32xf32>
    %257 = arith.mulf %247, %188 : vector<8x32xf32>
    %258 = arith.addf %256, %257 : vector<8x32xf32>
    %259 = arith.addf %228, %258 : vector<8x32xf32>
    %260 = arith.index_cast %c2_i32 : i32 to index
    %c0_97 = arith.constant 0 : index
    %c0_98 = arith.constant 0 : index
    %261 = vector.load %arg22[%260, %c0_97, %c0_98] : memref<8x8x32xf32, #tpu.memory_space<vmem>>, vector<1x8x32xf32>
    %262 = vector.shape_cast %261 : vector<1x8x32xf32> to vector<8x32xf32>
    %263 = vector.shape_cast %259 : vector<8x32xf32> to vector<1x8x32xf32>
    tpu.vector_store %arg22[%260, %c0_97, %c0_98], %263 {strides = array<i32>} : memref<8x8x32xf32, #tpu.memory_space<vmem>>, vector<1x8x32xf32>,
    %c3_i32 = arith.constant 3 : i32
    %264 = arith.index_cast %c3_i32 : i32 to index
    %c0_99 = arith.constant 0 : index
    %c0_100 = arith.constant 0 : index
    %265 = vector.load %arg23[%264, %c0_99, %c0_100] : memref<8x8x96xf32, #tpu.memory_space<vmem>>, vector<1x8x96xf32>
    %266 = vector.shape_cast %265 : vector<1x8x96xf32> to vector<8x96xf32>
    %cst_101 = arith.constant dense<0.000000e+00> : vector<8x96xf32>
    %267 = tpu.matmul %224, %38, %cst_101 {dimension_numbers = #tpu.dot_dimension_numbers<[1], [0], [0], [1], [0, 0, 1, 1], [], []>} : vector<8x32xf32>, vector<32x96xf32>, vector<8x96xf32> -> vector<8x96xf32>
    %268 = vector.extract_strided_slice %266 {offsets = [0, 0], sizes = [8, 32], strides = [1, 1]} : vector<8x96xf32> to vector<8x32xf32>
    %269 = vector.extract_strided_slice %267 {offsets = [0, 0], sizes = [8, 32], strides = [1, 1]} : vector<8x96xf32> to vector<8x32xf32>
    %270 = arith.addf %268, %269 : vector<8x32xf32>
    %271 = arith.negf %270 : vector<8x32xf32>
    %272 = math.exp %271 : vector<8x32xf32>
    %cst_102 = arith.constant 1.000000e+00 : f32
    %273 = vector.broadcast %cst_102 : f32 to vector<8x32xf32>
    %274 = arith.addf %273, %272 : vector<8x32xf32>
    %275 = arith.divf %273, %274 : vector<8x32xf32>
    %276 = vector.extract_strided_slice %266 {offsets = [0, 32], sizes = [8, 32], strides = [1, 1]} : vector<8x96xf32> to vector<8x32xf32>
    %277 = vector.extract_strided_slice %267 {offsets = [0, 32], sizes = [8, 32], strides = [1, 1]} : vector<8x96xf32> to vector<8x32xf32>
    %278 = arith.addf %276, %277 : vector<8x32xf32>
    %279 = arith.negf %278 : vector<8x32xf32>
    %280 = math.exp %279 : vector<8x32xf32>
    %cst_103 = arith.constant 1.000000e+00 : f32
    %281 = vector.broadcast %cst_103 : f32 to vector<8x32xf32>
    %282 = arith.addf %281, %280 : vector<8x32xf32>
    %283 = arith.divf %281, %282 : vector<8x32xf32>
    %284 = vector.extract_strided_slice %266 {offsets = [0, 64], sizes = [8, 32], strides = [1, 1]} : vector<8x96xf32> to vector<8x32xf32>
    %285 = vector.extract_strided_slice %267 {offsets = [0, 64], sizes = [8, 32], strides = [1, 1]} : vector<8x96xf32> to vector<8x32xf32>
    %286 = arith.addf %285, %46 : vector<8x32xf32>
    %287 = arith.mulf %275, %286 : vector<8x32xf32>
    %288 = arith.addf %284, %287 : vector<8x32xf32>
    %289 = math.tanh %288 : vector<8x32xf32>
    %cst_104 = arith.constant 1.000000e+00 : f32
    %290 = vector.broadcast %cst_104 : f32 to vector<8x32xf32>
    %291 = arith.subf %290, %283 : vector<8x32xf32>
    %292 = arith.mulf %291, %289 : vector<8x32xf32>
    %293 = arith.mulf %283, %224 : vector<8x32xf32>
    %294 = arith.addf %292, %293 : vector<8x32xf32>
    %295 = arith.index_cast %c3_i32 : i32 to index
    %c0_105 = arith.constant 0 : index
    %c0_106 = arith.constant 0 : index
    %296 = vector.load %arg22[%295, %c0_105, %c0_106] : memref<8x8x32xf32, #tpu.memory_space<vmem>>, vector<1x8x32xf32>
    %297 = vector.shape_cast %296 : vector<1x8x32xf32> to vector<8x32xf32>
    %298 = arith.addf %297, %294 : vector<8x32xf32>
    %cst_107 = arith.constant dense<0.000000e+00> : vector<8x96xf32>
    %299 = tpu.matmul %298, %39, %cst_107 {dimension_numbers = #tpu.dot_dimension_numbers<[1], [0], [0], [1], [0, 0, 1, 1], [], []>} : vector<8x32xf32>, vector<32x96xf32>, vector<8x96xf32> -> vector<8x96xf32>
    %300 = arith.addf %299, %43 : vector<8x96xf32>
    %cst_108 = arith.constant dense<0.000000e+00> : vector<8x96xf32>
    %301 = tpu.matmul %258, %40, %cst_108 {dimension_numbers = #tpu.dot_dimension_numbers<[1], [0], [0], [1], [0, 0, 1, 1], [], []>} : vector<8x32xf32>, vector<32x96xf32>, vector<8x96xf32> -> vector<8x96xf32>
    %302 = vector.extract_strided_slice %300 {offsets = [0, 0], sizes = [8, 32], strides = [1, 1]} : vector<8x96xf32> to vector<8x32xf32>
    %303 = vector.extract_strided_slice %301 {offsets = [0, 0], sizes = [8, 32], strides = [1, 1]} : vector<8x96xf32> to vector<8x32xf32>
    %304 = arith.addf %302, %303 : vector<8x32xf32>
    %305 = arith.negf %304 : vector<8x32xf32>
    %306 = math.exp %305 : vector<8x32xf32>
    %cst_109 = arith.constant 1.000000e+00 : f32
    %307 = vector.broadcast %cst_109 : f32 to vector<8x32xf32>
    %308 = arith.addf %307, %306 : vector<8x32xf32>
    %309 = arith.divf %307, %308 : vector<8x32xf32>
    %310 = vector.extract_strided_slice %300 {offsets = [0, 32], sizes = [8, 32], strides = [1, 1]} : vector<8x96xf32> to vector<8x32xf32>
    %311 = vector.extract_strided_slice %301 {offsets = [0, 32], sizes = [8, 32], strides = [1, 1]} : vector<8x96xf32> to vector<8x32xf32>
    %312 = arith.addf %310, %311 : vector<8x32xf32>
    %313 = arith.negf %312 : vector<8x32xf32>
    %314 = math.exp %313 : vector<8x32xf32>
    %cst_110 = arith.constant 1.000000e+00 : f32
    %315 = vector.broadcast %cst_110 : f32 to vector<8x32xf32>
    %316 = arith.addf %315, %314 : vector<8x32xf32>
    %317 = arith.divf %315, %316 : vector<8x32xf32>
    %318 = vector.extract_strided_slice %300 {offsets = [0, 64], sizes = [8, 32], strides = [1, 1]} : vector<8x96xf32> to vector<8x32xf32>
    %319 = vector.extract_strided_slice %301 {offsets = [0, 64], sizes = [8, 32], strides = [1, 1]} : vector<8x96xf32> to vector<8x32xf32>
    %320 = arith.addf %319, %49 : vector<8x32xf32>
    %321 = arith.mulf %309, %320 : vector<8x32xf32>
    %322 = arith.addf %318, %321 : vector<8x32xf32>
    %323 = math.tanh %322 : vector<8x32xf32>
    %cst_111 = arith.constant 1.000000e+00 : f32
    %324 = vector.broadcast %cst_111 : f32 to vector<8x32xf32>
    %325 = arith.subf %324, %317 : vector<8x32xf32>
    %326 = arith.mulf %325, %323 : vector<8x32xf32>
    %327 = arith.mulf %317, %258 : vector<8x32xf32>
    %328 = arith.addf %326, %327 : vector<8x32xf32>
    %329 = arith.addf %298, %328 : vector<8x32xf32>
    %330 = arith.index_cast %c3_i32 : i32 to index
    %c0_112 = arith.constant 0 : index
    %c0_113 = arith.constant 0 : index
    %331 = vector.load %arg22[%330, %c0_112, %c0_113] : memref<8x8x32xf32, #tpu.memory_space<vmem>>, vector<1x8x32xf32>
    %332 = vector.shape_cast %331 : vector<1x8x32xf32> to vector<8x32xf32>
    %333 = vector.shape_cast %329 : vector<8x32xf32> to vector<1x8x32xf32>
    tpu.vector_store %arg22[%330, %c0_112, %c0_113], %333 {strides = array<i32>} : memref<8x8x32xf32, #tpu.memory_space<vmem>>, vector<1x8x32xf32>,
    %c4_i32 = arith.constant 4 : i32
    %334 = arith.index_cast %c4_i32 : i32 to index
    %c0_114 = arith.constant 0 : index
    %c0_115 = arith.constant 0 : index
    %335 = vector.load %arg23[%334, %c0_114, %c0_115] : memref<8x8x96xf32, #tpu.memory_space<vmem>>, vector<1x8x96xf32>
    %336 = vector.shape_cast %335 : vector<1x8x96xf32> to vector<8x96xf32>
    %cst_116 = arith.constant dense<0.000000e+00> : vector<8x96xf32>
    %337 = tpu.matmul %294, %38, %cst_116 {dimension_numbers = #tpu.dot_dimension_numbers<[1], [0], [0], [1], [0, 0, 1, 1], [], []>} : vector<8x32xf32>, vector<32x96xf32>, vector<8x96xf32> -> vector<8x96xf32>
    %338 = vector.extract_strided_slice %336 {offsets = [0, 0], sizes = [8, 32], strides = [1, 1]} : vector<8x96xf32> to vector<8x32xf32>
    %339 = vector.extract_strided_slice %337 {offsets = [0, 0], sizes = [8, 32], strides = [1, 1]} : vector<8x96xf32> to vector<8x32xf32>
    %340 = arith.addf %338, %339 : vector<8x32xf32>
    %341 = arith.negf %340 : vector<8x32xf32>
    %342 = math.exp %341 : vector<8x32xf32>
    %cst_117 = arith.constant 1.000000e+00 : f32
    %343 = vector.broadcast %cst_117 : f32 to vector<8x32xf32>
    %344 = arith.addf %343, %342 : vector<8x32xf32>
    %345 = arith.divf %343, %344 : vector<8x32xf32>
    %346 = vector.extract_strided_slice %336 {offsets = [0, 32], sizes = [8, 32], strides = [1, 1]} : vector<8x96xf32> to vector<8x32xf32>
    %347 = vector.extract_strided_slice %337 {offsets = [0, 32], sizes = [8, 32], strides = [1, 1]} : vector<8x96xf32> to vector<8x32xf32>
    %348 = arith.addf %346, %347 : vector<8x32xf32>
    %349 = arith.negf %348 : vector<8x32xf32>
    %350 = math.exp %349 : vector<8x32xf32>
    %cst_118 = arith.constant 1.000000e+00 : f32
    %351 = vector.broadcast %cst_118 : f32 to vector<8x32xf32>
    %352 = arith.addf %351, %350 : vector<8x32xf32>
    %353 = arith.divf %351, %352 : vector<8x32xf32>
    %354 = vector.extract_strided_slice %336 {offsets = [0, 64], sizes = [8, 32], strides = [1, 1]} : vector<8x96xf32> to vector<8x32xf32>
    %355 = vector.extract_strided_slice %337 {offsets = [0, 64], sizes = [8, 32], strides = [1, 1]} : vector<8x96xf32> to vector<8x32xf32>
    %356 = arith.addf %355, %46 : vector<8x32xf32>
    %357 = arith.mulf %345, %356 : vector<8x32xf32>
    %358 = arith.addf %354, %357 : vector<8x32xf32>
    %359 = math.tanh %358 : vector<8x32xf32>
    %cst_119 = arith.constant 1.000000e+00 : f32
    %360 = vector.broadcast %cst_119 : f32 to vector<8x32xf32>
    %361 = arith.subf %360, %353 : vector<8x32xf32>
    %362 = arith.mulf %361, %359 : vector<8x32xf32>
    %363 = arith.mulf %353, %294 : vector<8x32xf32>
    %364 = arith.addf %362, %363 : vector<8x32xf32>
    %365 = arith.index_cast %c4_i32 : i32 to index
    %c0_120 = arith.constant 0 : index
    %c0_121 = arith.constant 0 : index
    %366 = vector.load %arg22[%365, %c0_120, %c0_121] : memref<8x8x32xf32, #tpu.memory_space<vmem>>, vector<1x8x32xf32>
    %367 = vector.shape_cast %366 : vector<1x8x32xf32> to vector<8x32xf32>
    %368 = arith.addf %367, %364 : vector<8x32xf32>
    %cst_122 = arith.constant dense<0.000000e+00> : vector<8x96xf32>
    %369 = tpu.matmul %368, %39, %cst_122 {dimension_numbers = #tpu.dot_dimension_numbers<[1], [0], [0], [1], [0, 0, 1, 1], [], []>} : vector<8x32xf32>, vector<32x96xf32>, vector<8x96xf32> -> vector<8x96xf32>
    %370 = arith.addf %369, %43 : vector<8x96xf32>
    %cst_123 = arith.constant dense<0.000000e+00> : vector<8x96xf32>
    %371 = tpu.matmul %328, %40, %cst_123 {dimension_numbers = #tpu.dot_dimension_numbers<[1], [0], [0], [1], [0, 0, 1, 1], [], []>} : vector<8x32xf32>, vector<32x96xf32>, vector<8x96xf32> -> vector<8x96xf32>
    %372 = vector.extract_strided_slice %370 {offsets = [0, 0], sizes = [8, 32], strides = [1, 1]} : vector<8x96xf32> to vector<8x32xf32>
    %373 = vector.extract_strided_slice %371 {offsets = [0, 0], sizes = [8, 32], strides = [1, 1]} : vector<8x96xf32> to vector<8x32xf32>
    %374 = arith.addf %372, %373 : vector<8x32xf32>
    %375 = arith.negf %374 : vector<8x32xf32>
    %376 = math.exp %375 : vector<8x32xf32>
    %cst_124 = arith.constant 1.000000e+00 : f32
    %377 = vector.broadcast %cst_124 : f32 to vector<8x32xf32>
    %378 = arith.addf %377, %376 : vector<8x32xf32>
    %379 = arith.divf %377, %378 : vector<8x32xf32>
    %380 = vector.extract_strided_slice %370 {offsets = [0, 32], sizes = [8, 32], strides = [1, 1]} : vector<8x96xf32> to vector<8x32xf32>
    %381 = vector.extract_strided_slice %371 {offsets = [0, 32], sizes = [8, 32], strides = [1, 1]} : vector<8x96xf32> to vector<8x32xf32>
    %382 = arith.addf %380, %381 : vector<8x32xf32>
    %383 = arith.negf %382 : vector<8x32xf32>
    %384 = math.exp %383 : vector<8x32xf32>
    %cst_125 = arith.constant 1.000000e+00 : f32
    %385 = vector.broadcast %cst_125 : f32 to vector<8x32xf32>
    %386 = arith.addf %385, %384 : vector<8x32xf32>
    %387 = arith.divf %385, %386 : vector<8x32xf32>
    %388 = vector.extract_strided_slice %370 {offsets = [0, 64], sizes = [8, 32], strides = [1, 1]} : vector<8x96xf32> to vector<8x32xf32>
    %389 = vector.extract_strided_slice %371 {offsets = [0, 64], sizes = [8, 32], strides = [1, 1]} : vector<8x96xf32> to vector<8x32xf32>
    %390 = arith.addf %389, %49 : vector<8x32xf32>
    %391 = arith.mulf %379, %390 : vector<8x32xf32>
    %392 = arith.addf %388, %391 : vector<8x32xf32>
    %393 = math.tanh %392 : vector<8x32xf32>
    %cst_126 = arith.constant 1.000000e+00 : f32
    %394 = vector.broadcast %cst_126 : f32 to vector<8x32xf32>
    %395 = arith.subf %394, %387 : vector<8x32xf32>
    %396 = arith.mulf %395, %393 : vector<8x32xf32>
    %397 = arith.mulf %387, %328 : vector<8x32xf32>
    %398 = arith.addf %396, %397 : vector<8x32xf32>
    %399 = arith.addf %368, %398 : vector<8x32xf32>
    %400 = arith.index_cast %c4_i32 : i32 to index
    %c0_127 = arith.constant 0 : index
    %c0_128 = arith.constant 0 : index
    %401 = vector.load %arg22[%400, %c0_127, %c0_128] : memref<8x8x32xf32, #tpu.memory_space<vmem>>, vector<1x8x32xf32>
    %402 = vector.shape_cast %401 : vector<1x8x32xf32> to vector<8x32xf32>
    %403 = vector.shape_cast %399 : vector<8x32xf32> to vector<1x8x32xf32>
    tpu.vector_store %arg22[%400, %c0_127, %c0_128], %403 {strides = array<i32>} : memref<8x8x32xf32, #tpu.memory_space<vmem>>, vector<1x8x32xf32>,
    %c5_i32 = arith.constant 5 : i32
    %404 = arith.index_cast %c5_i32 : i32 to index
    %c0_129 = arith.constant 0 : index
    %c0_130 = arith.constant 0 : index
    %405 = vector.load %arg23[%404, %c0_129, %c0_130] : memref<8x8x96xf32, #tpu.memory_space<vmem>>, vector<1x8x96xf32>
    %406 = vector.shape_cast %405 : vector<1x8x96xf32> to vector<8x96xf32>
    %cst_131 = arith.constant dense<0.000000e+00> : vector<8x96xf32>
    %407 = tpu.matmul %364, %38, %cst_131 {dimension_numbers = #tpu.dot_dimension_numbers<[1], [0], [0], [1], [0, 0, 1, 1], [], []>} : vector<8x32xf32>, vector<32x96xf32>, vector<8x96xf32> -> vector<8x96xf32>
    %408 = vector.extract_strided_slice %406 {offsets = [0, 0], sizes = [8, 32], strides = [1, 1]} : vector<8x96xf32> to vector<8x32xf32>
    %409 = vector.extract_strided_slice %407 {offsets = [0, 0], sizes = [8, 32], strides = [1, 1]} : vector<8x96xf32> to vector<8x32xf32>
    %410 = arith.addf %408, %409 : vector<8x32xf32>
    %411 = arith.negf %410 : vector<8x32xf32>
    %412 = math.exp %411 : vector<8x32xf32>
    %cst_132 = arith.constant 1.000000e+00 : f32
    %413 = vector.broadcast %cst_132 : f32 to vector<8x32xf32>
    %414 = arith.addf %413, %412 : vector<8x32xf32>
    %415 = arith.divf %413, %414 : vector<8x32xf32>
    %416 = vector.extract_strided_slice %406 {offsets = [0, 32], sizes = [8, 32], strides = [1, 1]} : vector<8x96xf32> to vector<8x32xf32>
    %417 = vector.extract_strided_slice %407 {offsets = [0, 32], sizes = [8, 32], strides = [1, 1]} : vector<8x96xf32> to vector<8x32xf32>
    %418 = arith.addf %416, %417 : vector<8x32xf32>
    %419 = arith.negf %418 : vector<8x32xf32>
    %420 = math.exp %419 : vector<8x32xf32>
    %cst_133 = arith.constant 1.000000e+00 : f32
    %421 = vector.broadcast %cst_133 : f32 to vector<8x32xf32>
    %422 = arith.addf %421, %420 : vector<8x32xf32>
    %423 = arith.divf %421, %422 : vector<8x32xf32>
    %424 = vector.extract_strided_slice %406 {offsets = [0, 64], sizes = [8, 32], strides = [1, 1]} : vector<8x96xf32> to vector<8x32xf32>
    %425 = vector.extract_strided_slice %407 {offsets = [0, 64], sizes = [8, 32], strides = [1, 1]} : vector<8x96xf32> to vector<8x32xf32>
    %426 = arith.addf %425, %46 : vector<8x32xf32>
    %427 = arith.mulf %415, %426 : vector<8x32xf32>
    %428 = arith.addf %424, %427 : vector<8x32xf32>
    %429 = math.tanh %428 : vector<8x32xf32>
    %cst_134 = arith.constant 1.000000e+00 : f32
    %430 = vector.broadcast %cst_134 : f32 to vector<8x32xf32>
    %431 = arith.subf %430, %423 : vector<8x32xf32>
    %432 = arith.mulf %431, %429 : vector<8x32xf32>
    %433 = arith.mulf %423, %364 : vector<8x32xf32>
    %434 = arith.addf %432, %433 : vector<8x32xf32>
    %435 = arith.index_cast %c5_i32 : i32 to index
    %c0_135 = arith.constant 0 : index
    %c0_136 = arith.constant 0 : index
    %436 = vector.load %arg22[%435, %c0_135, %c0_136] : memref<8x8x32xf32, #tpu.memory_space<vmem>>, vector<1x8x32xf32>
    %437 = vector.shape_cast %436 : vector<1x8x32xf32> to vector<8x32xf32>
    %438 = arith.addf %437, %434 : vector<8x32xf32>
    %cst_137 = arith.constant dense<0.000000e+00> : vector<8x96xf32>
    %439 = tpu.matmul %438, %39, %cst_137 {dimension_numbers = #tpu.dot_dimension_numbers<[1], [0], [0], [1], [0, 0, 1, 1], [], []>} : vector<8x32xf32>, vector<32x96xf32>, vector<8x96xf32> -> vector<8x96xf32>
    %440 = arith.addf %439, %43 : vector<8x96xf32>
    %cst_138 = arith.constant dense<0.000000e+00> : vector<8x96xf32>
    %441 = tpu.matmul %398, %40, %cst_138 {dimension_numbers = #tpu.dot_dimension_numbers<[1], [0], [0], [1], [0, 0, 1, 1], [], []>} : vector<8x32xf32>, vector<32x96xf32>, vector<8x96xf32> -> vector<8x96xf32>
    %442 = vector.extract_strided_slice %440 {offsets = [0, 0], sizes = [8, 32], strides = [1, 1]} : vector<8x96xf32> to vector<8x32xf32>
    %443 = vector.extract_strided_slice %441 {offsets = [0, 0], sizes = [8, 32], strides = [1, 1]} : vector<8x96xf32> to vector<8x32xf32>
    %444 = arith.addf %442, %443 : vector<8x32xf32>
    %445 = arith.negf %444 : vector<8x32xf32>
    %446 = math.exp %445 : vector<8x32xf32>
    %cst_139 = arith.constant 1.000000e+00 : f32
    %447 = vector.broadcast %cst_139 : f32 to vector<8x32xf32>
    %448 = arith.addf %447, %446 : vector<8x32xf32>
    %449 = arith.divf %447, %448 : vector<8x32xf32>
    %450 = vector.extract_strided_slice %440 {offsets = [0, 32], sizes = [8, 32], strides = [1, 1]} : vector<8x96xf32> to vector<8x32xf32>
    %451 = vector.extract_strided_slice %441 {offsets = [0, 32], sizes = [8, 32], strides = [1, 1]} : vector<8x96xf32> to vector<8x32xf32>
    %452 = arith.addf %450, %451 : vector<8x32xf32>
    %453 = arith.negf %452 : vector<8x32xf32>
    %454 = math.exp %453 : vector<8x32xf32>
    %cst_140 = arith.constant 1.000000e+00 : f32
    %455 = vector.broadcast %cst_140 : f32 to vector<8x32xf32>
    %456 = arith.addf %455, %454 : vector<8x32xf32>
    %457 = arith.divf %455, %456 : vector<8x32xf32>
    %458 = vector.extract_strided_slice %440 {offsets = [0, 64], sizes = [8, 32], strides = [1, 1]} : vector<8x96xf32> to vector<8x32xf32>
    %459 = vector.extract_strided_slice %441 {offsets = [0, 64], sizes = [8, 32], strides = [1, 1]} : vector<8x96xf32> to vector<8x32xf32>
    %460 = arith.addf %459, %49 : vector<8x32xf32>
    %461 = arith.mulf %449, %460 : vector<8x32xf32>
    %462 = arith.addf %458, %461 : vector<8x32xf32>
    %463 = math.tanh %462 : vector<8x32xf32>
    %cst_141 = arith.constant 1.000000e+00 : f32
    %464 = vector.broadcast %cst_141 : f32 to vector<8x32xf32>
    %465 = arith.subf %464, %457 : vector<8x32xf32>
    %466 = arith.mulf %465, %463 : vector<8x32xf32>
    %467 = arith.mulf %457, %398 : vector<8x32xf32>
    %468 = arith.addf %466, %467 : vector<8x32xf32>
    %469 = arith.addf %438, %468 : vector<8x32xf32>
    %470 = arith.index_cast %c5_i32 : i32 to index
    %c0_142 = arith.constant 0 : index
    %c0_143 = arith.constant 0 : index
    %471 = vector.load %arg22[%470, %c0_142, %c0_143] : memref<8x8x32xf32, #tpu.memory_space<vmem>>, vector<1x8x32xf32>
    %472 = vector.shape_cast %471 : vector<1x8x32xf32> to vector<8x32xf32>
    %473 = vector.shape_cast %469 : vector<8x32xf32> to vector<1x8x32xf32>
    tpu.vector_store %arg22[%470, %c0_142, %c0_143], %473 {strides = array<i32>} : memref<8x8x32xf32, #tpu.memory_space<vmem>>, vector<1x8x32xf32>,
    %c6_i32 = arith.constant 6 : i32
    %474 = arith.index_cast %c6_i32 : i32 to index
    %c0_144 = arith.constant 0 : index
    %c0_145 = arith.constant 0 : index
    %475 = vector.load %arg23[%474, %c0_144, %c0_145] : memref<8x8x96xf32, #tpu.memory_space<vmem>>, vector<1x8x96xf32>
    %476 = vector.shape_cast %475 : vector<1x8x96xf32> to vector<8x96xf32>
    %cst_146 = arith.constant dense<0.000000e+00> : vector<8x96xf32>
    %477 = tpu.matmul %434, %38, %cst_146 {dimension_numbers = #tpu.dot_dimension_numbers<[1], [0], [0], [1], [0, 0, 1, 1], [], []>} : vector<8x32xf32>, vector<32x96xf32>, vector<8x96xf32> -> vector<8x96xf32>
    %478 = vector.extract_strided_slice %476 {offsets = [0, 0], sizes = [8, 32], strides = [1, 1]} : vector<8x96xf32> to vector<8x32xf32>
    %479 = vector.extract_strided_slice %477 {offsets = [0, 0], sizes = [8, 32], strides = [1, 1]} : vector<8x96xf32> to vector<8x32xf32>
    %480 = arith.addf %478, %479 : vector<8x32xf32>
    %481 = arith.negf %480 : vector<8x32xf32>
    %482 = math.exp %481 : vector<8x32xf32>
    %cst_147 = arith.constant 1.000000e+00 : f32
    %483 = vector.broadcast %cst_147 : f32 to vector<8x32xf32>
    %484 = arith.addf %483, %482 : vector<8x32xf32>
    %485 = arith.divf %483, %484 : vector<8x32xf32>
    %486 = vector.extract_strided_slice %476 {offsets = [0, 32], sizes = [8, 32], strides = [1, 1]} : vector<8x96xf32> to vector<8x32xf32>
    %487 = vector.extract_strided_slice %477 {offsets = [0, 32], sizes = [8, 32], strides = [1, 1]} : vector<8x96xf32> to vector<8x32xf32>
    %488 = arith.addf %486, %487 : vector<8x32xf32>
    %489 = arith.negf %488 : vector<8x32xf32>
    %490 = math.exp %489 : vector<8x32xf32>
    %cst_148 = arith.constant 1.000000e+00 : f32
    %491 = vector.broadcast %cst_148 : f32 to vector<8x32xf32>
    %492 = arith.addf %491, %490 : vector<8x32xf32>
    %493 = arith.divf %491, %492 : vector<8x32xf32>
    %494 = vector.extract_strided_slice %476 {offsets = [0, 64], sizes = [8, 32], strides = [1, 1]} : vector<8x96xf32> to vector<8x32xf32>
    %495 = vector.extract_strided_slice %477 {offsets = [0, 64], sizes = [8, 32], strides = [1, 1]} : vector<8x96xf32> to vector<8x32xf32>
    %496 = arith.addf %495, %46 : vector<8x32xf32>
    %497 = arith.mulf %485, %496 : vector<8x32xf32>
    %498 = arith.addf %494, %497 : vector<8x32xf32>
    %499 = math.tanh %498 : vector<8x32xf32>
    %cst_149 = arith.constant 1.000000e+00 : f32
    %500 = vector.broadcast %cst_149 : f32 to vector<8x32xf32>
    %501 = arith.subf %500, %493 : vector<8x32xf32>
    %502 = arith.mulf %501, %499 : vector<8x32xf32>
    %503 = arith.mulf %493, %434 : vector<8x32xf32>
    %504 = arith.addf %502, %503 : vector<8x32xf32>
    %505 = arith.index_cast %c6_i32 : i32 to index
    %c0_150 = arith.constant 0 : index
    %c0_151 = arith.constant 0 : index
    %506 = vector.load %arg22[%505, %c0_150, %c0_151] : memref<8x8x32xf32, #tpu.memory_space<vmem>>, vector<1x8x32xf32>
    %507 = vector.shape_cast %506 : vector<1x8x32xf32> to vector<8x32xf32>
    %508 = arith.addf %507, %504 : vector<8x32xf32>
    %cst_152 = arith.constant dense<0.000000e+00> : vector<8x96xf32>
    %509 = tpu.matmul %508, %39, %cst_152 {dimension_numbers = #tpu.dot_dimension_numbers<[1], [0], [0], [1], [0, 0, 1, 1], [], []>} : vector<8x32xf32>, vector<32x96xf32>, vector<8x96xf32> -> vector<8x96xf32>
    %510 = arith.addf %509, %43 : vector<8x96xf32>
    %cst_153 = arith.constant dense<0.000000e+00> : vector<8x96xf32>
    %511 = tpu.matmul %468, %40, %cst_153 {dimension_numbers = #tpu.dot_dimension_numbers<[1], [0], [0], [1], [0, 0, 1, 1], [], []>} : vector<8x32xf32>, vector<32x96xf32>, vector<8x96xf32> -> vector<8x96xf32>
    %512 = vector.extract_strided_slice %510 {offsets = [0, 0], sizes = [8, 32], strides = [1, 1]} : vector<8x96xf32> to vector<8x32xf32>
    %513 = vector.extract_strided_slice %511 {offsets = [0, 0], sizes = [8, 32], strides = [1, 1]} : vector<8x96xf32> to vector<8x32xf32>
    %514 = arith.addf %512, %513 : vector<8x32xf32>
    %515 = arith.negf %514 : vector<8x32xf32>
    %516 = math.exp %515 : vector<8x32xf32>
    %cst_154 = arith.constant 1.000000e+00 : f32
    %517 = vector.broadcast %cst_154 : f32 to vector<8x32xf32>
    %518 = arith.addf %517, %516 : vector<8x32xf32>
    %519 = arith.divf %517, %518 : vector<8x32xf32>
    %520 = vector.extract_strided_slice %510 {offsets = [0, 32], sizes = [8, 32], strides = [1, 1]} : vector<8x96xf32> to vector<8x32xf32>
    %521 = vector.extract_strided_slice %511 {offsets = [0, 32], sizes = [8, 32], strides = [1, 1]} : vector<8x96xf32> to vector<8x32xf32>
    %522 = arith.addf %520, %521 : vector<8x32xf32>
    %523 = arith.negf %522 : vector<8x32xf32>
    %524 = math.exp %523 : vector<8x32xf32>
    %cst_155 = arith.constant 1.000000e+00 : f32
    %525 = vector.broadcast %cst_155 : f32 to vector<8x32xf32>
    %526 = arith.addf %525, %524 : vector<8x32xf32>
    %527 = arith.divf %525, %526 : vector<8x32xf32>
    %528 = vector.extract_strided_slice %510 {offsets = [0, 64], sizes = [8, 32], strides = [1, 1]} : vector<8x96xf32> to vector<8x32xf32>
    %529 = vector.extract_strided_slice %511 {offsets = [0, 64], sizes = [8, 32], strides = [1, 1]} : vector<8x96xf32> to vector<8x32xf32>
    %530 = arith.addf %529, %49 : vector<8x32xf32>
    %531 = arith.mulf %519, %530 : vector<8x32xf32>
    %532 = arith.addf %528, %531 : vector<8x32xf32>
    %533 = math.tanh %532 : vector<8x32xf32>
    %cst_156 = arith.constant 1.000000e+00 : f32
    %534 = vector.broadcast %cst_156 : f32 to vector<8x32xf32>
    %535 = arith.subf %534, %527 : vector<8x32xf32>
    %536 = arith.mulf %535, %533 : vector<8x32xf32>
    %537 = arith.mulf %527, %468 : vector<8x32xf32>
    %538 = arith.addf %536, %537 : vector<8x32xf32>
    %539 = arith.addf %508, %538 : vector<8x32xf32>
    %540 = arith.index_cast %c6_i32 : i32 to index
    %c0_157 = arith.constant 0 : index
    %c0_158 = arith.constant 0 : index
    %541 = vector.load %arg22[%540, %c0_157, %c0_158] : memref<8x8x32xf32, #tpu.memory_space<vmem>>, vector<1x8x32xf32>
    %542 = vector.shape_cast %541 : vector<1x8x32xf32> to vector<8x32xf32>
    %543 = vector.shape_cast %539 : vector<8x32xf32> to vector<1x8x32xf32>
    tpu.vector_store %arg22[%540, %c0_157, %c0_158], %543 {strides = array<i32>} : memref<8x8x32xf32, #tpu.memory_space<vmem>>, vector<1x8x32xf32>,
    %c7_i32 = arith.constant 7 : i32
    %544 = arith.index_cast %c7_i32 : i32 to index
    %c0_159 = arith.constant 0 : index
    %c0_160 = arith.constant 0 : index
    %545 = vector.load %arg23[%544, %c0_159, %c0_160] : memref<8x8x96xf32, #tpu.memory_space<vmem>>, vector<1x8x96xf32>
    %546 = vector.shape_cast %545 : vector<1x8x96xf32> to vector<8x96xf32>
    %cst_161 = arith.constant dense<0.000000e+00> : vector<8x96xf32>
    %547 = tpu.matmul %504, %38, %cst_161 {dimension_numbers = #tpu.dot_dimension_numbers<[1], [0], [0], [1], [0, 0, 1, 1], [], []>} : vector<8x32xf32>, vector<32x96xf32>, vector<8x96xf32> -> vector<8x96xf32>
    %548 = vector.extract_strided_slice %546 {offsets = [0, 0], sizes = [8, 32], strides = [1, 1]} : vector<8x96xf32> to vector<8x32xf32>
    %549 = vector.extract_strided_slice %547 {offsets = [0, 0], sizes = [8, 32], strides = [1, 1]} : vector<8x96xf32> to vector<8x32xf32>
    %550 = arith.addf %548, %549 : vector<8x32xf32>
    %551 = arith.negf %550 : vector<8x32xf32>
    %552 = math.exp %551 : vector<8x32xf32>
    %cst_162 = arith.constant 1.000000e+00 : f32
    %553 = vector.broadcast %cst_162 : f32 to vector<8x32xf32>
    %554 = arith.addf %553, %552 : vector<8x32xf32>
    %555 = arith.divf %553, %554 : vector<8x32xf32>
    %556 = vector.extract_strided_slice %546 {offsets = [0, 32], sizes = [8, 32], strides = [1, 1]} : vector<8x96xf32> to vector<8x32xf32>
    %557 = vector.extract_strided_slice %547 {offsets = [0, 32], sizes = [8, 32], strides = [1, 1]} : vector<8x96xf32> to vector<8x32xf32>
    %558 = arith.addf %556, %557 : vector<8x32xf32>
    %559 = arith.negf %558 : vector<8x32xf32>
    %560 = math.exp %559 : vector<8x32xf32>
    %cst_163 = arith.constant 1.000000e+00 : f32
    %561 = vector.broadcast %cst_163 : f32 to vector<8x32xf32>
    %562 = arith.addf %561, %560 : vector<8x32xf32>
    %563 = arith.divf %561, %562 : vector<8x32xf32>
    %564 = vector.extract_strided_slice %546 {offsets = [0, 64], sizes = [8, 32], strides = [1, 1]} : vector<8x96xf32> to vector<8x32xf32>
    %565 = vector.extract_strided_slice %547 {offsets = [0, 64], sizes = [8, 32], strides = [1, 1]} : vector<8x96xf32> to vector<8x32xf32>
    %566 = arith.addf %565, %46 : vector<8x32xf32>
    %567 = arith.mulf %555, %566 : vector<8x32xf32>
    %568 = arith.addf %564, %567 : vector<8x32xf32>
    %569 = math.tanh %568 : vector<8x32xf32>
    %cst_164 = arith.constant 1.000000e+00 : f32
    %570 = vector.broadcast %cst_164 : f32 to vector<8x32xf32>
    %571 = arith.subf %570, %563 : vector<8x32xf32>
    %572 = arith.mulf %571, %569 : vector<8x32xf32>
    %573 = arith.mulf %563, %504 : vector<8x32xf32>
    %574 = arith.addf %572, %573 : vector<8x32xf32>
    %575 = arith.index_cast %c7_i32 : i32 to index
    %c0_165 = arith.constant 0 : index
    %c0_166 = arith.constant 0 : index
    %576 = vector.load %arg22[%575, %c0_165, %c0_166] : memref<8x8x32xf32, #tpu.memory_space<vmem>>, vector<1x8x32xf32>
    %577 = vector.shape_cast %576 : vector<1x8x32xf32> to vector<8x32xf32>
    %578 = arith.addf %577, %574 : vector<8x32xf32>
    %cst_167 = arith.constant dense<0.000000e+00> : vector<8x96xf32>
    %579 = tpu.matmul %578, %39, %cst_167 {dimension_numbers = #tpu.dot_dimension_numbers<[1], [0], [0], [1], [0, 0, 1, 1], [], []>} : vector<8x32xf32>, vector<32x96xf32>, vector<8x96xf32> -> vector<8x96xf32>
    %580 = arith.addf %579, %43 : vector<8x96xf32>
    %cst_168 = arith.constant dense<0.000000e+00> : vector<8x96xf32>
    %581 = tpu.matmul %538, %40, %cst_168 {dimension_numbers = #tpu.dot_dimension_numbers<[1], [0], [0], [1], [0, 0, 1, 1], [], []>} : vector<8x32xf32>, vector<32x96xf32>, vector<8x96xf32> -> vector<8x96xf32>
    %582 = vector.extract_strided_slice %580 {offsets = [0, 0], sizes = [8, 32], strides = [1, 1]} : vector<8x96xf32> to vector<8x32xf32>
    %583 = vector.extract_strided_slice %581 {offsets = [0, 0], sizes = [8, 32], strides = [1, 1]} : vector<8x96xf32> to vector<8x32xf32>
    %584 = arith.addf %582, %583 : vector<8x32xf32>
    %585 = arith.negf %584 : vector<8x32xf32>
    %586 = math.exp %585 : vector<8x32xf32>
    %cst_169 = arith.constant 1.000000e+00 : f32
    %587 = vector.broadcast %cst_169 : f32 to vector<8x32xf32>
    %588 = arith.addf %587, %586 : vector<8x32xf32>
    %589 = arith.divf %587, %588 : vector<8x32xf32>
    %590 = vector.extract_strided_slice %580 {offsets = [0, 32], sizes = [8, 32], strides = [1, 1]} : vector<8x96xf32> to vector<8x32xf32>
    %591 = vector.extract_strided_slice %581 {offsets = [0, 32], sizes = [8, 32], strides = [1, 1]} : vector<8x96xf32> to vector<8x32xf32>
    %592 = arith.addf %590, %591 : vector<8x32xf32>
    %593 = arith.negf %592 : vector<8x32xf32>
    %594 = math.exp %593 : vector<8x32xf32>
    %cst_170 = arith.constant 1.000000e+00 : f32
    %595 = vector.broadcast %cst_170 : f32 to vector<8x32xf32>
    %596 = arith.addf %595, %594 : vector<8x32xf32>
    %597 = arith.divf %595, %596 : vector<8x32xf32>
    %598 = vector.extract_strided_slice %580 {offsets = [0, 64], sizes = [8, 32], strides = [1, 1]} : vector<8x96xf32> to vector<8x32xf32>
    %599 = vector.extract_strided_slice %581 {offsets = [0, 64], sizes = [8, 32], strides = [1, 1]} : vector<8x96xf32> to vector<8x32xf32>
    %600 = arith.addf %599, %49 : vector<8x32xf32>
    %601 = arith.mulf %589, %600 : vector<8x32xf32>
    %602 = arith.addf %598, %601 : vector<8x32xf32>
    %603 = math.tanh %602 : vector<8x32xf32>
    %cst_171 = arith.constant 1.000000e+00 : f32
    %604 = vector.broadcast %cst_171 : f32 to vector<8x32xf32>
    %605 = arith.subf %604, %597 : vector<8x32xf32>
    %606 = arith.mulf %605, %603 : vector<8x32xf32>
    %607 = arith.mulf %597, %538 : vector<8x32xf32>
    %608 = arith.addf %606, %607 : vector<8x32xf32>
    %609 = arith.addf %578, %608 : vector<8x32xf32>
    %610 = arith.index_cast %c7_i32 : i32 to index
    %c0_172 = arith.constant 0 : index
    %c0_173 = arith.constant 0 : index
    %611 = vector.load %arg22[%610, %c0_172, %c0_173] : memref<8x8x32xf32, #tpu.memory_space<vmem>>, vector<1x8x32xf32>
    %612 = vector.shape_cast %611 : vector<1x8x32xf32> to vector<8x32xf32>
    %613 = vector.shape_cast %609 : vector<8x32xf32> to vector<1x8x32xf32>
    tpu.vector_store %arg22[%610, %c0_172, %c0_173], %613 {strides = array<i32>} : memref<8x8x32xf32, #tpu.memory_space<vmem>>, vector<1x8x32xf32>,
    %c8_i32 = arith.constant 8 : i32
    %c0_174 = arith.constant 0 : index
    %c0_175 = arith.constant 0 : index
    %c0_176 = arith.constant 0 : index
    %614 = vector.load %arg24[%c0_174, %c0_175, %c0_176] : memref<2x8x32xf32, #tpu.memory_space<vmem>>, vector<1x8x32xf32>
    %615 = vector.shape_cast %614 : vector<1x8x32xf32> to vector<8x32xf32>
    %616 = vector.shape_cast %574 : vector<8x32xf32> to vector<1x8x32xf32>
    tpu.vector_store %arg24[%c0_174, %c0_175, %c0_176], %616 {strides = array<i32>} : memref<2x8x32xf32, #tpu.memory_space<vmem>>, vector<1x8x32xf32>,
    %c1_177 = arith.constant 1 : index
    %c0_178 = arith.constant 0 : index
    %c0_179 = arith.constant 0 : index
    %617 = vector.load %arg24[%c1_177, %c0_178, %c0_179] : memref<2x8x32xf32, #tpu.memory_space<vmem>>, vector<1x8x32xf32>
    %618 = vector.shape_cast %617 : vector<1x8x32xf32> to vector<8x32xf32>
    %619 = vector.shape_cast %608 : vector<8x32xf32> to vector<1x8x32xf32>
    tpu.vector_store %arg24[%c1_177, %c0_178, %c0_179], %619 {strides = array<i32>} : memref<2x8x32xf32, #tpu.memory_space<vmem>>, vector<1x8x32xf32>,
    %c0_180 = arith.constant 0 : index
    %c0_181 = arith.constant 0 : index
    %c0_182 = arith.constant 0 : index
    %620 = vector.load %arg22[%c0_180, %c0_181, %c0_182] : memref<8x8x32xf32, #tpu.memory_space<vmem>>, vector<8x8x32xf32>
    %621 = vector.shape_cast %620 : vector<8x8x32xf32> to vector<64x32xf32>
    %c0_183 = arith.constant 0 : index
    %c0_184 = arith.constant 0 : index
    %622 = vector.load %arg19[%c0_183, %c0_184] : memref<32x32xf32, #tpu.memory_space<vmem>>, vector<32x32xf32>
    %cst_185 = arith.constant dense<0.000000e+00> : vector<64x32xf32>
    %623 = tpu.matmul %621, %622, %cst_185 {dimension_numbers = #tpu.dot_dimension_numbers<[1], [0], [0], [1], [0, 0, 1, 1], [], []>} : vector<64x32xf32>, vector<32x32xf32>, vector<64x32xf32> -> vector<64x32xf32>
    %c0_186 = arith.constant 0 : index
    %c0_187 = arith.constant 0 : index
    %624 = vector.load %arg20[%c0_186, %c0_187] : memref<1x32xf32, #tpu.memory_space<vmem>>, vector<1x32xf32>
    %625 = vector.broadcast %624 : vector<1x32xf32> to vector<64x32xf32>
    %626 = arith.addf %623, %625 : vector<64x32xf32>
    %627 = vector.shape_cast %626 : vector<64x32xf32> to vector<8x8x32xf32>
    %c0_188 = arith.constant 0 : index
    %c0_189 = arith.constant 0 : index
    %c0_190 = arith.constant 0 : index
    %628 = vector.load %arg21[%c0_188, %c0_189, %c0_190] : memref<8x8x32xf32, #tpu.memory_space<vmem>>, vector<8x8x32xf32>
    tpu.vector_store %arg21[%c0_188, %c0_189, %c0_190], %627 {strides = array<i32>} : memref<8x8x32xf32, #tpu.memory_space<vmem>>, vector<8x8x32xf32>,
    return
  }
  func.func @transform_0(%arg0: i32, %arg1: i32) -> (i32, i32, i32) {
    %c0_i32 = arith.constant 0 : i32
    %c0_i32_0 = arith.constant 0 : i32
    return %arg1, %arg0, %c0_i32 : i32, i32, i32
  }
  func.func @transform_1(%arg0: i32, %arg1: i32) -> (i32, i32, i32) {
    %c0_i32 = arith.constant 0 : i32
    %c0_i32_0 = arith.constant 0 : i32
    return %arg1, %arg0, %c0_i32 : i32, i32, i32
  }
  func.func @transform_2(%arg0: i32, %arg1: i32) -> (i32, i32) {
    %c0_i32 = arith.constant 0 : i32
    %c0_i32_0 = arith.constant 0 : i32
    %c0_i32_1 = arith.constant 0 : i32
    return %c0_i32, %c0_i32_0 : i32, i32
  }
  func.func @transform_3(%arg0: i32, %arg1: i32) -> (i32, i32) {
    %c0_i32 = arith.constant 0 : i32
    %c0_i32_0 = arith.constant 0 : i32
    %c0_i32_1 = arith.constant 0 : i32
    return %c0_i32, %c0_i32_0 : i32, i32
  }
  func.func @transform_4(%arg0: i32, %arg1: i32) -> (i32, i32) {
    %c0_i32 = arith.constant 0 : i32
    %c0_i32_0 = arith.constant 0 : i32
    %c0_i32_1 = arith.constant 0 : i32
    return %c0_i32, %c0_i32_0 : i32, i32
  }
  func.func @transform_5(%arg0: i32, %arg1: i32) -> (i32, i32) {
    %c0_i32 = arith.constant 0 : i32
    %c0_i32_0 = arith.constant 0 : i32
    %c0_i32_1 = arith.constant 0 : i32
    return %c0_i32, %c0_i32_0 : i32, i32
  }
  func.func @transform_6(%arg0: i32, %arg1: i32) -> (i32, i32) {
    %c0_i32 = arith.constant 0 : i32
    %c0_i32_0 = arith.constant 0 : i32
    %c0_i32_1 = arith.constant 0 : i32
    return %c0_i32, %c0_i32_0 : i32, i32
  }
  func.func @transform_7(%arg0: i32, %arg1: i32) -> (i32, i32) {
    %c0_i32 = arith.constant 0 : i32
    %c0_i32_0 = arith.constant 0 : i32
    %c0_i32_1 = arith.constant 0 : i32
    return %c0_i32, %c0_i32_0 : i32, i32
  }
  func.func @transform_8(%arg0: i32, %arg1: i32) -> (i32, i32) {
    %c0_i32 = arith.constant 0 : i32
    %c0_i32_0 = arith.constant 0 : i32
    %c0_i32_1 = arith.constant 0 : i32
    return %c0_i32, %c0_i32_0 : i32, i32
  }
  func.func @transform_9(%arg0: i32, %arg1: i32) -> (i32, i32) {
    %c0_i32 = arith.constant 0 : i32
    %c0_i32_0 = arith.constant 0 : i32
    %c0_i32_1 = arith.constant 0 : i32
    return %c0_i32, %c0_i32_0 : i32, i32
  }
  func.func @transform_10(%arg0: i32, %arg1: i32) -> (i32, i32) {
    %c0_i32 = arith.constant 0 : i32
    %c0_i32_0 = arith.constant 0 : i32
    %c0_i32_1 = arith.constant 0 : i32
    return %c0_i32, %c0_i32_0 : i32, i32
  }
  func.func @transform_11(%arg0: i32, %arg1: i32) -> (i32, i32) {
    %c0_i32 = arith.constant 0 : i32
    %c0_i32_0 = arith.constant 0 : i32
    %c0_i32_1 = arith.constant 0 : i32
    return %c0_i32, %c0_i32_0 : i32, i32
  }
  func.func @transform_12(%arg0: i32, %arg1: i32) -> (i32, i32) {
    %c0_i32 = arith.constant 0 : i32
    %c0_i32_0 = arith.constant 0 : i32
    %c0_i32_1 = arith.constant 0 : i32
    return %c0_i32, %c0_i32_0 : i32, i32
  }
  func.func @transform_13(%arg0: i32, %arg1: i32) -> (i32, i32) {
    %c0_i32 = arith.constant 0 : i32
    %c0_i32_0 = arith.constant 0 : i32
    %c0_i32_1 = arith.constant 0 : i32
    return %c0_i32, %c0_i32_0 : i32, i32
  }
  func.func @transform_14(%arg0: i32, %arg1: i32) -> (i32, i32) {
    %c0_i32 = arith.constant 0 : i32
    %c0_i32_0 = arith.constant 0 : i32
    %c0_i32_1 = arith.constant 0 : i32
    return %c0_i32, %c0_i32_0 : i32, i32
  }
  func.func @transform_15(%arg0: i32, %arg1: i32) -> (i32, i32) {
    %c0_i32 = arith.constant 0 : i32
    %c0_i32_0 = arith.constant 0 : i32
    %c0_i32_1 = arith.constant 0 : i32
    return %c0_i32, %c0_i32_0 : i32, i32
  }
  func.func @transform_16(%arg0: i32, %arg1: i32) -> (i32, i32) {
    %c0_i32 = arith.constant 0 : i32
    %c0_i32_0 = arith.constant 0 : i32
    %c0_i32_1 = arith.constant 0 : i32
    return %c0_i32, %c0_i32_0 : i32, i32
  }
  func.func @transform_17(%arg0: i32, %arg1: i32) -> (i32, i32) {
    %c0_i32 = arith.constant 0 : i32
    %c0_i32_0 = arith.constant 0 : i32
    %c0_i32_1 = arith.constant 0 : i32
    return %c0_i32, %c0_i32_0 : i32, i32
  }
  func.func @transform_18(%arg0: i32, %arg1: i32) -> (i32, i32) {
    %c0_i32 = arith.constant 0 : i32
    %c0_i32_0 = arith.constant 0 : i32
    %c0_i32_1 = arith.constant 0 : i32
    return %c0_i32, %c0_i32_0 : i32, i32
  }
  func.func @transform_19(%arg0: i32, %arg1: i32) -> (i32, i32, i32) {
    %c0_i32 = arith.constant 0 : i32
    %c0_i32_0 = arith.constant 0 : i32
    return %arg1, %arg0, %c0_i32 : i32, i32, i32
  }
}

</mosaic_0001>

<llo_original>
// kernel: tpu_custom_call.1
$region0: #{tpu_custom_call.1}
  #allocation0 [shape = 'u32[]', space=smem, size = 0x4, offset = 0x4, fixed_abs, tag = 'smem constant byte address 0x4 - core index']
  #allocation1 [shape = 'u32[144,128]{1,0:T(1,128)}', space=vmem, size = 0x12000, scoped, tag = 'internal scratch']
  #allocation2 [shape = 'f32[8,8,32]{2,1,0:T(8,128)}', space=vmem, size = 0x8000, scoped, tag = 'scratch operand']
  #allocation3 [shape = 'f32[8,8,96]{2,1,0:T(8,128)}', space=vmem, size = 0x8000, scoped, tag = 'scratch operand']
  #allocation4 [shape = 'f32[2,8,32]{2,1,0:T(8,128)}', space=vmem, size = 0x2000, scoped, tag = 'scratch operand']
  %s0 = inlined_call_operand.hbm [shape: f32[8,8,16], index: 0, kind: input, shape index: {}]
  %s1 = inlined_call_operand.hbm [shape: f32[8,8,16], index: 1, kind: input, shape index: {}]
  %s2 = inlined_call_operand.hbm [shape: f32[16,32], index: 2, kind: input, shape index: {}]
  %s3 = inlined_call_operand.vmem [shape: f32[1,32], index: 3, kind: input, shape index: {}]
  %s4 = inlined_call_operand.vmem [shape: f32[32,16], index: 4, kind: input, shape index: {}]
  %s5 = inlined_call_operand.hbm [shape: f32[1,16], index: 5, kind: input, shape index: {}]
  %s6 = inlined_call_operand.hbm [shape: f32[16,32], index: 6, kind: input, shape index: {}]
  %s7 = inlined_call_operand.hbm [shape: f32[16,32], index: 7, kind: input, shape index: {}]
  %s8 = inlined_call_operand.hbm [shape: f32[1,32], index: 8, kind: input, shape index: {}]
  %s9 = inlined_call_operand.vmem [shape: f32[32,96], index: 9, kind: input, shape index: {}]
  %s10 = inlined_call_operand.vmem [shape: f32[32,96], index: 10, kind: input, shape index: {}]
  %s11 = inlined_call_operand.hbm [shape: f32[1,96], index: 11, kind: input, shape index: {}]
  %s12 = inlined_call_operand.hbm [shape: f32[1,32], index: 12, kind: input, shape index: {}]
  %s13 = inlined_call_operand.vmem [shape: f32[32,96], index: 13, kind: input, shape index: {}]
  %s14 = inlined_call_operand.hbm [shape: f32[32,96], index: 14, kind: input, shape index: {}]
  %s15 = inlined_call_operand.vmem [shape: f32[1,96], index: 15, kind: input, shape index: {}]
  %s16 = inlined_call_operand.vmem [shape: f32[1,32], index: 16, kind: input, shape index: {}]
  %s17 = inlined_call_operand.hbm [shape: f32[32,32], index: 17, kind: input, shape index: {}]
  %s18 = inlined_call_operand.vmem [shape: f32[1,32], index: 18, kind: input, shape index: {}]
  %s19 = inlined_call_operand.hbm [shape: f32[8,8,32], index: 19, kind: output, shape index: {}]
  %s20 = sld [smem:[#allocation0]]
  $region134: #{tpu_custom_call.1} parent=0
    _
  %s22 = ssub.s32 1, %s20
  %s23 = scalar_select 0, %s22, %s20
  $region1: #{tpu_custom_call.1} parent=0
    #allocation5 [shape = 'u8[32768]{0}', space=vmem, size = 0x8000, scoped, tag = 'input window, operand 0, single buffered']
    #allocation6 [shape = 's32[1]{0}', space=sflag, size = 0x4, scoped, tag = 'scoped memory for tpu_custom_call.1']
    #allocation7 [shape = 's32[1]{0}', space=sflag, size = 0x4, scoped, tag = 'scoped memory for tpu_custom_call.1']
    #allocation8 [shape = 'u8[32768]{0}', space=vmem, size = 0x8000, scoped, tag = 'input window, operand 1, single buffered']
    #allocation9 [shape = 's32[1]{0}', space=sflag, size = 0x4, scoped, tag = 'scoped memory for tpu_custom_call.1']
    #allocation10 [shape = 'u8[8192]{0}', space=vmem, size = 0x2000, scoped, tag = 'input window, operand 2, single buffered']
    #allocation11 [shape = 'u8[512]{0}', space=vmem, size = 0x400, scoped, tag = 'input window, operand 5, single buffered']
    #allocation12 [shape = 's32[1]{0}', space=sflag, size = 0x4, scoped, tag = 'scoped memory for tpu_custom_call.1']
    #allocation13 [shape = 'u8[8192]{0}', space=vmem, size = 0x2000, scoped, tag = 'input window, operand 6, single buffered']
    #allocation14 [shape = 'u8[8192]{0}', space=vmem, size = 0x2000, scoped, tag = 'input window, operand 7, single buffered']
    #allocation15 [shape = 's32[1]{0}', space=sflag, size = 0x4, scoped, tag = 'scoped memory for tpu_custom_call.1']
    #allocation16 [shape = 'u8[512]{0}', space=vmem, size = 0x400, scoped, tag = 'input window, operand 8, single buffered']
    #allocation17 [shape = 'u8[512]{0}', space=vmem, size = 0x400, scoped, tag = 'input window, operand 11, single buffered']
    #allocation18 [shape = 's32[1]{0}', space=sflag, size = 0x4, scoped, tag = 'scoped memory for tpu_custom_call.1']
    #allocation19 [shape = 'u8[512]{0}', space=vmem, size = 0x400, scoped, tag = 'input window, operand 12, single buffered']
    #allocation20 [shape = 'u8[16384]{0}', space=vmem, size = 0x4000, scoped, tag = 'input window, operand 14, single buffered']
    #allocation21 [shape = 's32[1]{0}', space=sflag, size = 0x4, scoped, tag = 'scoped memory for tpu_custom_call.1']
    #allocation22 [shape = 'u8[16384]{0}', space=vmem, size = 0x4000, scoped, tag = 'input window, operand 17, single buffered']
    #allocation23 [shape = 'u8[32768]{0}', space=vmem, size = 0x8000, scoped, tag = 'output window, operand 0, single buffered']
    %24 = vsyncpa [#allocation6], 0
    %25 = vsyncpa [#allocation9], 0
    %26 = vsyncpa [#allocation12], 0
    %27 = vsyncpa [#allocation15], 0
    %28 = vsyncpa [#allocation18], 0
    %29 = vsyncpa [#allocation21], 0
    %30 = vsyncpa [#allocation7], 0
    // Predicated region
    $region2: #{tpu_custom_call.1} parent=1 // pred_check
      _
    $region3: #{tpu_custom_call.1} parent=1 // pred_check_branch
      %32 = sbr.rel (0) target = $region5
    $region4: #{tpu_custom_call.1} parent=1 // pred_region
      %s34 = ssub.s32 1024, 1024
      %35 = vsyncadd [#allocation6], %s34
      %s36 = sshll.u32 [#allocation5], 4
      %s37 = int_to_ptr.vmem [resolvable:$true] %s36
      %42 = dma.hbm_to_vmem [thread:$0]  %s0, 1024, %s37, [#allocation6], 128, 128, 8
    $region5: #{tpu_custom_call.1} parent=1 // pred_fallthru
      _
    // Predicated region
    $region6: #{tpu_custom_call.1} parent=1 // pred_check
      _
    $region7: #{tpu_custom_call.1} parent=1 // pred_check_branch
      %44 = sbr.rel (0) target = $region9
    $region8: #{tpu_custom_call.1} parent=1 // pred_region
      %s46 = ssub.s32 1024, 1024
      %47 = vsyncadd [#allocation9], %s46
      %s48 = sshll.u32 [#allocation8], 4
      %s49 = int_to_ptr.vmem [resolvable:$true] %s48
      %54 = dma.hbm_to_vmem [thread:$0]  %s1, 1024, %s49, [#allocation9], 128, 128, 8
    $region9: #{tpu_custom_call.1} parent=1 // pred_fallthru
      _
    // Predicated region
    $region10: #{tpu_custom_call.1} parent=1 // pred_check
      _
    $region11: #{tpu_custom_call.1} parent=1 // pred_check_branch
      %56 = sbr.rel (0) target = $region13
    $region12: #{tpu_custom_call.1} parent=1 // pred_region
      %s58 = ssub.s32 256, 256
      %59 = vsyncadd [#allocation9], %s58
      %s60 = sshll.u32 [#allocation10], 4
      %s61 = int_to_ptr.vmem [resolvable:$true] %s60
      %66 = dma.hbm_to_vmem [thread:$0]  %s2, 256, %s61, [#allocation9], 128, 128, 8
    $region13: #{tpu_custom_call.1} parent=1 // pred_fallthru
      _
    // Predicated region
    $region14: #{tpu_custom_call.1} parent=1 // pred_check
      _
    $region15: #{tpu_custom_call.1} parent=1 // pred_check_branch
      %68 = sbr.rel (0) target = $region17
    $region16: #{tpu_custom_call.1} parent=1 // pred_region
      _
    $region17: #{tpu_custom_call.1} parent=1 // pred_fallthru
      _
    // Predicated region
    $region18: #{tpu_custom_call.1} parent=1 // pred_check
      _
    $region19: #{tpu_custom_call.1} parent=1 // pred_check_branch
      %70 = sbr.rel (0) target = $region21
    $region20: #{tpu_custom_call.1} parent=1 // pred_region
      _
    $region21: #{tpu_custom_call.1} parent=1 // pred_fallthru
      _
    // Predicated region
    $region22: #{tpu_custom_call.1} parent=1 // pred_check
      _
    $region23: #{tpu_custom_call.1} parent=1 // pred_check_branch
      %72 = sbr.rel (0) target = $region25
    $region24: #{tpu_custom_call.1} parent=1 // pred_region
      %s74 = ssub.s32 16, 16
      %75 = vsyncadd [#allocation12], %s74
      %s77 = sshll.u32 [#allocation11], 4
      %s78 = int_to_ptr.vmem [resolvable:$true] %s77
      %80 = dma.hbm_to_vmem [thread:$0]  %s5, 16, %s78, [#allocation12]
    $region25: #{tpu_custom_call.1} parent=1 // pred_fallthru
      _
    // Predicated region
    $region26: #{tpu_custom_call.1} parent=1 // pred_check
      _
    $region27: #{tpu_custom_call.1} parent=1 // pred_check_branch
      %82 = sbr.rel (0) target = $region29
    $region28: #{tpu_custom_call.1} parent=1 // pred_region
      %s84 = ssub.s32 256, 256
      %85 = vsyncadd [#allocation12], %s84
      %s86 = sshll.u32 [#allocation13], 4
      %s87 = int_to_ptr.vmem [resolvable:$true] %s86
      %92 = dma.hbm_to_vmem [thread:$0]  %s6, 256, %s87, [#allocation12], 128, 128, 8
    $region29: #{tpu_custom_call.1} parent=1 // pred_fallthru
      _
    // Predicated region
    $region30: #{tpu_custom_call.1} parent=1 // pred_check
      _
    $region31: #{tpu_custom_call.1} parent=1 // pred_check_branch
      %94 = sbr.rel (0) target = $region33
    $region32: #{tpu_custom_call.1} parent=1 // pred_region
      %s96 = ssub.s32 256, 256
      %97 = vsyncadd [#allocation15], %s96
      %s98 = sshll.u32 [#allocation14], 4
      %s99 = int_to_ptr.vmem [resolvable:$true] %s98
      %104 = dma.hbm_to_vmem [thread:$0]  %s7, 256, %s99, [#allocation15], 128, 128, 8
    $region33: #{tpu_custom_call.1} parent=1 // pred_fallthru
      _
    // Predicated region
    $region34: #{tpu_custom_call.1} parent=1 // pred_check
      _
    $region35: #{tpu_custom_call.1} parent=1 // pred_check_branch
      %106 = sbr.rel (0) target = $region37
    $region36: #{tpu_custom_call.1} parent=1 // pred_region
      %s108 = ssub.s32 16, 16
      %109 = vsyncadd [#allocation15], %s108
      %s111 = sshll.u32 [#allocation16], 4
      %s112 = int_to_ptr.vmem [resolvable:$true] %s111
      %114 = dma.hbm_to_vmem [thread:$0]  %s8, 16, %s112, [#allocation15]
    $region37: #{tpu_custom_call.1} parent=1 // pred_fallthru
      _
    // Predicated region
    $region38: #{tpu_custom_call.1} parent=1 // pred_check
      _
    $region39: #{tpu_custom_call.1} parent=1 // pred_check_branch
      %116 = sbr.rel (0) target = $region41
    $region40: #{tpu_custom_call.1} parent=1 // pred_region
      _
    $region41: #{tpu_custom_call.1} parent=1 // pred_fallthru
      _
    // Predicated region
    $region42: #{tpu_custom_call.1} parent=1 // pred_check
      _
    $region43: #{tpu_custom_call.1} parent=1 // pred_check_branch
      %118 = sbr.rel (0) target = $region45
    $region44: #{tpu_custom_call.1} parent=1 // pred_region
      _
    $region45: #{tpu_custom_call.1} parent=1 // pred_fallthru
      _
    // Predicated region
    $region46: #{tpu_custom_call.1} parent=1 // pred_check
      _
    $region47: #{tpu_custom_call.1} parent=1 // pred_check_branch
      %120 = sbr.rel (0) target = $region49
    $region48: #{tpu_custom_call.1} parent=1 // pred_region
      %s122 = ssub.s32 16, 16
      %123 = vsyncadd [#allocation18], %s122
      %s125 = sshll.u32 [#allocation17], 4
      %s126 = int_to_ptr.vmem [resolvable:$true] %s125
      %128 = dma.hbm_to_vmem [thread:$0]  %s11, 16, %s126, [#allocation18]
    $region49: #{tpu_custom_call.1} parent=1 // pred_fallthru
      _
    // Predicated region
    $region50: #{tpu_custom_call.1} parent=1 // pred_check
      _
    $region51: #{tpu_custom_call.1} parent=1 // pred_check_branch
      %130 = sbr.rel (0) target = $region53
    $region52: #{tpu_custom_call.1} parent=1 // pred_region
      %s132 = ssub.s32 16, 16
      %133 = vsyncadd [#allocation18], %s132
      %s135 = sshll.u32 [#allocation19], 4
      %s136 = int_to_ptr.vmem [resolvable:$true] %s135
      %138 = dma.hbm_to_vmem [thread:$0]  %s12, 16, %s136, [#allocation18]
    $region53: #{tpu_custom_call.1} parent=1 // pred_fallthru
      _
    // Predicated region
    $region54: #{tpu_custom_call.1} parent=1 // pred_check
      _
    $region55: #{tpu_custom_call.1} parent=1 // pred_check_branch
      %140 = sbr.rel (0) target = $region57
    $region56: #{tpu_custom_call.1} parent=1 // pred_region
      _
    $region57: #{tpu_custom_call.1} parent=1 // pred_fallthru
      _
    // Predicated region
    $region58: #{tpu_custom_call.1} parent=1 // pred_check
      _
    $region59: #{tpu_custom_call.1} parent=1 // pred_check_branch
      %142 = sbr.rel (0) target = $region61
    $region60: #{tpu_custom_call.1} parent=1 // pred_region
      %s144 = ssub.s32 512, 512
      %145 = vsyncadd [#allocation21], %s144
      %s146 = sshll.u32 [#allocation20], 4
      %s147 = int_to_ptr.vmem [resolvable:$true] %s146
      %152 = dma.hbm_to_vmem [thread:$0]  %s14, 512, %s147, [#allocation21], 128, 128, 8
    $region61: #{tpu_custom_call.1} parent=1 // pred_fallthru
      _
    // Predicated region
    $region62: #{tpu_custom_call.1} parent=1 // pred_check
      _
    $region63: #{tpu_custom_call.1} parent=1 // pred_check_branch
      %154 = sbr.rel (0) target = $region65
    $region64: #{tpu_custom_call.1} parent=1 // pred_region
      _
    $region65: #{tpu_custom_call.1} parent=1 // pred_fallthru
      _
    // Predicated region
    $region66: #{tpu_custom_call.1} parent=1 // pred_check
      _
    $region67: #{tpu_custom_call.1} parent=1 // pred_check_branch
      %156 = sbr.rel (0) target = $region69
    $region68: #{tpu_custom_call.1} parent=1 // pred_region
      _
    $region69: #{tpu_custom_call.1} parent=1 // pred_fallthru
      _
    // Predicated region
    $region70: #{tpu_custom_call.1} parent=1 // pred_check
      _
    $region71: #{tpu_custom_call.1} parent=1 // pred_check_branch
      %158 = sbr.rel (0) target = $region73
    $region72: #{tpu_custom_call.1} parent=1 // pred_region
      %s160 = ssub.s32 512, 512
      %161 = vsyncadd [#allocation21], %s160
      %s162 = sshll.u32 [#allocation22], 4
      %s163 = int_to_ptr.vmem [resolvable:$true] %s162
      %168 = dma.hbm_to_vmem [thread:$0]  %s17, 512, %s163, [#allocation21], 128, 128, 8
    $region73: #{tpu_custom_call.1} parent=1 // pred_fallthru
      _
    // Predicated region
    $region74: #{tpu_custom_call.1} parent=1 // pred_check
      _
    $region75: #{tpu_custom_call.1} parent=1 // pred_check_branch
      %170 = sbr.rel (0) target = $region77
    $region76: #{tpu_custom_call.1} parent=1 // pred_region
      _
    $region77: #{tpu_custom_call.1} parent=1 // pred_fallthru
      _
    // Predicated region
    $region78: #{tpu_custom_call.1} parent=1 // pred_check
      _
    $region79: #{tpu_custom_call.1} parent=1 // pred_check_branch
      %172 = sbr.rel (0) target = $region81
    $region80: #{tpu_custom_call.1} parent=1 // pred_region
      %173 = dma.done [#allocation6], 1024
    $region81: #{tpu_custom_call.1} parent=1 // pred_fallthru
      _
    // Predicated region
    $region82: #{tpu_custom_call.1} parent=1 // pred_check
      _
    $region83: #{tpu_custom_call.1} parent=1 // pred_check_branch
      %175 = sbr.rel (0) target = $region85
    $region84: #{tpu_custom_call.1} parent=1 // pred_region
      %176 = dma.done [#allocation9], 1024
    $region85: #{tpu_custom_call.1} parent=1 // pred_fallthru
      _
    // Predicated region
    $region86: #{tpu_custom_call.1} parent=1 // pred_check
      _
    $region87: #{tpu_custom_call.1} parent=1 // pred_check_branch
      %178 = sbr.rel (0) target = $region89
    $region88: #{tpu_custom_call.1} parent=1 // pred_region
      %179 = dma.done [#allocation9], 256
    $region89: #{tpu_custom_call.1} parent=1 // pred_fallthru
      _
    // Predicated region
    $region90: #{tpu_custom_call.1} parent=1 // pred_check
      _
    $region91: #{tpu_custom_call.1} parent=1 // pred_check_branch
      %181 = sbr.rel (0) target = $region93
    $region92: #{tpu_custom_call.1} parent=1 // pred_region
      %182 = dma.done [#allocation12], 16
    $region93: #{tpu_custom_call.1} parent=1 // pred_fallthru
      _
    // Predicated region
    $region94: #{tpu_custom_call.1} parent=1 // pred_check
      _
    $region95: #{tpu_custom_call.1} parent=1 // pred_check_branch
      %184 = sbr.rel (0) target = $region97
    $region96: #{tpu_custom_call.1} parent=1 // pred_region
      %185 = dma.done [#allocation12], 256
    $region97: #{tpu_custom_call.1} parent=1 // pred_fallthru
      _
    // Predicated region
    $region98: #{tpu_custom_call.1} parent=1 // pred_check
      _
    $region99: #{tpu_custom_call.1} parent=1 // pred_check_branch
      %187 = sbr.rel (0) target = $region101
    $region100: #{tpu_custom_call.1} parent=1 // pred_region
      %188 = dma.done [#allocation15], 256
    $region101: #{tpu_custom_call.1} parent=1 // pred_fallthru
      _
    // Predicated region
    $region102: #{tpu_custom_call.1} parent=1 // pred_check
      _
    $region103: #{tpu_custom_call.1} parent=1 // pred_check_branch
      %190 = sbr.rel (0) target = $region105
    $region104: #{tpu_custom_call.1} parent=1 // pred_region
      %191 = dma.done [#allocation15], 16
    $region105: #{tpu_custom_call.1} parent=1 // pred_fallthru
      _
    // Predicated region
    $region106: #{tpu_custom_call.1} parent=1 // pred_check
      _
    $region107: #{tpu_custom_call.1} parent=1 // pred_check_branch
      %193 = sbr.rel (0) target = $region109
    $region108: #{tpu_custom_call.1} parent=1 // pred_region
      %194 = dma.done [#allocation18], 16
    $region109: #{tpu_custom_call.1} parent=1 // pred_fallthru
      _
    // Predicated region
    $region110: #{tpu_custom_call.1} parent=1 // pred_check
      _
    $region111: #{tpu_custom_call.1} parent=1 // pred_check_branch
      %196 = sbr.rel (0) target = $region113
    $region112: #{tpu_custom_call.1} parent=1 // pred_region
      %197 = dma.done [#allocation18], 16
    $region113: #{tpu_custom_call.1} parent=1 // pred_fallthru
      _
    // Predicated region
    $region114: #{tpu_custom_call.1} parent=1 // pred_check
      _
    $region115: #{tpu_custom_call.1} parent=1 // pred_check_branch
      %199 = sbr.rel (0) target = $region117
    $region116: #{tpu_custom_call.1} parent=1 // pred_region
      %200 = dma.done [#allocation21], 512
    $region117: #{tpu_custom_call.1} parent=1 // pred_fallthru
      _
    // Predicated region
    $region118: #{tpu_custom_call.1} parent=1 // pred_check
      _
    $region119: #{tpu_custom_call.1} parent=1 // pred_check_branch
      %202 = sbr.rel (0) target = $region121
    $region120: #{tpu_custom_call.1} parent=1 // pred_region
      %203 = dma.done [#allocation21], 512
    $region121: #{tpu_custom_call.1} parent=1 // pred_fallthru
      _
    %p204 = scmp.eq.s32.totalorder 0, 0
    // Predicated region
    $region122: #{tpu_custom_call.1} parent=1 // pred_check
      %p205 = pneg %p204
    $region123: #{tpu_custom_call.1} parent=1 // pred_check_branch
      %207 = sbr.rel (%p205) target = $region125
    $region124: #{tpu_custom_call.1} parent=1 // pred_region
      %vm208 = vcmask 261120
      %209 = vst.msk [vmem:[#allocation4] sm:$0xff] %vm208, 0.0
      %210 = vst.msk [vmem:[#allocation4 + $0x8] sm:$0xff] %vm208, 0.0
    $region125: #{tpu_custom_call.1} parent=1 // pred_fallthru
      _
    %v211 = vld [vmem:[#allocation8] sm:$0xff]
    %v212 = vld [vmem:[#allocation8 + $0x8] sm:$0xff]
    %v213 = vld [vmem:[#allocation8 + $0x10] sm:$0xff]
    %v214 = vld [vmem:[#allocation8 + $0x18] sm:$0xff]
    %v215 = vld [vmem:[#allocation8 + $0x20] sm:$0xff]
    %v216 = vld [vmem:[#allocation8 + $0x28] sm:$0xff]
    %v217 = vld [vmem:[#allocation8 + $0x30] sm:$0xff]
    %v218 = vld [vmem:[#allocation8 + $0x38] sm:$0xff]
    %v219 = vld [vmem:[#allocation5] sm:$0xff]
    %v220 = vld [vmem:[#allocation5 + $0x8] sm:$0xff]
    %v221 = vld [vmem:[#allocation5 + $0x10] sm:$0xff]
    %v222 = vld [vmem:[#allocation5 + $0x18] sm:$0xff]
    %v223 = vld [vmem:[#allocation5 + $0x20] sm:$0xff]
    %v224 = vld [vmem:[#allocation5 + $0x28] sm:$0xff]
    %v225 = vld [vmem:[#allocation5 + $0x30] sm:$0xff]
    %v226 = vld [vmem:[#allocation5 + $0x38] sm:$0xff]
    %v227 = vld [vmem:[#allocation10] sm:$0xff]
    %v228 = vld [vmem:[#allocation10 + $0x8] sm:$0xff]
    %v229 = vld [vmem:[%s3] sm:$0x1]
    %v231 = vlaneseq
    %v232 = vshrl.u32 %v231, 7
    %v233 = vsub.s32 0, %v232
    %v234 = vrot.slane %v229, %v233
    %vm236 = vcmask 130048
    %v238 = vsel %vm236, %v211, 0
    %v241 = vsel %vm236, %v212, 0
    %v244 = vsel %vm236, %v213, 0
    %v247 = vsel %vm236, %v214, 0
    %v250 = vsel %vm236, %v215, 0
    %v253 = vsel %vm236, %v216, 0
    %v256 = vsel %vm236, %v217, 0
    %v259 = vsel %vm236, %v218, 0
    %261 = vmatprep.subr.mxu0 0.0
    %262 = vmatpush1.msra.mxu0 %v227
    %263 = vmatprep.subr.mxu0 0.0
    %264 = vmatpush1.msra.mxu0 %v228
    %265 = vmatprep.subr.mxu0 0.0
    %266 = vmatpush1.msra.mxu0 0.0
    %267 = vmatprep.subr.mxu0 0.0
    %268 = vmatpush1.msra.mxu0 0.0
    %269 = vmatprep.subr.mxu0 0.0
    %270 = vmatpush1.msra.mxu0 0.0
    %271 = vmatprep.subr.mxu0 0.0
    %272 = vmatpush1.msra.mxu0 0.0
    %273 = vmatprep.subr.mxu0 0.0
    %274 = vmatpush1.msra.mxu0 0.0
    %275 = vmatprep.subr.mxu0 0.0
    %276 = vmatpush1.msra.mxu0 0.0
    %277 = vmatprep.subr.mxu0 0.0
    %278 = vmatpush1.msra.mxu0 0.0
    %279 = vmatprep.subr.mxu0 0.0
    %280 = vmatpush1.msra.mxu0 0.0
    %281 = vmatprep.subr.mxu0 0.0
    %282 = vmatpush1.msra.mxu0 0.0
    %283 = vmatprep.subr.mxu0 0.0
    %284 = vmatpush1.msra.mxu0 0.0
    %285 = vmatprep.subr.mxu0 0.0
    %286 = vmatpush1.msra.mxu0 0.0
    %287 = vmatprep.subr.mxu0 0.0
    %288 = vmatpush1.msra.mxu0 0.0
    %289 = vmatprep.subr.mxu0 0.0
    %290 = vmatpush1.msra.mxu0 0.0
    %291 = vmatprep.subr.mxu0 0.0
    %292 = vmatpush1.msra.mxu0 0.0
    %293 = vmatprep.subr.mxu0 0.0
    %294 = vmatpush1.msra.mxu0 0.0
    %295 = vmatprep.subr.mxu0 0.0
    %296 = vmatpush1.msra.mxu0 0.0
    %297 = vmatprep.subr.mxu0 0.0
    %298 = vmatpush1.msra.mxu0 0.0
    %299 = vmatprep.subr.mxu0 0.0
    %300 = vmatpush1.msra.mxu0 0.0
    %301 = vmatprep.subr.mxu0 0.0
    %302 = vmatpush1.msra.mxu0 0.0
    %303 = vmatprep.subr.mxu0 0.0
    %304 = vmatpush1.msra.mxu0 0.0
    %305 = vmatprep.subr.mxu0 0.0
    %306 = vmatpush1.msra.mxu0 0.0
    %307 = vmatprep.subr.mxu0 0.0
    %308 = vmatpush1.msra.mxu0 0.0
    %309 = vmatprep.subr.mxu0 0.0
    %310 = vmatpush1.msra.mxu0 0.0
    %311 = vmatprep.subr.mxu0 0.0
    %312 = vmatpush1.msra.mxu0 0.0
    %313 = vmatprep.subr.mxu0 0.0
    %314 = vmatpush1.msra.mxu0 0.0
    %315 = vmatprep.subr.mxu0 0.0
    %316 = vmatpush1.msra.mxu0 0.0
    %317 = vmatprep.subr.mxu0 0.0
    %318 = vmatpush1.msra.mxu0 0.0
    %319 = vmatprep.subr.mxu0 0.0
    %320 = vmatpush1.msra.mxu0 0.0
    %321 = vmatprep.subr.mxu0 0.0
    %322 = vmatpush1.msra.mxu0 0.0
    %323 = vmatprep.subr.mxu0 0.0
    %324 = vmatpush1.msra.mxu0 0.0
    %325 = vmatprep.mubr.f32.mxu0 0.0
    %326 = vmatmul.mubr.f32.gmra.mrb[0].mxu0 %v238
    %v327 = vpop.f32.mrb[0].mxu0
    %v328 = vadd.f32 %v234, %v327
    %v329 = vpop.f32.mrb[0].mxu0
    %330 = vmatprep.mubr.f32.mxu0 0.0
    %331 = vmatmul.mubr.f32.gmra.mrb[0].mxu0 %v241
    %v332 = vpop.f32.mrb[0].mxu0
    %v333 = vadd.f32 %v234, %v332
    %v334 = vpop.f32.mrb[0].mxu0
    %335 = vmatprep.mubr.f32.mxu0 0.0
    %336 = vmatmul.mubr.f32.gmra.mrb[0].mxu0 %v244
    %v337 = vpop.f32.mrb[0].mxu0
    %v338 = vadd.f32 %v234, %v337
    %v339 = vpop.f32.mrb[0].mxu0
    %340 = vmatprep.mubr.f32.mxu0 0.0
    %341 = vmatmul.mubr.f32.gmra.mrb[0].mxu0 %v247
    %v342 = vpop.f32.mrb[0].mxu0
    %v343 = vadd.f32 %v234, %v342
    %v344 = vpop.f32.mrb[0].mxu0
    %345 = vmatprep.mubr.f32.mxu0 0.0
    %346 = vmatmul.mubr.f32.gmra.mrb[0].mxu0 %v250
    %v347 = vpop.f32.mrb[0].mxu0
    %v348 = vadd.f32 %v234, %v347
    %v349 = vpop.f32.mrb[0].mxu0
    %350 = vmatprep.mubr.f32.mxu0 0.0
    %351 = vmatmul.mubr.f32.gmra.mrb[0].mxu0 %v253
    %v352 = vpop.f32.mrb[0].mxu0
    %v353 = vadd.f32 %v234, %v352
    %v354 = vpop.f32.mrb[0].mxu0
    %355 = vmatprep.mubr.f32.mxu0 0.0
    %356 = vmatmul.mubr.f32.gmra.mrb[0].mxu0 %v256
    %v357 = vpop.f32.mrb[0].mxu0
    %v358 = vadd.f32 %v234, %v357
    %v359 = vpop.f32.mrb[0].mxu0
    %360 = vmatprep.mubr.f32.mxu0 0.0
    %361 = vmatmul.mubr.f32.gmra.mrb[0].mxu0 %v259
    %v362 = vpop.f32.mrb[0].mxu0
    %v363 = vadd.f32 %v234, %v362
    %v364 = vpop.f32.mrb[0].mxu0
    %365 = vdwg.mxu0
    %v366 = vmax.f32 %v328, 0.0
    %v367 = vmax.f32 %v333, 0.0
    %v368 = vmax.f32 %v338, 0.0
    %v369 = vmax.f32 %v343, 0.0
    %v370 = vmax.f32 %v348, 0.0
    %v371 = vmax.f32 %v353, 0.0
    %v372 = vmax.f32 %v358, 0.0
    %v373 = vmax.f32 %v363, 0.0
    %v374 = vld [vmem:[%s4] sm:$0xff]
    %v375 = vld [vmem:[%s4 + $0x8] sm:$0xff]
    %v376 = vld [vmem:[%s4 + $0x10] sm:$0xff]
    %v377 = vld [vmem:[%s4 + $0x18] sm:$0xff]
    %v378 = vld [vmem:[#allocation11] sm:$0x1]
    %v380 = vlaneseq
    %v381 = vshrl.u32 %v380, 7
    %v382 = vsub.s32 0, %v381
    %v383 = vrot.slane %v378, %v382
    %vm385 = vcmask 261120
    %v387 = vsel %vm385, %v366, 0
    %v390 = vsel %vm385, %v367, 0
    %v393 = vsel %vm385, %v368, 0
    %v396 = vsel %vm385, %v369, 0
    %v399 = vsel %vm385, %v370, 0
    %v402 = vsel %vm385, %v371, 0
    %v405 = vsel %vm385, %v372, 0
    %v408 = vsel %vm385, %v373, 0
    %410 = vmatprep.subr.mxu0 0.0
    %411 = vmatpush1.msra.mxu0 %v374
    %412 = vmatprep.subr.mxu0 0.0
    %413 = vmatpush1.msra.mxu0 %v375
    %414 = vmatprep.subr.mxu0 0.0
    %415 = vmatpush1.msra.mxu0 %v376
    %416 = vmatprep.subr.mxu0 0.0
    %417 = vmatpush1.msra.mxu0 %v377
    %418 = vmatprep.subr.mxu0 0.0
    %419 = vmatpush1.msra.mxu0 0.0
    %420 = vmatprep.subr.mxu0 0.0
    %421 = vmatpush1.msra.mxu0 0.0
    %422 = vmatprep.subr.mxu0 0.0
    %423 = vmatpush1.msra.mxu0 0.0
    %424 = vmatprep.subr.mxu0 0.0
    %425 = vmatpush1.msra.mxu0 0.0
    %426 = vmatprep.subr.mxu0 0.0
    %427 = vmatpush1.msra.mxu0 0.0
    %428 = vmatprep.subr.mxu0 0.0
    %429 = vmatpush1.msra.mxu0 0.0
    %430 = vmatprep.subr.mxu0 0.0
    %431 = vmatpush1.msra.mxu0 0.0
    %432 = vmatprep.subr.mxu0 0.0
    %433 = vmatpush1.msra.mxu0 0.0
    %434 = vmatprep.subr.mxu0 0.0
    %435 = vmatpush1.msra.mxu0 0.0
    %436 = vmatprep.subr.mxu0 0.0
    %437 = vmatpush1.msra.mxu0 0.0
    %438 = vmatprep.subr.mxu0 0.0
    %439 = vmatpush1.msra.mxu0 0.0
    %440 = vmatprep.subr.mxu0 0.0
    %441 = vmatpush1.msra.mxu0 0.0
    %442 = vmatprep.subr.mxu0 0.0
    %443 = vmatpush1.msra.mxu0 0.0
    %444 = vmatprep.subr.mxu0 0.0
    %445 = vmatpush1.msra.mxu0 0.0
    %446 = vmatprep.subr.mxu0 0.0
    %447 = vmatpush1.msra.mxu0 0.0
    %448 = vmatprep.subr.mxu0 0.0
    %449 = vmatpush1.msra.mxu0 0.0
    %450 = vmatprep.subr.mxu0 0.0
    %451 = vmatpush1.msra.mxu0 0.0
    %452 = vmatprep.subr.mxu0 0.0
    %453 = vmatpush1.msra.mxu0 0.0
    %454 = vmatprep.subr.mxu0 0.0
    %455 = vmatpush1.msra.mxu0 0.0
    %456 = vmatprep.subr.mxu0 0.0
    %457 = vmatpush1.msra.mxu0 0.0
    %458 = vmatprep.subr.mxu0 0.0
    %459 = vmatpush1.msra.mxu0 0.0
    %460 = vmatprep.subr.mxu0 0.0
    %461 = vmatpush1.msra.mxu0 0.0
    %462 = vmatprep.subr.mxu0 0.0
    %463 = vmatpush1.msra.mxu0 0.0
    %464 = vmatprep.subr.mxu0 0.0
    %465 = vmatpush1.msra.mxu0 0.0
    %466 = vmatprep.subr.mxu0 0.0
    %467 = vmatpush1.msra.mxu0 0.0
    %468 = vmatprep.subr.mxu0 0.0
    %469 = vmatpush1.msra.mxu0 0.0
    %470 = vmatprep.subr.mxu0 0.0
    %471 = vmatpush1.msra.mxu0 0.0
    %472 = vmatprep.subr.mxu0 0.0
    %473 = vmatpush1.msra.mxu0 0.0
    %474 = vmatprep.mubr.f32.mxu0 0.0
    %475 = vmatmul.mubr.f32.gmra.mrb[0].mxu0 %v387
    %v476 = vpop.f32.mrb[0].mxu0
    %v477 = vadd.f32 %v383, %v476
    %v478 = vpop.f32.mrb[0].mxu0
    %479 = vmatprep.mubr.f32.mxu0 0.0
    %480 = vmatmul.mubr.f32.gmra.mrb[0].mxu0 %v390
    %v481 = vpop.f32.mrb[0].mxu0
    %v482 = vadd.f32 %v383, %v481
    %v483 = vpop.f32.mrb[0].mxu0
    %484 = vmatprep.mubr.f32.mxu0 0.0
    %485 = vmatmul.mubr.f32.gmra.mrb[0].mxu0 %v393
    %v486 = vpop.f32.mrb[0].mxu0
    %v487 = vadd.f32 %v383, %v486
    %v488 = vpop.f32.mrb[0].mxu0
    %489 = vmatprep.mubr.f32.mxu0 0.0
    %490 = vmatmul.mubr.f32.gmra.mrb[0].mxu0 %v396
    %v491 = vpop.f32.mrb[0].mxu0
    %v492 = vadd.f32 %v383, %v491
    %v493 = vpop.f32.mrb[0].mxu0
    %494 = vmatprep.mubr.f32.mxu0 0.0
    %495 = vmatmul.mubr.f32.gmra.mrb[0].mxu0 %v399
    %v496 = vpop.f32.mrb[0].mxu0
    %v497 = vadd.f32 %v383, %v496
    %v498 = vpop.f32.mrb[0].mxu0
    %499 = vmatprep.mubr.f32.mxu0 0.0
    %500 = vmatmul.mubr.f32.gmra.mrb[0].mxu0 %v402
    %v501 = vpop.f32.mrb[0].mxu0
    %v502 = vadd.f32 %v383, %v501
    %v503 = vpop.f32.mrb[0].mxu0
    %504 = vmatprep.mubr.f32.mxu0 0.0
    %505 = vmatmul.mubr.f32.gmra.mrb[0].mxu0 %v405
    %v506 = vpop.f32.mrb[0].mxu0
    %v507 = vadd.f32 %v383, %v506
    %v508 = vpop.f32.mrb[0].mxu0
    %509 = vmatprep.mubr.f32.mxu0 0.0
    %510 = vmatmul.mubr.f32.gmra.mrb[0].mxu0 %v408
    %v511 = vpop.f32.mrb[0].mxu0
    %v512 = vadd.f32 %v383, %v511
    %v513 = vpop.f32.mrb[0].mxu0
    %514 = vdwg.mxu0
    %v515 = vmax.f32 %v477, 0.0
    %v516 = vmax.f32 %v482, 0.0
    %v517 = vmax.f32 %v487, 0.0
    %v518 = vmax.f32 %v492, 0.0
    %v519 = vmax.f32 %v497, 0.0
    %v520 = vmax.f32 %v502, 0.0
    %v521 = vmax.f32 %v507, 0.0
    %v522 = vmax.f32 %v512, 0.0
    %v523 = vld [vmem:[#allocation13] sm:$0xff]
    %v524 = vld [vmem:[#allocation13 + $0x8] sm:$0xff]
    %v525 = vld [vmem:[#allocation14] sm:$0xff]
    %v526 = vld [vmem:[#allocation14 + $0x8] sm:$0xff]
    %v528 = vsel %vm236, %v515, 0
    %v531 = vsel %vm236, %v516, 0
    %v534 = vsel %vm236, %v517, 0
    %v537 = vsel %vm236, %v518, 0
    %v540 = vsel %vm236, %v519, 0
    %v543 = vsel %vm236, %v520, 0
    %v546 = vsel %vm236, %v521, 0
    %v549 = vsel %vm236, %v522, 0
    %551 = vmatprep.subr.mxu0 0.0
    %552 = vmatpush1.msra.mxu0 %v525
    %553 = vmatprep.subr.mxu0 0.0
    %554 = vmatpush1.msra.mxu0 %v526
    %555 = vmatprep.subr.mxu0 0.0
    %556 = vmatpush1.msra.mxu0 0.0
    %557 = vmatprep.subr.mxu0 0.0
    %558 = vmatpush1.msra.mxu0 0.0
    %559 = vmatprep.subr.mxu0 0.0
    %560 = vmatpush1.msra.mxu0 0.0
    %561 = vmatprep.subr.mxu0 0.0
    %562 = vmatpush1.msra.mxu0 0.0
    %563 = vmatprep.subr.mxu0 0.0
    %564 = vmatpush1.msra.mxu0 0.0
    %565 = vmatprep.subr.mxu0 0.0
    %566 = vmatpush1.msra.mxu0 0.0
    %567 = vmatprep.subr.mxu0 0.0
    %568 = vmatpush1.msra.mxu0 0.0
    %569 = vmatprep.subr.mxu0 0.0
    %570 = vmatpush1.msra.mxu0 0.0
    %571 = vmatprep.subr.mxu0 0.0
    %572 = vmatpush1.msra.mxu0 0.0
    %573 = vmatprep.subr.mxu0 0.0
    %574 = vmatpush1.msra.mxu0 0.0
    %575 = vmatprep.subr.mxu0 0.0
    %576 = vmatpush1.msra.mxu0 0.0
    %577 = vmatprep.subr.mxu0 0.0
    %578 = vmatpush1.msra.mxu0 0.0
    %579 = vmatprep.subr.mxu0 0.0
    %580 = vmatpush1.msra.mxu0 0.0
    %581 = vmatprep.subr.mxu0 0.0
    %582 = vmatpush1.msra.mxu0 0.0
    %583 = vmatprep.subr.mxu0 0.0
    %584 = vmatpush1.msra.mxu0 0.0
    %585 = vmatprep.subr.mxu0 0.0
    %586 = vmatpush1.msra.mxu0 0.0
    %587 = vmatprep.subr.mxu0 0.0
    %588 = vmatpush1.msra.mxu0 0.0
    %589 = vmatprep.subr.mxu0 0.0
    %590 = vmatpush1.msra.mxu0 0.0
    %591 = vmatprep.subr.mxu0 0.0
    %592 = vmatpush1.msra.mxu0 0.0
    %593 = vmatprep.subr.mxu0 0.0
    %594 = vmatpush1.msra.mxu0 0.0
    %595 = vmatprep.subr.mxu0 0.0
    %596 = vmatpush1.msra.mxu0 0.0
    %597 = vmatprep.subr.mxu0 0.0
    %598 = vmatpush1.msra.mxu0 0.0
    %599 = vmatprep.subr.mxu0 0.0
    %600 = vmatpush1.msra.mxu0 0.0
    %601 = vmatprep.subr.mxu0 0.0
    %602 = vmatpush1.msra.mxu0 0.0
    %603 = vmatprep.subr.mxu0 0.0
    %604 = vmatpush1.msra.mxu0 0.0
    %605 = vmatprep.subr.mxu0 0.0
    %606 = vmatpush1.msra.mxu0 0.0
    %607 = vmatprep.subr.mxu0 0.0
    %608 = vmatpush1.msra.mxu0 0.0
    %609 = vmatprep.subr.mxu0 0.0
    %610 = vmatpush1.msra.mxu0 0.0
    %611 = vmatprep.subr.mxu0 0.0
    %612 = vmatpush1.msra.mxu0 0.0
    %613 = vmatprep.subr.mxu0 0.0
    %614 = vmatpush1.msra.mxu0 0.0
    %615 = vmatprep.mubr.f32.mxu0 0.0
    %616 = vmatmul.mubr.f32.gmra.mrb[0].mxu0 %v528
    %v617 = vpop.f32.mrb[0].mxu0
    %v618 = vadd.f32 0.0, %v617
    %v619 = vpop.f32.mrb[0].mxu0
    %620 = vmatprep.mubr.f32.mxu0 0.0
    %621 = vmatmul.mubr.f32.gmra.mrb[0].mxu0 %v531
    %v622 = vpop.f32.mrb[0].mxu0
    %v623 = vadd.f32 0.0, %v622
    %v624 = vpop.f32.mrb[0].mxu0
    %625 = vmatprep.mubr.f32.mxu0 0.0
    %626 = vmatmul.mubr.f32.gmra.mrb[0].mxu0 %v534
    %v627 = vpop.f32.mrb[0].mxu0
    %v628 = vadd.f32 0.0, %v627
    %v629 = vpop.f32.mrb[0].mxu0
    %630 = vmatprep.mubr.f32.mxu0 0.0
    %631 = vmatmul.mubr.f32.gmra.mrb[0].mxu0 %v537
    %v632 = vpop.f32.mrb[0].mxu0
    %v633 = vadd.f32 0.0, %v632
    %v634 = vpop.f32.mrb[0].mxu0
    %635 = vmatprep.mubr.f32.mxu0 0.0
    %636 = vmatmul.mubr.f32.gmra.mrb[0].mxu0 %v540
    %v637 = vpop.f32.mrb[0].mxu0
    %v638 = vadd.f32 0.0, %v637
    %v639 = vpop.f32.mrb[0].mxu0
    %640 = vmatprep.mubr.f32.mxu0 0.0
    %641 = vmatmul.mubr.f32.gmra.mrb[0].mxu0 %v543
    %v642 = vpop.f32.mrb[0].mxu0
    %v643 = vadd.f32 0.0, %v642
    %v644 = vpop.f32.mrb[0].mxu0
    %645 = vmatprep.mubr.f32.mxu0 0.0
    %646 = vmatmul.mubr.f32.gmra.mrb[0].mxu0 %v546
    %v647 = vpop.f32.mrb[0].mxu0
    %v648 = vadd.f32 0.0, %v647
    %v649 = vpop.f32.mrb[0].mxu0
    %650 = vmatprep.mubr.f32.mxu0 0.0
    %651 = vmatmul.mubr.f32.gmra.mrb[0].mxu0 %v549
    %v652 = vpop.f32.mrb[0].mxu0
    %v653 = vadd.f32 0.0, %v652
    %v654 = vpop.f32.mrb[0].mxu0
    %655 = vdwg.mxu0
    %v657 = vsel %vm236, %v219, 0
    %v660 = vsel %vm236, %v220, 0
    %v663 = vsel %vm236, %v221, 0
    %v666 = vsel %vm236, %v222, 0
    %v669 = vsel %vm236, %v223, 0
    %v672 = vsel %vm236, %v224, 0
    %v675 = vsel %vm236, %v225, 0
    %v678 = vsel %vm236, %v226, 0
    %680 = vmatprep.subr.mxu0 0.0
    %681 = vmatpush1.msra.mxu0 %v523
    %682 = vmatprep.subr.mxu0 0.0
    %683 = vmatpush1.msra.mxu0 %v524
    %684 = vmatprep.subr.mxu0 0.0
    %685 = vmatpush1.msra.mxu0 0.0
    %686 = vmatprep.subr.mxu0 0.0
    %687 = vmatpush1.msra.mxu0 0.0
    %688 = vmatprep.subr.mxu0 0.0
    %689 = vmatpush1.msra.mxu0 0.0
    %690 = vmatprep.subr.mxu0 0.0
    %691 = vmatpush1.msra.mxu0 0.0
    %692 = vmatprep.subr.mxu0 0.0
    %693 = vmatpush1.msra.mxu0 0.0
    %694 = vmatprep.subr.mxu0 0.0
    %695 = vmatpush1.msra.mxu0 0.0
    %696 = vmatprep.subr.mxu0 0.0
    %697 = vmatpush1.msra.mxu0 0.0
    %698 = vmatprep.subr.mxu0 0.0
    %699 = vmatpush1.msra.mxu0 0.0
    %700 = vmatprep.subr.mxu0 0.0
    %701 = vmatpush1.msra.mxu0 0.0
    %702 = vmatprep.subr.mxu0 0.0
    %703 = vmatpush1.msra.mxu0 0.0
    %704 = vmatprep.subr.mxu0 0.0
    %705 = vmatpush1.msra.mxu0 0.0
    %706 = vmatprep.subr.mxu0 0.0
    %707 = vmatpush1.msra.mxu0 0.0
    %708 = vmatprep.subr.mxu0 0.0
    %709 = vmatpush1.msra.mxu0 0.0
    %710 = vmatprep.subr.mxu0 0.0
    %711 = vmatpush1.msra.mxu0 0.0
    %712 = vmatprep.subr.mxu0 0.0
    %713 = vmatpush1.msra.mxu0 0.0
    %714 = vmatprep.subr.mxu0 0.0
    %715 = vmatpush1.msra.mxu0 0.0
    %716 = vmatprep.subr.mxu0 0.0
    %717 = vmatpush1.msra.mxu0 0.0
    %718 = vmatprep.subr.mxu0 0.0
    %719 = vmatpush1.msra.mxu0 0.0
    %720 = vmatprep.subr.mxu0 0.0
    %721 = vmatpush1.msra.mxu0 0.0
    %722 = vmatprep.subr.mxu0 0.0
    %723 = vmatpush1.msra.mxu0 0.0
    %724 = vmatprep.subr.mxu0 0.0
    %725 = vmatpush1.msra.mxu0 0.0
    %726 = vmatprep.subr.mxu0 0.0
    %727 = vmatpush1.msra.mxu0 0.0
    %728 = vmatprep.subr.mxu0 0.0
    %729 = vmatpush1.msra.mxu0 0.0
    %730 = vmatprep.subr.mxu0 0.0
    %731 = vmatpush1.msra.mxu0 0.0
    %732 = vmatprep.subr.mxu0 0.0
    %733 = vmatpush1.msra.mxu0 0.0
    %734 = vmatprep.subr.mxu0 0.0
    %735 = vmatpush1.msra.mxu0 0.0
    %736 = vmatprep.subr.mxu0 0.0
    %737 = vmatpush1.msra.mxu0 0.0
    %738 = vmatprep.subr.mxu0 0.0
    %739 = vmatpush1.msra.mxu0 0.0
    %740 = vmatprep.subr.mxu0 0.0
    %741 = vmatpush1.msra.mxu0 0.0
    %742 = vmatprep.subr.mxu0 0.0
    %743 = vmatpush1.msra.mxu0 0.0
    %744 = vmatprep.mubr.f32.mxu0 0.0
    %745 = vmatmul.mubr.f32.gmra.mrb[0].mxu0 %v657
    %v746 = vpop.f32.mrb[0].mxu0
    %v747 = vadd.f32 %v618, %v746
    %v748 = vpop.f32.mrb[0].mxu0
    %749 = vmatprep.mubr.f32.mxu0 0.0
    %750 = vmatmul.mubr.f32.gmra.mrb[0].mxu0 %v660
    %v751 = vpop.f32.mrb[0].mxu0
    %v752 = vadd.f32 %v623, %v751
    %v753 = vpop.f32.mrb[0].mxu0
    %754 = vmatprep.mubr.f32.mxu0 0.0
    %755 = vmatmul.mubr.f32.gmra.mrb[0].mxu0 %v663
    %v756 = vpop.f32.mrb[0].mxu0
    %v757 = vadd.f32 %v628, %v756
    %v758 = vpop.f32.mrb[0].mxu0
    %759 = vmatprep.mubr.f32.mxu0 0.0
    %760 = vmatmul.mubr.f32.gmra.mrb[0].mxu0 %v666
    %v761 = vpop.f32.mrb[0].mxu0
    %v762 = vadd.f32 %v633, %v761
    %v763 = vpop.f32.mrb[0].mxu0
    %764 = vmatprep.mubr.f32.mxu0 0.0
    %765 = vmatmul.mubr.f32.gmra.mrb[0].mxu0 %v669
    %v766 = vpop.f32.mrb[0].mxu0
    %v767 = vadd.f32 %v638, %v766
    %v768 = vpop.f32.mrb[0].mxu0
    %769 = vmatprep.mubr.f32.mxu0 0.0
    %770 = vmatmul.mubr.f32.gmra.mrb[0].mxu0 %v672
    %v771 = vpop.f32.mrb[0].mxu0
    %v772 = vadd.f32 %v643, %v771
    %v773 = vpop.f32.mrb[0].mxu0
    %774 = vmatprep.mubr.f32.mxu0 0.0
    %775 = vmatmul.mubr.f32.gmra.mrb[0].mxu0 %v675
    %v776 = vpop.f32.mrb[0].mxu0
    %v777 = vadd.f32 %v648, %v776
    %v778 = vpop.f32.mrb[0].mxu0
    %779 = vmatprep.mubr.f32.mxu0 0.0
    %780 = vmatmul.mubr.f32.gmra.mrb[0].mxu0 %v678
    %v781 = vpop.f32.mrb[0].mxu0
    %v782 = vadd.f32 %v653, %v781
    %v783 = vpop.f32.mrb[0].mxu0
    %784 = vdwg.mxu0
    %v785 = vld [vmem:[#allocation16] sm:$0x1]
    %v787 = vlaneseq
    %v788 = vshrl.u32 %v787, 7
    %v789 = vsub.s32 0, %v788
    %v790 = vrot.slane %v785, %v789
    %v792 = vadd.f32 %v747, %v790
    %v793 = vadd.f32 %v752, %v790
    %v794 = vadd.f32 %v757, %v790
    %v795 = vadd.f32 %v762, %v790
    %v796 = vadd.f32 %v767, %v790
    %v797 = vadd.f32 %v772, %v790
    %v798 = vadd.f32 %v777, %v790
    %v799 = vadd.f32 %v782, %v790
    %v800 = vld [vmem:[%s9] sm:$0xff]
    %v801 = vld [vmem:[%s9 + $0x8] sm:$0xff]
    %v802 = vld [vmem:[%s9 + $0x10] sm:$0xff]
    %v803 = vld [vmem:[%s9 + $0x18] sm:$0xff]
    %v804 = vld [vmem:[#allocation17] sm:$0x1]
    %v806 = vlaneseq
    %v807 = vshrl.u32 %v806, 7
    %v808 = vsub.s32 0, %v807
    %v809 = vrot.slane %v804, %v808
    %v812 = vsel %vm385, %v792, 0
    %v815 = vsel %vm385, %v793, 0
    %v818 = vsel %vm385, %v794, 0
    %v821 = vsel %vm385, %v795, 0
    %v824 = vsel %vm385, %v796, 0
    %v827 = vsel %vm385, %v797, 0
    %v830 = vsel %vm385, %v798, 0
    %v833 = vsel %vm385, %v799, 0
    %835 = vmatprep.subr.mxu0 0.0
    %836 = vmatpush1.msra.mxu0 %v800
    %837 = vmatprep.subr.mxu0 0.0
    %838 = vmatpush1.msra.mxu0 %v801
    %839 = vmatprep.subr.mxu0 0.0
    %840 = vmatpush1.msra.mxu0 %v802
    %841 = vmatprep.subr.mxu0 0.0
    %842 = vmatpush1.msra.mxu0 %v803
    %843 = vmatprep.subr.mxu0 0.0
    %844 = vmatpush1.msra.mxu0 0.0
    %845 = vmatprep.subr.mxu0 0.0
    %846 = vmatpush1.msra.mxu0 0.0
    %847 = vmatprep.subr.mxu0 0.0
    %848 = vmatpush1.msra.mxu0 0.0
    %849 = vmatprep.subr.mxu0 0.0
    %850 = vmatpush1.msra.mxu0 0.0
    %851 = vmatprep.subr.mxu0 0.0
    %852 = vmatpush1.msra.mxu0 0.0
    %853 = vmatprep.subr.mxu0 0.0
    %854 = vmatpush1.msra.mxu0 0.0
    %855 = vmatprep.subr.mxu0 0.0
    %856 = vmatpush1.msra.mxu0 0.0
    %857 = vmatprep.subr.mxu0 0.0
    %858 = vmatpush1.msra.mxu0 0.0
    %859 = vmatprep.subr.mxu0 0.0
    %860 = vmatpush1.msra.mxu0 0.0
    %861 = vmatprep.subr.mxu0 0.0
    %862 = vmatpush1.msra.mxu0 0.0
    %863 = vmatprep.subr.mxu0 0.0
    %864 = vmatpush1.msra.mxu0 0.0
    %865 = vmatprep.subr.mxu0 0.0
    %866 = vmatpush1.msra.mxu0 0.0
    %867 = vmatprep.subr.mxu0 0.0
    %868 = vmatpush1.msra.mxu0 0.0
    %869 = vmatprep.subr.mxu0 0.0
    %870 = vmatpush1.msra.mxu0 0.0
    %871 = vmatprep.subr.mxu0 0.0
    %872 = vmatpush1.msra.mxu0 0.0
    %873 = vmatprep.subr.mxu0 0.0
    %874 = vmatpush1.msra.mxu0 0.0
    %875 = vmatprep.subr.mxu0 0.0
    %876 = vmatpush1.msra.mxu0 0.0
    %877 = vmatprep.subr.mxu0 0.0
    %878 = vmatpush1.msra.mxu0 0.0
    %879 = vmatprep.subr.mxu0 0.0
    %880 = vmatpush1.msra.mxu0 0.0
    %881 = vmatprep.subr.mxu0 0.0
    %882 = vmatpush1.msra.mxu0 0.0
    %883 = vmatprep.subr.mxu0 0.0
    %884 = vmatpush1.msra.mxu0 0.0
    %885 = vmatprep.subr.mxu0 0.0
    %886 = vmatpush1.msra.mxu0 0.0
    %887 = vmatprep.subr.mxu0 0.0
    %888 = vmatpush1.msra.mxu0 0.0
    %889 = vmatprep.subr.mxu0 0.0
    %890 = vmatpush1.msra.mxu0 0.0
    %891 = vmatprep.subr.mxu0 0.0
    %892 = vmatpush1.msra.mxu0 0.0
    %893 = vmatprep.subr.mxu0 0.0
    %894 = vmatpush1.msra.mxu0 0.0
    %895 = vmatprep.subr.mxu0 0.0
    %896 = vmatpush1.msra.mxu0 0.0
    %897 = vmatprep.subr.mxu0 0.0
    %898 = vmatpush1.msra.mxu0 0.0
    %899 = vmatprep.mubr.f32.mxu0 0.0
    %900 = vmatmul.mubr.f32.gmra.mrb[0].mxu0 %v812
    %v901 = vpop.f32.mrb[0].mxu0
    %v902 = vadd.f32 %v809, %v901
    %v903 = vpop.f32.mrb[0].mxu0
    %904 = vmatprep.mubr.f32.mxu0 0.0
    %905 = vmatmul.mubr.f32.gmra.mrb[0].mxu0 %v815
    %v906 = vpop.f32.mrb[0].mxu0
    %v907 = vadd.f32 %v809, %v906
    %v908 = vpop.f32.mrb[0].mxu0
    %909 = vmatprep.mubr.f32.mxu0 0.0
    %910 = vmatmul.mubr.f32.gmra.mrb[0].mxu0 %v818
    %v911 = vpop.f32.mrb[0].mxu0
    %v912 = vadd.f32 %v809, %v911
    %v913 = vpop.f32.mrb[0].mxu0
    %914 = vmatprep.mubr.f32.mxu0 0.0
    %915 = vmatmul.mubr.f32.gmra.mrb[0].mxu0 %v821
    %v916 = vpop.f32.mrb[0].mxu0
    %v917 = vadd.f32 %v809, %v916
    %v918 = vpop.f32.mrb[0].mxu0
    %919 = vmatprep.mubr.f32.mxu0 0.0
    %920 = vmatmul.mubr.f32.gmra.mrb[0].mxu0 %v824
    %v921 = vpop.f32.mrb[0].mxu0
    %v922 = vadd.f32 %v809, %v921
    %v923 = vpop.f32.mrb[0].mxu0
    %924 = vmatprep.mubr.f32.mxu0 0.0
    %925 = vmatmul.mubr.f32.gmra.mrb[0].mxu0 %v827
    %v926 = vpop.f32.mrb[0].mxu0
    %v927 = vadd.f32 %v809, %v926
    %v928 = vpop.f32.mrb[0].mxu0
    %929 = vmatprep.mubr.f32.mxu0 0.0
    %930 = vmatmul.mubr.f32.gmra.mrb[0].mxu0 %v830
    %v931 = vpop.f32.mrb[0].mxu0
    %v932 = vadd.f32 %v809, %v931
    %v933 = vpop.f32.mrb[0].mxu0
    %934 = vmatprep.mubr.f32.mxu0 0.0
    %935 = vmatmul.mubr.f32.gmra.mrb[0].mxu0 %v833
    %v936 = vpop.f32.mrb[0].mxu0
    %v937 = vadd.f32 %v809, %v936
    %v938 = vpop.f32.mrb[0].mxu0
    %939 = vdwg.mxu0
    %940 = vst.msk [vmem:[#allocation2] sm:$0xff] %vm385, %v792
    %941 = vst.msk [vmem:[#allocation2 + $0x8] sm:$0xff] %vm385, %v793
    %942 = vst.msk [vmem:[#allocation2 + $0x10] sm:$0xff] %vm385, %v794
    %943 = vst.msk [vmem:[#allocation2 + $0x18] sm:$0xff] %vm385, %v795
    %944 = vst.msk [vmem:[#allocation2 + $0x20] sm:$0xff] %vm385, %v796
    %945 = vst.msk [vmem:[#allocation2 + $0x28] sm:$0xff] %vm385, %v797
    %946 = vst.msk [vmem:[#allocation2 + $0x30] sm:$0xff] %vm385, %v798
    %947 = vst.msk [vmem:[#allocation2 + $0x38] sm:$0xff] %vm385, %v799
    %vm948 = vcmask 785408
    %949 = vst.msk [vmem:[#allocation3] sm:$0xff] %vm948, %v902
    %950 = vst.msk [vmem:[#allocation3 + $0x8] sm:$0xff] %vm948, %v907
    %951 = vst.msk [vmem:[#allocation3 + $0x10] sm:$0xff] %vm948, %v912
    %952 = vst.msk [vmem:[#allocation3 + $0x18] sm:$0xff] %vm948, %v917
    %953 = vst.msk [vmem:[#allocation3 + $0x20] sm:$0xff] %vm948, %v922
    %954 = vst.msk [vmem:[#allocation3 + $0x28] sm:$0xff] %vm948, %v927
    %955 = vst.msk [vmem:[#allocation3 + $0x30] sm:$0xff] %vm948, %v932
    %956 = vst.msk [vmem:[#allocation3 + $0x38] sm:$0xff] %vm948, %v937
    %v957 = vld [vmem:[%s10] sm:$0xff]
    %v958 = vld [vmem:[%s10 + $0x8] sm:$0xff]
    %v959 = vld [vmem:[%s10 + $0x10] sm:$0xff]
    %v960 = vld [vmem:[%s10 + $0x18] sm:$0xff]
    %v961 = vld [vmem:[%s13] sm:$0xff]
    %v962 = vld [vmem:[%s13 + $0x8] sm:$0xff]
    %v963 = vld [vmem:[%s13 + $0x10] sm:$0xff]
    %v964 = vld [vmem:[%s13 + $0x18] sm:$0xff]
    %v965 = vld [vmem:[#allocation20] sm:$0xff]
    %v966 = vld [vmem:[#allocation20 + $0x8] sm:$0xff]
    %v967 = vld [vmem:[#allocation20 + $0x10] sm:$0xff]
    %v968 = vld [vmem:[#allocation20 + $0x18] sm:$0xff]
    %v969 = vld [vmem:[%s15] sm:$0x1]
    %v971 = vlaneseq
    %v972 = vshrl.u32 %v971, 7
    %v973 = vsub.s32 0, %v972
    %v974 = vrot.slane %v969, %v973
    %v976 = vld [vmem:[#allocation19] sm:$0x1]
    %v978 = vlaneseq
    %v979 = vshrl.u32 %v978, 7
    %v980 = vsub.s32 0, %v979
    %v981 = vrot.slane %v976, %v980
    %v982 = vld [vmem:[%s16] sm:$0x1]
    %v984 = vlaneseq
    %v985 = vshrl.u32 %v984, 7
    %v986 = vsub.s32 0, %v985
    %v987 = vrot.slane %v982, %v986
    %v988 = vld [vmem:[#allocation4] sm:$0xff]
    %s989 = scalar_lea.vmem [#allocation4], 8
    %v990 = vld [vmem:[%s989] sm:$0xff]
    %v991 = vld [vmem:[#allocation3] sm:$0xff]
    %v993 = vsel %vm385, %v988, 0
    %995 = vmatprep.subr.mxu0 0.0
    %996 = vmatpush1.msra.mxu0 %v957
    %997 = vmatprep.subr.mxu0 0.0
    %998 = vmatpush1.msra.mxu0 %v958
    %999 = vmatprep.subr.mxu0 0.0
    %1000 = vmatpush1.msra.mxu0 %v959
    %1001 = vmatprep.subr.mxu0 0.0
    %1002 = vmatpush1.msra.mxu0 %v960
    %1003 = vmatprep.subr.mxu0 0.0
    %1004 = vmatpush1.msra.mxu0 0.0
    %1005 = vmatprep.subr.mxu0 0.0
    %1006 = vmatpush1.msra.mxu0 0.0
    %1007 = vmatprep.subr.mxu0 0.0
    %1008 = vmatpush1.msra.mxu0 0.0
    %1009 = vmatprep.subr.mxu0 0.0
    %1010 = vmatpush1.msra.mxu0 0.0
    %1011 = vmatprep.subr.mxu0 0.0
    %1012 = vmatpush1.msra.mxu0 0.0
    %1013 = vmatprep.subr.mxu0 0.0
    %1014 = vmatpush1.msra.mxu0 0.0
    %1015 = vmatprep.subr.mxu0 0.0
    %1016 = vmatpush1.msra.mxu0 0.0
    %1017 = vmatprep.subr.mxu0 0.0
    %1018 = vmatpush1.msra.mxu0 0.0
    %1019 = vmatprep.subr.mxu0 0.0
    %1020 = vmatpush1.msra.mxu0 0.0
    %1021 = vmatprep.subr.mxu0 0.0
    %1022 = vmatpush1.msra.mxu0 0.0
    %1023 = vmatprep.subr.mxu0 0.0
    %1024 = vmatpush1.msra.mxu0 0.0
    %1025 = vmatprep.subr.mxu0 0.0
    %1026 = vmatpush1.msra.mxu0 0.0
    %1027 = vmatprep.subr.mxu0 0.0
    %1028 = vmatpush1.msra.mxu0 0.0
    %1029 = vmatprep.subr.mxu0 0.0
    %1030 = vmatpush1.msra.mxu0 0.0
    %1031 = vmatprep.subr.mxu0 0.0
    %1032 = vmatpush1.msra.mxu0 0.0
    %1033 = vmatprep.subr.mxu0 0.0
    %1034 = vmatpush1.msra.mxu0 0.0
    %1035 = vmatprep.subr.mxu0 0.0
    %1036 = vmatpush1.msra.mxu0 0.0
    %1037 = vmatprep.subr.mxu0 0.0
    %1038 = vmatpush1.msra.mxu0 0.0
    %1039 = vmatprep.subr.mxu0 0.0
    %1040 = vmatpush1.msra.mxu0 0.0
    %1041 = vmatprep.subr.mxu0 0.0
    %1042 = vmatpush1.msra.mxu0 0.0
    %1043 = vmatprep.subr.mxu0 0.0
    %1044 = vmatpush1.msra.mxu0 0.0
    %1045 = vmatprep.subr.mxu0 0.0
    %1046 = vmatpush1.msra.mxu0 0.0
    %1047 = vmatprep.subr.mxu0 0.0
    %1048 = vmatpush1.msra.mxu0 0.0
    %1049 = vmatprep.subr.mxu0 0.0
    %1050 = vmatpush1.msra.mxu0 0.0
    %1051 = vmatprep.subr.mxu0 0.0
    %1052 = vmatpush1.msra.mxu0 0.0
    %1053 = vmatprep.subr.mxu0 0.0
    %1054 = vmatpush1.msra.mxu0 0.0
    %1055 = vmatprep.subr.mxu0 0.0
    %1056 = vmatpush1.msra.mxu0 0.0
    %1057 = vmatprep.subr.mxu0 0.0
    %1058 = vmatpush1.msra.mxu0 0.0
    %1059 = vmatprep.mubr.f32.mxu0 0.0
    %1060 = vmatmul.mubr.f32.gmra.mrb[0].mxu0 %v993
    %v1061 = vpop.f32.mrb[0].mxu0
    %v1062 = vadd.f32 0.0, %v1061
    %v1063 = vpop.f32.mrb[0].mxu0
    %1064 = vdwg.mxu0
    %v1065 = vadd.f32 %v991, %v1062
    %v1066 = vxor.u32 %v1065, 2147483648
    %v1067 = vmul.f32 %v1066, 1.442695
    %v1068 = vpow.pop %v1067
    %v1069 = vadd.f32 %v1068, 1.0
    %v1070 = vrcp.pop %v1069
    %v1071 = vmul.f32 1.0, %v1070
    %1072 = vrot.lane.b32.xlu0 %v981, 64
    %v1073 = vpop.permute.xlu0 %1072
    %v1075 = vadd.f32 %v1062, %v1073
    %1077 = vrot.lane.b32.xlu0 %v1075, 64
    %v1078 = vpop.permute.xlu0 %1077
    %v1080 = vmul.f32 %v1071, %v1078
    %1082 = vrot.lane.b32.xlu0 %v1080, 64
    %v1083 = vpop.permute.xlu0 %1082
    %v1085 = vadd.f32 %v991, %v1083
    %v1086 = vtanh.pop %v1085
    %v1087 = vsub.f32 1.0, %v1071
    %1089 = vrot.lane.b32.xlu0 %v1086, 96
    %v1090 = vpop.permute.xlu0 %1089
    %v1092 = vmul.f32 %v1087, %v1090
    %1093 = vrot.lane.b32.xlu0 %v988, 32
    %v1094 = vpop.permute.xlu0 %1093
    %v1096 = vmul.f32 %v1071, %v1094
    %v1097 = vadd.f32 %v1092, %v1096
    %v1098 = vld [vmem:[#allocation2] sm:$0xff]
    %1100 = vrot.lane.b32.xlu0 %v1097, 96
    %v1101 = vpop.permute.xlu0 %1100
    %v1103 = vadd.f32 %v1098, %v1101
    %v1105 = vsel %vm385, %v1103, 0
    %1107 = vmatprep.subr.mxu0 0.0
    %1108 = vmatpush1.msra.mxu0 %v961
    %1109 = vmatprep.subr.mxu0 0.0
    %1110 = vmatpush1.msra.mxu0 %v962
    %1111 = vmatprep.subr.mxu0 0.0
    %1112 = vmatpush1.msra.mxu0 %v963
    %1113 = vmatprep.subr.mxu0 0.0
    %1114 = vmatpush1.msra.mxu0 %v964
    %1115 = vmatprep.subr.mxu0 0.0
    %1116 = vmatpush1.msra.mxu0 0.0
    %1117 = vmatprep.subr.mxu0 0.0
    %1118 = vmatpush1.msra.mxu0 0.0
    %1119 = vmatprep.subr.mxu0 0.0
    %1120 = vmatpush1.msra.mxu0 0.0
    %1121 = vmatprep.subr.mxu0 0.0
    %1122 = vmatpush1.msra.mxu0 0.0
    %1123 = vmatprep.subr.mxu0 0.0
    %1124 = vmatpush1.msra.mxu0 0.0
    %1125 = vmatprep.subr.mxu0 0.0
    %1126 = vmatpush1.msra.mxu0 0.0
    %1127 = vmatprep.subr.mxu0 0.0
    %1128 = vmatpush1.msra.mxu0 0.0
    %1129 = vmatprep.subr.mxu0 0.0
    %1130 = vmatpush1.msra.mxu0 0.0
    %1131 = vmatprep.subr.mxu0 0.0
    %1132 = vmatpush1.msra.mxu0 0.0
    %1133 = vmatprep.subr.mxu0 0.0
    %1134 = vmatpush1.msra.mxu0 0.0
    %1135 = vmatprep.subr.mxu0 0.0
    %1136 = vmatpush1.msra.mxu0 0.0
    %1137 = vmatprep.subr.mxu0 0.0
    %1138 = vmatpush1.msra.mxu0 0.0
    %1139 = vmatprep.subr.mxu0 0.0
    %1140 = vmatpush1.msra.mxu0 0.0
    %1141 = vmatprep.subr.mxu0 0.0
    %1142 = vmatpush1.msra.mxu0 0.0
    %1143 = vmatprep.subr.mxu0 0.0
    %1144 = vmatpush1.msra.mxu0 0.0
    %1145 = vmatprep.subr.mxu0 0.0
    %1146 = vmatpush1.msra.mxu0 0.0
    %1147 = vmatprep.subr.mxu0 0.0
    %1148 = vmatpush1.msra.mxu0 0.0
    %1149 = vmatprep.subr.mxu0 0.0
    %1150 = vmatpush1.msra.mxu0 0.0
    %1151 = vmatprep.subr.mxu0 0.0
    %1152 = vmatpush1.msra.mxu0 0.0
    %1153 = vmatprep.subr.mxu0 0.0
    %1154 = vmatpush1.msra.mxu0 0.0
    %1155 = vmatprep.subr.mxu0 0.0
    %1156 = vmatpush1.msra.mxu0 0.0
    %1157 = vmatprep.subr.mxu0 0.0
    %1158 = vmatpush1.msra.mxu0 0.0
    %1159 = vmatprep.subr.mxu0 0.0
    %1160 = vmatpush1.msra.mxu0 0.0
    %1161 = vmatprep.subr.mxu0 0.0
    %1162 = vmatpush1.msra.mxu0 0.0
    %1163 = vmatprep.subr.mxu0 0.0
    %1164 = vmatpush1.msra.mxu0 0.0
    %1165 = vmatprep.subr.mxu0 0.0
    %1166 = vmatpush1.msra.mxu0 0.0
    %1167 = vmatprep.subr.mxu0 0.0
    %1168 = vmatpush1.msra.mxu0 0.0
    %1169 = vmatprep.subr.mxu0 0.0
    %1170 = vmatpush1.msra.mxu0 0.0
    %1171 = vmatprep.mubr.f32.mxu0 0.0
    %1172 = vmatmul.mubr.f32.gmra.mrb[0].mxu0 %v1105
    %v1173 = vpop.f32.mrb[0].mxu0
    %v1174 = vadd.f32 %v974, %v1173
    %v1175 = vpop.f32.mrb[0].mxu0
    %1176 = vdwg.mxu0
    %v1178 = vsel %vm385, %v990, 0
    %1180 = vmatprep.subr.mxu0 0.0
    %1181 = vmatpush1.msra.mxu0 %v965
    %1182 = vmatprep.subr.mxu0 0.0
    %1183 = vmatpush1.msra.mxu0 %v966
    %1184 = vmatprep.subr.mxu0 0.0
    %1185 = vmatpush1.msra.mxu0 %v967
    %1186 = vmatprep.subr.mxu0 0.0
    %1187 = vmatpush1.msra.mxu0 %v968
    %1188 = vmatprep.subr.mxu0 0.0
    %1189 = vmatpush1.msra.mxu0 0.0
    %1190 = vmatprep.subr.mxu0 0.0
    %1191 = vmatpush1.msra.mxu0 0.0
    %1192 = vmatprep.subr.mxu0 0.0
    %1193 = vmatpush1.msra.mxu0 0.0
    %1194 = vmatprep.subr.mxu0 0.0
    %1195 = vmatpush1.msra.mxu0 0.0
    %1196 = vmatprep.subr.mxu0 0.0
    %1197 = vmatpush1.msra.mxu0 0.0
    %1198 = vmatprep.subr.mxu0 0.0
    %1199 = vmatpush1.msra.mxu0 0.0
    %1200 = vmatprep.subr.mxu0 0.0
    %1201 = vmatpush1.msra.mxu0 0.0
    %1202 = vmatprep.subr.mxu0 0.0
    %1203 = vmatpush1.msra.mxu0 0.0
    %1204 = vmatprep.subr.mxu0 0.0
    %1205 = vmatpush1.msra.mxu0 0.0
    %1206 = vmatprep.subr.mxu0 0.0
    %1207 = vmatpush1.msra.mxu0 0.0
    %1208 = vmatprep.subr.mxu0 0.0
    %1209 = vmatpush1.msra.mxu0 0.0
    %1210 = vmatprep.subr.mxu0 0.0
    %1211 = vmatpush1.msra.mxu0 0.0
    %1212 = vmatprep.subr.mxu0 0.0
    %1213 = vmatpush1.msra.mxu0 0.0
    %1214 = vmatprep.subr.mxu0 0.0
    %1215 = vmatpush1.msra.mxu0 0.0
    %1216 = vmatprep.subr.mxu0 0.0
    %1217 = vmatpush1.msra.mxu0 0.0
    %1218 = vmatprep.subr.mxu0 0.0
    %1219 = vmatpush1.msra.mxu0 0.0
    %1220 = vmatprep.subr.mxu0 0.0
    %1221 = vmatpush1.msra.mxu0 0.0
    %1222 = vmatprep.subr.mxu0 0.0
    %1223 = vmatpush1.msra.mxu0 0.0
    %1224 = vmatprep.subr.mxu0 0.0
    %1225 = vmatpush1.msra.mxu0 0.0
    %1226 = vmatprep.subr.mxu0 0.0
    %1227 = vmatpush1.msra.mxu0 0.0
    %1228 = vmatprep.subr.mxu0 0.0
    %1229 = vmatpush1.msra.mxu0 0.0
    %1230 = vmatprep.subr.mxu0 0.0
    %1231 = vmatpush1.msra.mxu0 0.0
    %1232 = vmatprep.subr.mxu0 0.0
    %1233 = vmatpush1.msra.mxu0 0.0
    %1234 = vmatprep.subr.mxu0 0.0
    %1235 = vmatpush1.msra.mxu0 0.0
    %1236 = vmatprep.subr.mxu0 0.0
    %1237 = vmatpush1.msra.mxu0 0.0
    %1238 = vmatprep.subr.mxu0 0.0
    %1239 = vmatpush1.msra.mxu0 0.0
    %1240 = vmatprep.subr.mxu0 0.0
    %1241 = vmatpush1.msra.mxu0 0.0
    %1242 = vmatprep.subr.mxu0 0.0
    %1243 = vmatpush1.msra.mxu0 0.0
    %1244 = vmatprep.mubr.f32.mxu0 0.0
    %1245 = vmatmul.mubr.f32.gmra.mrb[0].mxu0 %v1178
    %v1246 = vpop.f32.mrb[0].mxu0
    %v1247 = vadd.f32 0.0, %v1246
    %v1248 = vpop.f32.mrb[0].mxu0
    %1249 = vdwg.mxu0
    %v1250 = vadd.f32 %v1174, %v1247
    %v1251 = vxor.u32 %v1250, 2147483648
    %v1252 = vmul.f32 %v1251, 1.442695
    %v1253 = vpow.pop %v1252
    %v1254 = vadd.f32 %v1253, 1.0
    %v1255 = vrcp.pop %v1254
    %v1256 = vmul.f32 1.0, %v1255
    %1257 = vrot.lane.b32.xlu0 %v987, 64
    %v1258 = vpop.permute.xlu0 %1257
    %v1260 = vadd.f32 %v1247, %v1258
    %1262 = vrot.lane.b32.xlu0 %v1260, 64
    %v1263 = vpop.permute.xlu0 %1262
    %v1265 = vmul.f32 %v1256, %v1263
    %1267 = vrot.lane.b32.xlu0 %v1265, 64
    %v1268 = vpop.permute.xlu0 %1267
    %v1270 = vadd.f32 %v1174, %v1268
    %v1271 = vtanh.pop %v1270
    %v1272 = vsub.f32 1.0, %v1256
    %1274 = vrot.lane.b32.xlu0 %v1271, 96
    %v1275 = vpop.permute.xlu0 %1274
    %v1277 = vmul.f32 %v1272, %v1275
    %1278 = vrot.lane.b32.xlu0 %v990, 32
    %v1279 = vpop.permute.xlu0 %1278
    %v1281 = vmul.f32 %v1256, %v1279
    %v1282 = vadd.f32 %v1277, %v1281
    %1284 = vrot.lane.b32.xlu0 %v1282, 96
    %v1285 = vpop.permute.xlu0 %1284
    %v1287 = vadd.f32 %v1103, %v1285
    %1288 = vst.msk [vmem:[#allocation2] sm:$0xff] %vm385, %v1287
    %s1289 = scalar_lea.vmem [#allocation3], 8
    %v1290 = vld [vmem:[%s1289] sm:$0xff]
    %v1291 = vsel %vm385, %v1101, 0
    %1293 = vmatprep.subr.mxu0 0.0
    %1294 = vmatpush1.msra.mxu0 %v957
    %1295 = vmatprep.subr.mxu0 0.0
    %1296 = vmatpush1.msra.mxu0 %v958
    %1297 = vmatprep.subr.mxu0 0.0
    %1298 = vmatpush1.msra.mxu0 %v959
    %1299 = vmatprep.subr.mxu0 0.0
    %1300 = vmatpush1.msra.mxu0 %v960
    %1301 = vmatprep.subr.mxu0 0.0
    %1302 = vmatpush1.msra.mxu0 0.0
    %1303 = vmatprep.subr.mxu0 0.0
    %1304 = vmatpush1.msra.mxu0 0.0
    %1305 = vmatprep.subr.mxu0 0.0
    %1306 = vmatpush1.msra.mxu0 0.0
    %1307 = vmatprep.subr.mxu0 0.0
    %1308 = vmatpush1.msra.mxu0 0.0
    %1309 = vmatprep.subr.mxu0 0.0
    %1310 = vmatpush1.msra.mxu0 0.0
    %1311 = vmatprep.subr.mxu0 0.0
    %1312 = vmatpush1.msra.mxu0 0.0
    %1313 = vmatprep.subr.mxu0 0.0
    %1314 = vmatpush1.msra.mxu0 0.0
    %1315 = vmatprep.subr.mxu0 0.0
    %1316 = vmatpush1.msra.mxu0 0.0
    %1317 = vmatprep.subr.mxu0 0.0
    %1318 = vmatpush1.msra.mxu0 0.0
    %1319 = vmatprep.subr.mxu0 0.0
    %1320 = vmatpush1.msra.mxu0 0.0
    %1321 = vmatprep.subr.mxu0 0.0
    %1322 = vmatpush1.msra.mxu0 0.0
    %1323 = vmatprep.subr.mxu0 0.0
    %1324 = vmatpush1.msra.mxu0 0.0
    %1325 = vmatprep.subr.mxu0 0.0
    %1326 = vmatpush1.msra.mxu0 0.0
    %1327 = vmatprep.subr.mxu0 0.0
    %1328 = vmatpush1.msra.mxu0 0.0
    %1329 = vmatprep.subr.mxu0 0.0
    %1330 = vmatpush1.msra.mxu0 0.0
    %1331 = vmatprep.subr.mxu0 0.0
    %1332 = vmatpush1.msra.mxu0 0.0
    %1333 = vmatprep.subr.mxu0 0.0
    %1334 = vmatpush1.msra.mxu0 0.0
    %1335 = vmatprep.subr.mxu0 0.0
    %1336 = vmatpush1.msra.mxu0 0.0
    %1337 = vmatprep.subr.mxu0 0.0
    %1338 = vmatpush1.msra.mxu0 0.0
    %1339 = vmatprep.subr.mxu0 0.0
    %1340 = vmatpush1.msra.mxu0 0.0
    %1341 = vmatprep.subr.mxu0 0.0
    %1342 = vmatpush1.msra.mxu0 0.0
    %1343 = vmatprep.subr.mxu0 0.0
    %1344 = vmatpush1.msra.mxu0 0.0
    %1345 = vmatprep.subr.mxu0 0.0
    %1346 = vmatpush1.msra.mxu0 0.0
    %1347 = vmatprep.subr.mxu0 0.0
    %1348 = vmatpush1.msra.mxu0 0.0
    %1349 = vmatprep.subr.mxu0 0.0
    %1350 = vmatpush1.msra.mxu0 0.0
    %1351 = vmatprep.subr.mxu0 0.0
    %1352 = vmatpush1.msra.mxu0 0.0
    %1353 = vmatprep.subr.mxu0 0.0
    %1354 = vmatpush1.msra.mxu0 0.0
    %1355 = vmatprep.subr.mxu0 0.0
    %1356 = vmatpush1.msra.mxu0 0.0
    %1357 = vmatprep.mubr.f32.mxu0 0.0
    %1358 = vmatmul.mubr.f32.gmra.mrb[0].mxu0 %v1291
    %v1359 = vpop.f32.mrb[0].mxu0
    %v1360 = vadd.f32 0.0, %v1359
    %v1361 = vpop.f32.mrb[0].mxu0
    %1362 = vdwg.mxu0
    %v1363 = vadd.f32 %v1290, %v1360
    %v1364 = vxor.u32 %v1363, 2147483648
    %v1365 = vmul.f32 %v1364, 1.442695
    %v1366 = vpow.pop %v1365
    %v1367 = vadd.f32 %v1366, 1.0
    %v1368 = vrcp.pop %v1367
    %v1369 = vmul.f32 1.0, %v1368
    %v1370 = vadd.f32 %v1360, %v1073
    %1372 = vrot.lane.b32.xlu0 %v1370, 64
    %v1373 = vpop.permute.xlu0 %1372
    %v1375 = vmul.f32 %v1369, %v1373
    %1377 = vrot.lane.b32.xlu0 %v1375, 64
    %v1378 = vpop.permute.xlu0 %1377
    %v1380 = vadd.f32 %v1290, %v1378
    %v1381 = vtanh.pop %v1380
    %v1382 = vsub.f32 1.0, %v1369
    %1384 = vrot.lane.b32.xlu0 %v1381, 96
    %v1385 = vpop.permute.xlu0 %1384
    %v1387 = vmul.f32 %v1382, %v1385
    %v1388 = vmul.f32 %v1369, %v1097
    %v1389 = vadd.f32 %v1387, %v1388
    %s1390 = scalar_lea.vmem [#allocation2], 8
    %v1391 = vld [vmem:[%s1390] sm:$0xff]
    %1393 = vrot.lane.b32.xlu0 %v1389, 96
    %v1394 = vpop.permute.xlu0 %1393
    %v1396 = vadd.f32 %v1391, %v1394
    %v1398 = vsel %vm385, %v1396, 0
    %1400 = vmatprep.subr.mxu0 0.0
    %1401 = vmatpush1.msra.mxu0 %v961
    %1402 = vmatprep.subr.mxu0 0.0
    %1403 = vmatpush1.msra.mxu0 %v962
    %1404 = vmatprep.subr.mxu0 0.0
    %1405 = vmatpush1.msra.mxu0 %v963
    %1406 = vmatprep.subr.mxu0 0.0
    %1407 = vmatpush1.msra.mxu0 %v964
    %1408 = vmatprep.subr.mxu0 0.0
    %1409 = vmatpush1.msra.mxu0 0.0
    %1410 = vmatprep.subr.mxu0 0.0
    %1411 = vmatpush1.msra.mxu0 0.0
    %1412 = vmatprep.subr.mxu0 0.0
    %1413 = vmatpush1.msra.mxu0 0.0
    %1414 = vmatprep.subr.mxu0 0.0
    %1415 = vmatpush1.msra.mxu0 0.0
    %1416 = vmatprep.subr.mxu0 0.0
    %1417 = vmatpush1.msra.mxu0 0.0
    %1418 = vmatprep.subr.mxu0 0.0
    %1419 = vmatpush1.msra.mxu0 0.0
    %1420 = vmatprep.subr.mxu0 0.0
    %1421 = vmatpush1.msra.mxu0 0.0
    %1422 = vmatprep.subr.mxu0 0.0
    %1423 = vmatpush1.msra.mxu0 0.0
    %1424 = vmatprep.subr.mxu0 0.0
    %1425 = vmatpush1.msra.mxu0 0.0
    %1426 = vmatprep.subr.mxu0 0.0
    %1427 = vmatpush1.msra.mxu0 0.0
    %1428 = vmatprep.subr.mxu0 0.0
    %1429 = vmatpush1.msra.mxu0 0.0
    %1430 = vmatprep.subr.mxu0 0.0
    %1431 = vmatpush1.msra.mxu0 0.0
    %1432 = vmatprep.subr.mxu0 0.0
    %1433 = vmatpush1.msra.mxu0 0.0
    %1434 = vmatprep.subr.mxu0 0.0
    %1435 = vmatpush1.msra.mxu0 0.0
    %1436 = vmatprep.subr.mxu0 0.0
    %1437 = vmatpush1.msra.mxu0 0.0
    %1438 = vmatprep.subr.mxu0 0.0
    %1439 = vmatpush1.msra.mxu0 0.0
    %1440 = vmatprep.subr.mxu0 0.0
    %1441 = vmatpush1.msra.mxu0 0.0
    %1442 = vmatprep.subr.mxu0 0.0
    %1443 = vmatpush1.msra.mxu0 0.0
    %1444 = vmatprep.subr.mxu0 0.0
    %1445 = vmatpush1.msra.mxu0 0.0
    %1446 = vmatprep.subr.mxu0 0.0
    %1447 = vmatpush1.msra.mxu0 0.0
    %1448 = vmatprep.subr.mxu0 0.0
    %1449 = vmatpush1.msra.mxu0 0.0
    %1450 = vmatprep.subr.mxu0 0.0
    %1451 = vmatpush1.msra.mxu0 0.0
    %1452 = vmatprep.subr.mxu0 0.0
    %1453 = vmatpush1.msra.mxu0 0.0
    %1454 = vmatprep.subr.mxu0 0.0
    %1455 = vmatpush1.msra.mxu0 0.0
    %1456 = vmatprep.subr.mxu0 0.0
    %1457 = vmatpush1.msra.mxu0 0.0
    %1458 = vmatprep.subr.mxu0 0.0
    %1459 = vmatpush1.msra.mxu0 0.0
    %1460 = vmatprep.subr.mxu0 0.0
    %1461 = vmatpush1.msra.mxu0 0.0
    %1462 = vmatprep.subr.mxu0 0.0
    %1463 = vmatpush1.msra.mxu0 0.0
    %1464 = vmatprep.mubr.f32.mxu0 0.0
    %1465 = vmatmul.mubr.f32.gmra.mrb[0].mxu0 %v1398
    %v1466 = vpop.f32.mrb[0].mxu0
    %v1467 = vadd.f32 %v974, %v1466
    %v1468 = vpop.f32.mrb[0].mxu0
    %1469 = vdwg.mxu0
    %v1470 = vsel %vm385, %v1285, 0
    %1472 = vmatprep.subr.mxu0 0.0
    %1473 = vmatpush1.msra.mxu0 %v965
    %1474 = vmatprep.subr.mxu0 0.0
    %1475 = vmatpush1.msra.mxu0 %v966
    %1476 = vmatprep.subr.mxu0 0.0
    %1477 = vmatpush1.msra.mxu0 %v967
    %1478 = vmatprep.subr.mxu0 0.0
    %1479 = vmatpush1.msra.mxu0 %v968
    %1480 = vmatprep.subr.mxu0 0.0
    %1481 = vmatpush1.msra.mxu0 0.0
    %1482 = vmatprep.subr.mxu0 0.0
    %1483 = vmatpush1.msra.mxu0 0.0
    %1484 = vmatprep.subr.mxu0 0.0
    %1485 = vmatpush1.msra.mxu0 0.0
    %1486 = vmatprep.subr.mxu0 0.0
    %1487 = vmatpush1.msra.mxu0 0.0
    %1488 = vmatprep.subr.mxu0 0.0
    %1489 = vmatpush1.msra.mxu0 0.0
    %1490 = vmatprep.subr.mxu0 0.0
    %1491 = vmatpush1.msra.mxu0 0.0
    %1492 = vmatprep.subr.mxu0 0.0
    %1493 = vmatpush1.msra.mxu0 0.0
    %1494 = vmatprep.subr.mxu0 0.0
    %1495 = vmatpush1.msra.mxu0 0.0
    %1496 = vmatprep.subr.mxu0 0.0
    %1497 = vmatpush1.msra.mxu0 0.0
    %1498 = vmatprep.subr.mxu0 0.0
    %1499 = vmatpush1.msra.mxu0 0.0
    %1500 = vmatprep.subr.mxu0 0.0
    %1501 = vmatpush1.msra.mxu0 0.0
    %1502 = vmatprep.subr.mxu0 0.0
    %1503 = vmatpush1.msra.mxu0 0.0
    %1504 = vmatprep.subr.mxu0 0.0
    %1505 = vmatpush1.msra.mxu0 0.0
    %1506 = vmatprep.subr.mxu0 0.0
    %1507 = vmatpush1.msra.mxu0 0.0
    %1508 = vmatprep.subr.mxu0 0.0
    %1509 = vmatpush1.msra.mxu0 0.0
    %1510 = vmatprep.subr.mxu0 0.0
    %1511 = vmatpush1.msra.mxu0 0.0
    %1512 = vmatprep.subr.mxu0 0.0
    %1513 = vmatpush1.msra.mxu0 0.0
    %1514 = vmatprep.subr.mxu0 0.0
    %1515 = vmatpush1.msra.mxu0 0.0
    %1516 = vmatprep.subr.mxu0 0.0
    %1517 = vmatpush1.msra.mxu0 0.0
    %1518 = vmatprep.subr.mxu0 0.0
    %1519 = vmatpush1.msra.mxu0 0.0
    %1520 = vmatprep.subr.mxu0 0.0
    %1521 = vmatpush1.msra.mxu0 0.0
    %1522 = vmatprep.subr.mxu0 0.0
    %1523 = vmatpush1.msra.mxu0 0.0
    %1524 = vmatprep.subr.mxu0 0.0
    %1525 = vmatpush1.msra.mxu0 0.0
    %1526 = vmatprep.subr.mxu0 0.0
    %1527 = vmatpush1.msra.mxu0 0.0
    %1528 = vmatprep.subr.mxu0 0.0
    %1529 = vmatpush1.msra.mxu0 0.0
    %1530 = vmatprep.subr.mxu0 0.0
    %1531 = vmatpush1.msra.mxu0 0.0
    %1532 = vmatprep.subr.mxu0 0.0
    %1533 = vmatpush1.msra.mxu0 0.0
    %1534 = vmatprep.subr.mxu0 0.0
    %1535 = vmatpush1.msra.mxu0 0.0
    %1536 = vmatprep.mubr.f32.mxu0 0.0
    %1537 = vmatmul.mubr.f32.gmra.mrb[0].mxu0 %v1470
    %v1538 = vpop.f32.mrb[0].mxu0
    %v1539 = vadd.f32 0.0, %v1538
    %v1540 = vpop.f32.mrb[0].mxu0
    %1541 = vdwg.mxu0
    %v1542 = vadd.f32 %v1467, %v1539
    %v1543 = vxor.u32 %v1542, 2147483648
    %v1544 = vmul.f32 %v1543, 1.442695
    %v1545 = vpow.pop %v1544
    %v1546 = vadd.f32 %v1545, 1.0
    %v1547 = vrcp.pop %v1546
    %v1548 = vmul.f32 1.0, %v1547
    %v1549 = vadd.f32 %v1539, %v1258
    %1551 = vrot.lane.b32.xlu0 %v1549, 64
    %v1552 = vpop.permute.xlu0 %1551
    %v1554 = vmul.f32 %v1548, %v1552
    %1556 = vrot.lane.b32.xlu0 %v1554, 64
    %v1557 = vpop.permute.xlu0 %1556
    %v1559 = vadd.f32 %v1467, %v1557
    %v1560 = vtanh.pop %v1559
    %v1561 = vsub.f32 1.0, %v1548
    %1563 = vrot.lane.b32.xlu0 %v1560, 96
    %v1564 = vpop.permute.xlu0 %1563
    %v1566 = vmul.f32 %v1561, %v1564
    %v1567 = vmul.f32 %v1548, %v1282
    %v1568 = vadd.f32 %v1566, %v1567
    %1570 = vrot.lane.b32.xlu0 %v1568, 96
    %v1571 = vpop.permute.xlu0 %1570
    %v1573 = vadd.f32 %v1396, %v1571
    %1574 = vst.msk [vmem:[%s1390] sm:$0xff] %vm385, %v1573
    %s1575 = scalar_lea.vmem [#allocation3], 16
    %v1576 = vld [vmem:[%s1575] sm:$0xff]
    %v1577 = vsel %vm385, %v1394, 0
    %1579 = vmatprep.subr.mxu0 0.0
    %1580 = vmatpush1.msra.mxu0 %v957
    %1581 = vmatprep.subr.mxu0 0.0
    %1582 = vmatpush1.msra.mxu0 %v958
    %1583 = vmatprep.subr.mxu0 0.0
    %1584 = vmatpush1.msra.mxu0 %v959
    %1585 = vmatprep.subr.mxu0 0.0
    %1586 = vmatpush1.msra.mxu0 %v960
    %1587 = vmatprep.subr.mxu0 0.0
    %1588 = vmatpush1.msra.mxu0 0.0
    %1589 = vmatprep.subr.mxu0 0.0
    %1590 = vmatpush1.msra.mxu0 0.0
    %1591 = vmatprep.subr.mxu0 0.0
    %1592 = vmatpush1.msra.mxu0 0.0
    %1593 = vmatprep.subr.mxu0 0.0
    %1594 = vmatpush1.msra.mxu0 0.0
    %1595 = vmatprep.subr.mxu0 0.0
    %1596 = vmatpush1.msra.mxu0 0.0
    %1597 = vmatprep.subr.mxu0 0.0
    %1598 = vmatpush1.msra.mxu0 0.0
    %1599 = vmatprep.subr.mxu0 0.0
    %1600 = vmatpush1.msra.mxu0 0.0
    %1601 = vmatprep.subr.mxu0 0.0
    %1602 = vmatpush1.msra.mxu0 0.0
    %1603 = vmatprep.subr.mxu0 0.0
    %1604 = vmatpush1.msra.mxu0 0.0
    %1605 = vmatprep.subr.mxu0 0.0
    %1606 = vmatpush1.msra.mxu0 0.0
    %1607 = vmatprep.subr.mxu0 0.0
    %1608 = vmatpush1.msra.mxu0 0.0
    %1609 = vmatprep.subr.mxu0 0.0
    %1610 = vmatpush1.msra.mxu0 0.0
    %1611 = vmatprep.subr.mxu0 0.0
    %1612 = vmatpush1.msra.mxu0 0.0
    %1613 = vmatprep.subr.mxu0 0.0
    %1614 = vmatpush1.msra.mxu0 0.0
    %1615 = vmatprep.subr.mxu0 0.0
    %1616 = vmatpush1.msra.mxu0 0.0
    %1617 = vmatprep.subr.mxu0 0.0
    %1618 = vmatpush1.msra.mxu0 0.0
    %1619 = vmatprep.subr.mxu0 0.0
    %1620 = vmatpush1.msra.mxu0 0.0
    %1621 = vmatprep.subr.mxu0 0.0
    %1622 = vmatpush1.msra.mxu0 0.0
    %1623 = vmatprep.subr.mxu0 0.0
    %1624 = vmatpush1.msra.mxu0 0.0
    %1625 = vmatprep.subr.mxu0 0.0
    %1626 = vmatpush1.msra.mxu0 0.0
    %1627 = vmatprep.subr.mxu0 0.0
    %1628 = vmatpush1.msra.mxu0 0.0
    %1629 = vmatprep.subr.mxu0 0.0
    %1630 = vmatpush1.msra.mxu0 0.0
    %1631 = vmatprep.subr.mxu0 0.0
    %1632 = vmatpush1.msra.mxu0 0.0
    %1633 = vmatprep.subr.mxu0 0.0
    %1634 = vmatpush1.msra.mxu0 0.0
    %1635 = vmatprep.subr.mxu0 0.0
    %1636 = vmatpush1.msra.mxu0 0.0
    %1637 = vmatprep.subr.mxu0 0.0
    %1638 = vmatpush1.msra.mxu0 0.0
    %1639 = vmatprep.subr.mxu0 0.0
    %1640 = vmatpush1.msra.mxu0 0.0
    %1641 = vmatprep.subr.mxu0 0.0
    %1642 = vmatpush1.msra.mxu0 0.0
    %1643 = vmatprep.mubr.f32.mxu0 0.0
    %1644 = vmatmul.mubr.f32.gmra.mrb[0].mxu0 %v1577
    %v1645 = vpop.f32.mrb[0].mxu0
    %v1646 = vadd.f32 0.0, %v1645
    %v1647 = vpop.f32.mrb[0].mxu0
    %1648 = vdwg.mxu0
    %v1649 = vadd.f32 %v1576, %v1646
    %v1650 = vxor.u32 %v1649, 2147483648
    %v1651 = vmul.f32 %v1650, 1.442695
    %v1652 = vpow.pop %v1651
    %v1653 = vadd.f32 %v1652, 1.0
    %v1654 = vrcp.pop %v1653
    %v1655 = vmul.f32 1.0, %v1654
    %v1656 = vadd.f32 %v1646, %v1073
    %1658 = vrot.lane.b32.xlu0 %v1656, 64
    %v1659 = vpop.permute.xlu0 %1658
    %v1661 = vmul.f32 %v1655, %v1659
    %1663 = vrot.lane.b32.xlu0 %v1661, 64
    %v1664 = vpop.permute.xlu0 %1663
    %v1666 = vadd.f32 %v1576, %v1664
    %v1667 = vtanh.pop %v1666
    %v1668 = vsub.f32 1.0, %v1655
    %1670 = vrot.lane.b32.xlu0 %v1667, 96
    %v1671 = vpop.permute.xlu0 %1670
    %v1673 = vmul.f32 %v1668, %v1671
    %v1674 = vmul.f32 %v1655, %v1389
    %v1675 = vadd.f32 %v1673, %v1674
    %s1676 = scalar_lea.vmem [#allocation2], 16
    %v1677 = vld [vmem:[%s1676] sm:$0xff]
    %1679 = vrot.lane.b32.xlu0 %v1675, 96
    %v1680 = vpop.permute.xlu0 %1679
    %v1682 = vadd.f32 %v1677, %v1680
    %v1684 = vsel %vm385, %v1682, 0
    %1686 = vmatprep.subr.mxu0 0.0
    %1687 = vmatpush1.msra.mxu0 %v961
    %1688 = vmatprep.subr.mxu0 0.0
    %1689 = vmatpush1.msra.mxu0 %v962
    %1690 = vmatprep.subr.mxu0 0.0
    %1691 = vmatpush1.msra.mxu0 %v963
    %1692 = vmatprep.subr.mxu0 0.0
    %1693 = vmatpush1.msra.mxu0 %v964
    %1694 = vmatprep.subr.mxu0 0.0
    %1695 = vmatpush1.msra.mxu0 0.0
    %1696 = vmatprep.subr.mxu0 0.0
    %1697 = vmatpush1.msra.mxu0 0.0
    %1698 = vmatprep.subr.mxu0 0.0
    %1699 = vmatpush1.msra.mxu0 0.0
    %1700 = vmatprep.subr.mxu0 0.0
    %1701 = vmatpush1.msra.mxu0 0.0
    %1702 = vmatprep.subr.mxu0 0.0
    %1703 = vmatpush1.msra.mxu0 0.0
    %1704 = vmatprep.subr.mxu0 0.0
    %1705 = vmatpush1.msra.mxu0 0.0
    %1706 = vmatprep.subr.mxu0 0.0
    %1707 = vmatpush1.msra.mxu0 0.0
    %1708 = vmatprep.subr.mxu0 0.0
    %1709 = vmatpush1.msra.mxu0 0.0
    %1710 = vmatprep.subr.mxu0 0.0
    %1711 = vmatpush1.msra.mxu0 0.0
    %1712 = vmatprep.subr.mxu0 0.0
    %1713 = vmatpush1.msra.mxu0 0.0
    %1714 = vmatprep.subr.mxu0 0.0
    %1715 = vmatpush1.msra.mxu0 0.0
    %1716 = vmatprep.subr.mxu0 0.0
    %1717 = vmatpush1.msra.mxu0 0.0
    %1718 = vmatprep.subr.mxu0 0.0
    %1719 = vmatpush1.msra.mxu0 0.0
    %1720 = vmatprep.subr.mxu0 0.0
    %1721 = vmatpush1.msra.mxu0 0.0
    %1722 = vmatprep.subr.mxu0 0.0
    %1723 = vmatpush1.msra.mxu0 0.0
    %1724 = vmatprep.subr.mxu0 0.0
    %1725 = vmatpush1.msra.mxu0 0.0
    %1726 = vmatprep.subr.mxu0 0.0
    %1727 = vmatpush1.msra.mxu0 0.0
    %1728 = vmatprep.subr.mxu0 0.0
    %1729 = vmatpush1.msra.mxu0 0.0
    %1730 = vmatprep.subr.mxu0 0.0
    %1731 = vmatpush1.msra.mxu0 0.0
    %1732 = vmatprep.subr.mxu0 0.0
    %1733 = vmatpush1.msra.mxu0 0.0
    %1734 = vmatprep.subr.mxu0 0.0
    %1735 = vmatpush1.msra.mxu0 0.0
    %1736 = vmatprep.subr.mxu0 0.0
    %1737 = vmatpush1.msra.mxu0 0.0
    %1738 = vmatprep.subr.mxu0 0.0
    %1739 = vmatpush1.msra.mxu0 0.0
    %1740 = vmatprep.subr.mxu0 0.0
    %1741 = vmatpush1.msra.mxu0 0.0
    %1742 = vmatprep.subr.mxu0 0.0
    %1743 = vmatpush1.msra.mxu0 0.0
    %1744 = vmatprep.subr.mxu0 0.0
    %1745 = vmatpush1.msra.mxu0 0.0
    %1746 = vmatprep.subr.mxu0 0.0
    %1747 = vmatpush1.msra.mxu0 0.0
    %1748 = vmatprep.subr.mxu0 0.0
    %1749 = vmatpush1.msra.mxu0 0.0
    %1750 = vmatprep.mubr.f32.mxu0 0.0
    %1751 = vmatmul.mubr.f32.gmra.mrb[0].mxu0 %v1684
    %v1752 = vpop.f32.mrb[0].mxu0
    %v1753 = vadd.f32 %v974, %v1752
    %v1754 = vpop.f32.mrb[0].mxu0
    %1755 = vdwg.mxu0
    %v1756 = vsel %vm385, %v1571, 0
    %1758 = vmatprep.subr.mxu0 0.0
    %1759 = vmatpush1.msra.mxu0 %v965
    %1760 = vmatprep.subr.mxu0 0.0
    %1761 = vmatpush1.msra.mxu0 %v966
    %1762 = vmatprep.subr.mxu0 0.0
    %1763 = vmatpush1.msra.mxu0 %v967
    %1764 = vmatprep.subr.mxu0 0.0
    %1765 = vmatpush1.msra.mxu0 %v968
    %1766 = vmatprep.subr.mxu0 0.0
    %1767 = vmatpush1.msra.mxu0 0.0
    %1768 = vmatprep.subr.mxu0 0.0
    %1769 = vmatpush1.msra.mxu0 0.0
    %1770 = vmatprep.subr.mxu0 0.0
    %1771 = vmatpush1.msra.mxu0 0.0
    %1772 = vmatprep.subr.mxu0 0.0
    %1773 = vmatpush1.msra.mxu0 0.0
    %1774 = vmatprep.subr.mxu0 0.0
    %1775 = vmatpush1.msra.mxu0 0.0
    %1776 = vmatprep.subr.mxu0 0.0
    %1777 = vmatpush1.msra.mxu0 0.0
    %1778 = vmatprep.subr.mxu0 0.0
    %1779 = vmatpush1.msra.mxu0 0.0
    %1780 = vmatprep.subr.mxu0 0.0
    %1781 = vmatpush1.msra.mxu0 0.0
    %1782 = vmatprep.subr.mxu0 0.0
    %1783 = vmatpush1.msra.mxu0 0.0
    %1784 = vmatprep.subr.mxu0 0.0
    %1785 = vmatpush1.msra.mxu0 0.0
    %1786 = vmatprep.subr.mxu0 0.0
    %1787 = vmatpush1.msra.mxu0 0.0
    %1788 = vmatprep.subr.mxu0 0.0
    %1789 = vmatpush1.msra.mxu0 0.0
    %1790 = vmatprep.subr.mxu0 0.0
    %1791 = vmatpush1.msra.mxu0 0.0
    %1792 = vmatprep.subr.mxu0 0.0
    %1793 = vmatpush1.msra.mxu0 0.0
    %1794 = vmatprep.subr.mxu0 0.0
    %1795 = vmatpush1.msra.mxu0 0.0
    %1796 = vmatprep.subr.mxu0 0.0
    %1797 = vmatpush1.msra.mxu0 0.0
    %1798 = vmatprep.subr.mxu0 0.0
    %1799 = vmatpush1.msra.mxu0 0.0
    %1800 = vmatprep.subr.mxu0 0.0
    %1801 = vmatpush1.msra.mxu0 0.0
    %1802 = vmatprep.subr.mxu0 0.0
    %1803 = vmatpush1.msra.mxu0 0.0
    %1804 = vmatprep.subr.mxu0 0.0
    %1805 = vmatpush1.msra.mxu0 0.0
    %1806 = vmatprep.subr.mxu0 0.0
    %1807 = vmatpush1.msra.mxu0 0.0
    %1808 = vmatprep.subr.mxu0 0.0
    %1809 = vmatpush1.msra.mxu0 0.0
    %1810 = vmatprep.subr.mxu0 0.0
    %1811 = vmatpush1.msra.mxu0 0.0
    %1812 = vmatprep.subr.mxu0 0.0
    %1813 = vmatpush1.msra.mxu0 0.0
    %1814 = vmatprep.subr.mxu0 0.0
    %1815 = vmatpush1.msra.mxu0 0.0
    %1816 = vmatprep.subr.mxu0 0.0
    %1817 = vmatpush1.msra.mxu0 0.0
    %1818 = vmatprep.subr.mxu0 0.0
    %1819 = vmatpush1.msra.mxu0 0.0
    %1820 = vmatprep.subr.mxu0 0.0
    %1821 = vmatpush1.msra.mxu0 0.0
    %1822 = vmatprep.mubr.f32.mxu0 0.0
    %1823 = vmatmul.mubr.f32.gmra.mrb[0].mxu0 %v1756
    %v1824 = vpop.f32.mrb[0].mxu0
    %v1825 = vadd.f32 0.0, %v1824
    %v1826 = vpop.f32.mrb[0].mxu0
    %1827 = vdwg.mxu0
    %v1828 = vadd.f32 %v1753, %v1825
    %v1829 = vxor.u32 %v1828, 2147483648
    %v1830 = vmul.f32 %v1829, 1.442695
    %v1831 = vpow.pop %v1830
    %v1832 = vadd.f32 %v1831, 1.0
    %v1833 = vrcp.pop %v1832
    %v1834 = vmul.f32 1.0, %v1833
    %v1835 = vadd.f32 %v1825, %v1258
    %1837 = vrot.lane.b32.xlu0 %v1835, 64
    %v1838 = vpop.permute.xlu0 %1837
    %v1840 = vmul.f32 %v1834, %v1838
    %1842 = vrot.lane.b32.xlu0 %v1840, 64
    %v1843 = vpop.permute.xlu0 %1842
    %v1845 = vadd.f32 %v1753, %v1843
    %v1846 = vtanh.pop %v1845
    %v1847 = vsub.f32 1.0, %v1834
    %1849 = vrot.lane.b32.xlu0 %v1846, 96
    %v1850 = vpop.permute.xlu0 %1849
    %v1852 = vmul.f32 %v1847, %v1850
    %v1853 = vmul.f32 %v1834, %v1568
    %v1854 = vadd.f32 %v1852, %v1853
    %1856 = vrot.lane.b32.xlu0 %v1854, 96
    %v1857 = vpop.permute.xlu0 %1856
    %v1859 = vadd.f32 %v1682, %v1857
    %1860 = vst.msk [vmem:[%s1676] sm:$0xff] %vm385, %v1859
    %s1861 = scalar_lea.vmem [#allocation3], 24
    %v1862 = vld [vmem:[%s1861] sm:$0xff]
    %v1863 = vsel %vm385, %v1680, 0
    %1865 = vmatprep.subr.mxu0 0.0
    %1866 = vmatpush1.msra.mxu0 %v957
    %1867 = vmatprep.subr.mxu0 0.0
    %1868 = vmatpush1.msra.mxu0 %v958
    %1869 = vmatprep.subr.mxu0 0.0
    %1870 = vmatpush1.msra.mxu0 %v959
    %1871 = vmatprep.subr.mxu0 0.0
    %1872 = vmatpush1.msra.mxu0 %v960
    %1873 = vmatprep.subr.mxu0 0.0
    %1874 = vmatpush1.msra.mxu0 0.0
    %1875 = vmatprep.subr.mxu0 0.0
    %1876 = vmatpush1.msra.mxu0 0.0
    %1877 = vmatprep.subr.mxu0 0.0
    %1878 = vmatpush1.msra.mxu0 0.0
    %1879 = vmatprep.subr.mxu0 0.0
    %1880 = vmatpush1.msra.mxu0 0.0
    %1881 = vmatprep.subr.mxu0 0.0
    %1882 = vmatpush1.msra.mxu0 0.0
    %1883 = vmatprep.subr.mxu0 0.0
    %1884 = vmatpush1.msra.mxu0 0.0
    %1885 = vmatprep.subr.mxu0 0.0
    %1886 = vmatpush1.msra.mxu0 0.0
    %1887 = vmatprep.subr.mxu0 0.0
    %1888 = vmatpush1.msra.mxu0 0.0
    %1889 = vmatprep.subr.mxu0 0.0
    %1890 = vmatpush1.msra.mxu0 0.0
    %1891 = vmatprep.subr.mxu0 0.0
    %1892 = vmatpush1.msra.mxu0 0.0
    %1893 = vmatprep.subr.mxu0 0.0
    %1894 = vmatpush1.msra.mxu0 0.0
    %1895 = vmatprep.subr.mxu0 0.0
    %1896 = vmatpush1.msra.mxu0 0.0
    %1897 = vmatprep.subr.mxu0 0.0
    %1898 = vmatpush1.msra.mxu0 0.0
    %1899 = vmatprep.subr.mxu0 0.0
    %1900 = vmatpush1.msra.mxu0 0.0
    %1901 = vmatprep.subr.mxu0 0.0
    %1902 = vmatpush1.msra.mxu0 0.0
    %1903 = vmatprep.subr.mxu0 0.0
    %1904 = vmatpush1.msra.mxu0 0.0
    %1905 = vmatprep.subr.mxu0 0.0
    %1906 = vmatpush1.msra.mxu0 0.0
    %1907 = vmatprep.subr.mxu0 0.0
    %1908 = vmatpush1.msra.mxu0 0.0
    %1909 = vmatprep.subr.mxu0 0.0
    %1910 = vmatpush1.msra.mxu0 0.0
    %1911 = vmatprep.subr.mxu0 0.0
    %1912 = vmatpush1.msra.mxu0 0.0
    %1913 = vmatprep.subr.mxu0 0.0
    %1914 = vmatpush1.msra.mxu0 0.0
    %1915 = vmatprep.subr.mxu0 0.0
    %1916 = vmatpush1.msra.mxu0 0.0
    %1917 = vmatprep.subr.mxu0 0.0
    %1918 = vmatpush1.msra.mxu0 0.0
    %1919 = vmatprep.subr.mxu0 0.0
    %1920 = vmatpush1.msra.mxu0 0.0
    %1921 = vmatprep.subr.mxu0 0.0
    %1922 = vmatpush1.msra.mxu0 0.0
    %1923 = vmatprep.subr.mxu0 0.0
    %1924 = vmatpush1.msra.mxu0 0.0
    %1925 = vmatprep.subr.mxu0 0.0
    %1926 = vmatpush1.msra.mxu0 0.0
    %1927 = vmatprep.subr.mxu0 0.0
    %1928 = vmatpush1.msra.mxu0 0.0
    %1929 = vmatprep.mubr.f32.mxu0 0.0
    %1930 = vmatmul.mubr.f32.gmra.mrb[0].mxu0 %v1863
    %v1931 = vpop.f32.mrb[0].mxu0
    %v1932 = vadd.f32 0.0, %v1931
    %v1933 = vpop.f32.mrb[0].mxu0
    %1934 = vdwg.mxu0
    %v1935 = vadd.f32 %v1862, %v1932
    %v1936 = vxor.u32 %v1935, 2147483648
    %v1937 = vmul.f32 %v1936, 1.442695
    %v1938 = vpow.pop %v1937
    %v1939 = vadd.f32 %v1938, 1.0
    %v1940 = vrcp.pop %v1939
    %v1941 = vmul.f32 1.0, %v1940
    %v1942 = vadd.f32 %v1932, %v1073
    %1944 = vrot.lane.b32.xlu0 %v1942, 64
    %v1945 = vpop.permute.xlu0 %1944
    %v1947 = vmul.f32 %v1941, %v1945
    %1949 = vrot.lane.b32.xlu0 %v1947, 64
    %v1950 = vpop.permute.xlu0 %1949
    %v1952 = vadd.f32 %v1862, %v1950
    %v1953 = vtanh.pop %v1952
    %v1954 = vsub.f32 1.0, %v1941
    %1956 = vrot.lane.b32.xlu0 %v1953, 96
    %v1957 = vpop.permute.xlu0 %1956
    %v1959 = vmul.f32 %v1954, %v1957
    %v1960 = vmul.f32 %v1941, %v1675
    %v1961 = vadd.f32 %v1959, %v1960
    %s1962 = scalar_lea.vmem [#allocation2], 24
    %v1963 = vld [vmem:[%s1962] sm:$0xff]
    %1965 = vrot.lane.b32.xlu0 %v1961, 96
    %v1966 = vpop.permute.xlu0 %1965
    %v1968 = vadd.f32 %v1963, %v1966
    %v1970 = vsel %vm385, %v1968, 0
    %1972 = vmatprep.subr.mxu0 0.0
    %1973 = vmatpush1.msra.mxu0 %v961
    %1974 = vmatprep.subr.mxu0 0.0
    %1975 = vmatpush1.msra.mxu0 %v962
    %1976 = vmatprep.subr.mxu0 0.0
    %1977 = vmatpush1.msra.mxu0 %v963
    %1978 = vmatprep.subr.mxu0 0.0
    %1979 = vmatpush1.msra.mxu0 %v964
    %1980 = vmatprep.subr.mxu0 0.0
    %1981 = vmatpush1.msra.mxu0 0.0
    %1982 = vmatprep.subr.mxu0 0.0
    %1983 = vmatpush1.msra.mxu0 0.0
    %1984 = vmatprep.subr.mxu0 0.0
    %1985 = vmatpush1.msra.mxu0 0.0
    %1986 = vmatprep.subr.mxu0 0.0
    %1987 = vmatpush1.msra.mxu0 0.0
    %1988 = vmatprep.subr.mxu0 0.0
    %1989 = vmatpush1.msra.mxu0 0.0
    %1990 = vmatprep.subr.mxu0 0.0
    %1991 = vmatpush1.msra.mxu0 0.0
    %1992 = vmatprep.subr.mxu0 0.0
    %1993 = vmatpush1.msra.mxu0 0.0
    %1994 = vmatprep.subr.mxu0 0.0
    %1995 = vmatpush1.msra.mxu0 0.0
    %1996 = vmatprep.subr.mxu0 0.0
    %1997 = vmatpush1.msra.mxu0 0.0
    %1998 = vmatprep.subr.mxu0 0.0
    %1999 = vmatpush1.msra.mxu0 0.0
    %2000 = vmatprep.subr.mxu0 0.0
    %2001 = vmatpush1.msra.mxu0 0.0
    %2002 = vmatprep.subr.mxu0 0.0
    %2003 = vmatpush1.msra.mxu0 0.0
    %2004 = vmatprep.subr.mxu0 0.0
    %2005 = vmatpush1.msra.mxu0 0.0
    %2006 = vmatprep.subr.mxu0 0.0
    %2007 = vmatpush1.msra.mxu0 0.0
    %2008 = vmatprep.subr.mxu0 0.0
    %2009 = vmatpush1.msra.mxu0 0.0
    %2010 = vmatprep.subr.mxu0 0.0
    %2011 = vmatpush1.msra.mxu0 0.0
    %2012 = vmatprep.subr.mxu0 0.0
    %2013 = vmatpush1.msra.mxu0 0.0
    %2014 = vmatprep.subr.mxu0 0.0
    %2015 = vmatpush1.msra.mxu0 0.0
    %2016 = vmatprep.subr.mxu0 0.0
    %2017 = vmatpush1.msra.mxu0 0.0
    %2018 = vmatprep.subr.mxu0 0.0
    %2019 = vmatpush1.msra.mxu0 0.0
    %2020 = vmatprep.subr.mxu0 0.0
    %2021 = vmatpush1.msra.mxu0 0.0
    %2022 = vmatprep.subr.mxu0 0.0
    %2023 = vmatpush1.msra.mxu0 0.0
    %2024 = vmatprep.subr.mxu0 0.0
    %2025 = vmatpush1.msra.mxu0 0.0
    %2026 = vmatprep.subr.mxu0 0.0
    %2027 = vmatpush1.msra.mxu0 0.0
    %2028 = vmatprep.subr.mxu0 0.0
    %2029 = vmatpush1.msra.mxu0 0.0
    %2030 = vmatprep.subr.mxu0 0.0
    %2031 = vmatpush1.msra.mxu0 0.0
    %2032 = vmatprep.subr.mxu0 0.0
    %2033 = vmatpush1.msra.mxu0 0.0
    %2034 = vmatprep.subr.mxu0 0.0
    %2035 = vmatpush1.msra.mxu0 0.0
    %2036 = vmatprep.mubr.f32.mxu0 0.0
    %2037 = vmatmul.mubr.f32.gmra.mrb[0].mxu0 %v1970
    %v2038 = vpop.f32.mrb[0].mxu0
    %v2039 = vadd.f32 %v974, %v2038
    %v2040 = vpop.f32.mrb[0].mxu0
    %2041 = vdwg.mxu0
    %v2042 = vsel %vm385, %v1857, 0
    %2044 = vmatprep.subr.mxu0 0.0
    %2045 = vmatpush1.msra.mxu0 %v965
    %2046 = vmatprep.subr.mxu0 0.0
    %2047 = vmatpush1.msra.mxu0 %v966
    %2048 = vmatprep.subr.mxu0 0.0
    %2049 = vmatpush1.msra.mxu0 %v967
    %2050 = vmatprep.subr.mxu0 0.0
    %2051 = vmatpush1.msra.mxu0 %v968
    %2052 = vmatprep.subr.mxu0 0.0
    %2053 = vmatpush1.msra.mxu0 0.0
    %2054 = vmatprep.subr.mxu0 0.0
    %2055 = vmatpush1.msra.mxu0 0.0
    %2056 = vmatprep.subr.mxu0 0.0
    %2057 = vmatpush1.msra.mxu0 0.0
    %2058 = vmatprep.subr.mxu0 0.0
    %2059 = vmatpush1.msra.mxu0 0.0
    %2060 = vmatprep.subr.mxu0 0.0
    %2061 = vmatpush1.msra.mxu0 0.0
    %2062 = vmatprep.subr.mxu0 0.0
    %2063 = vmatpush1.msra.mxu0 0.0
    %2064 = vmatprep.subr.mxu0 0.0
    %2065 = vmatpush1.msra.mxu0 0.0
    %2066 = vmatprep.subr.mxu0 0.0
    %2067 = vmatpush1.msra.mxu0 0.0
    %2068 = vmatprep.subr.mxu0 0.0
    %2069 = vmatpush1.msra.mxu0 0.0
    %2070 = vmatprep.subr.mxu0 0.0
    %2071 = vmatpush1.msra.mxu0 0.0
    %2072 = vmatprep.subr.mxu0 0.0
    %2073 = vmatpush1.msra.mxu0 0.0
    %2074 = vmatprep.subr.mxu0 0.0
    %2075 = vmatpush1.msra.mxu0 0.0
    %2076 = vmatprep.subr.mxu0 0.0
    %2077 = vmatpush1.msra.mxu0 0.0
    %2078 = vmatprep.subr.mxu0 0.0
    %2079 = vmatpush1.msra.mxu0 0.0
    %2080 = vmatprep.subr.mxu0 0.0
    %2081 = vmatpush1.msra.mxu0 0.0
    %2082 = vmatprep.subr.mxu0 0.0
    %2083 = vmatpush1.msra.mxu0 0.0
    %2084 = vmatprep.subr.mxu0 0.0
    %2085 = vmatpush1.msra.mxu0 0.0
    %2086 = vmatprep.subr.mxu0 0.0
    %2087 = vmatpush1.msra.mxu0 0.0
    %2088 = vmatprep.subr.mxu0 0.0
    %2089 = vmatpush1.msra.mxu0 0.0
    %2090 = vmatprep.subr.mxu0 0.0
    %2091 = vmatpush1.msra.mxu0 0.0
    %2092 = vmatprep.subr.mxu0 0.0
    %2093 = vmatpush1.msra.mxu0 0.0
    %2094 = vmatprep.subr.mxu0 0.0
    %2095 = vmatpush1.msra.mxu0 0.0
    %2096 = vmatprep.subr.mxu0 0.0
    %2097 = vmatpush1.msra.mxu0 0.0
    %2098 = vmatprep.subr.mxu0 0.0
    %2099 = vmatpush1.msra.mxu0 0.0
    %2100 = vmatprep.subr.mxu0 0.0
    %2101 = vmatpush1.msra.mxu0 0.0
    %2102 = vmatprep.subr.mxu0 0.0
    %2103 = vmatpush1.msra.mxu0 0.0
    %2104 = vmatprep.subr.mxu0 0.0
    %2105 = vmatpush1.msra.mxu0 0.0
    %2106 = vmatprep.subr.mxu0 0.0
    %2107 = vmatpush1.msra.mxu0 0.0
    %2108 = vmatprep.mubr.f32.mxu0 0.0
    %2109 = vmatmul.mubr.f32.gmra.mrb[0].mxu0 %v2042
    %v2110 = vpop.f32.mrb[0].mxu0
    %v2111 = vadd.f32 0.0, %v2110
    %v2112 = vpop.f32.mrb[0].mxu0
    %2113 = vdwg.mxu0
    %v2114 = vadd.f32 %v2039, %v2111
    %v2115 = vxor.u32 %v2114, 2147483648
    %v2116 = vmul.f32 %v2115, 1.442695
    %v2117 = vpow.pop %v2116
    %v2118 = vadd.f32 %v2117, 1.0
    %v2119 = vrcp.pop %v2118
    %v2120 = vmul.f32 1.0, %v2119
    %v2121 = vadd.f32 %v2111, %v1258
    %2123 = vrot.lane.b32.xlu0 %v2121, 64
    %v2124 = vpop.permute.xlu0 %2123
    %v2126 = vmul.f32 %v2120, %v2124
    %2128 = vrot.lane.b32.xlu0 %v2126, 64
    %v2129 = vpop.permute.xlu0 %2128
    %v2131 = vadd.f32 %v2039, %v2129
    %v2132 = vtanh.pop %v2131
    %v2133 = vsub.f32 1.0, %v2120
    %2135 = vrot.lane.b32.xlu0 %v2132, 96
    %v2136 = vpop.permute.xlu0 %2135
    %v2138 = vmul.f32 %v2133, %v2136
    %v2139 = vmul.f32 %v2120, %v1854
    %v2140 = vadd.f32 %v2138, %v2139
    %2142 = vrot.lane.b32.xlu0 %v2140, 96
    %v2143 = vpop.permute.xlu0 %2142
    %v2145 = vadd.f32 %v1968, %v2143
    %2146 = vst.msk [vmem:[%s1962] sm:$0xff] %vm385, %v2145
    %s2147 = scalar_lea.vmem [#allocation3], 32
    %v2148 = vld [vmem:[%s2147] sm:$0xff]
    %v2149 = vsel %vm385, %v1966, 0
    %2151 = vmatprep.subr.mxu0 0.0
    %2152 = vmatpush1.msra.mxu0 %v957
    %2153 = vmatprep.subr.mxu0 0.0
    %2154 = vmatpush1.msra.mxu0 %v958
    %2155 = vmatprep.subr.mxu0 0.0
    %2156 = vmatpush1.msra.mxu0 %v959
    %2157 = vmatprep.subr.mxu0 0.0
    %2158 = vmatpush1.msra.mxu0 %v960
    %2159 = vmatprep.subr.mxu0 0.0
    %2160 = vmatpush1.msra.mxu0 0.0
    %2161 = vmatprep.subr.mxu0 0.0
    %2162 = vmatpush1.msra.mxu0 0.0
    %2163 = vmatprep.subr.mxu0 0.0
    %2164 = vmatpush1.msra.mxu0 0.0
    %2165 = vmatprep.subr.mxu0 0.0
    %2166 = vmatpush1.msra.mxu0 0.0
    %2167 = vmatprep.subr.mxu0 0.0
    %2168 = vmatpush1.msra.mxu0 0.0
    %2169 = vmatprep.subr.mxu0 0.0
    %2170 = vmatpush1.msra.mxu0 0.0
    %2171 = vmatprep.subr.mxu0 0.0
    %2172 = vmatpush1.msra.mxu0 0.0
    %2173 = vmatprep.subr.mxu0 0.0
    %2174 = vmatpush1.msra.mxu0 0.0
    %2175 = vmatprep.subr.mxu0 0.0
    %2176 = vmatpush1.msra.mxu0 0.0
    %2177 = vmatprep.subr.mxu0 0.0
    %2178 = vmatpush1.msra.mxu0 0.0
    %2179 = vmatprep.subr.mxu0 0.0
    %2180 = vmatpush1.msra.mxu0 0.0
    %2181 = vmatprep.subr.mxu0 0.0
    %2182 = vmatpush1.msra.mxu0 0.0
    %2183 = vmatprep.subr.mxu0 0.0
    %2184 = vmatpush1.msra.mxu0 0.0
    %2185 = vmatprep.subr.mxu0 0.0
    %2186 = vmatpush1.msra.mxu0 0.0
    %2187 = vmatprep.subr.mxu0 0.0
    %2188 = vmatpush1.msra.mxu0 0.0
    %2189 = vmatprep.subr.mxu0 0.0
    %2190 = vmatpush1.msra.mxu0 0.0
    %2191 = vmatprep.subr.mxu0 0.0
    %2192 = vmatpush1.msra.mxu0 0.0
    %2193 = vmatprep.subr.mxu0 0.0
    %2194 = vmatpush1.msra.mxu0 0.0
    %2195 = vmatprep.subr.mxu0 0.0
    %2196 = vmatpush1.msra.mxu0 0.0
    %2197 = vmatprep.subr.mxu0 0.0
    %2198 = vmatpush1.msra.mxu0 0.0
    %2199 = vmatprep.subr.mxu0 0.0
    %2200 = vmatpush1.msra.mxu0 0.0
    %2201 = vmatprep.subr.mxu0 0.0
    %2202 = vmatpush1.msra.mxu0 0.0
    %2203 = vmatprep.subr.mxu0 0.0
    %2204 = vmatpush1.msra.mxu0 0.0
    %2205 = vmatprep.subr.mxu0 0.0
    %2206 = vmatpush1.msra.mxu0 0.0
    %2207 = vmatprep.subr.mxu0 0.0
    %2208 = vmatpush1.msra.mxu0 0.0
    %2209 = vmatprep.subr.mxu0 0.0
    %2210 = vmatpush1.msra.mxu0 0.0
    %2211 = vmatprep.subr.mxu0 0.0
    %2212 = vmatpush1.msra.mxu0 0.0
    %2213 = vmatprep.subr.mxu0 0.0
    %2214 = vmatpush1.msra.mxu0 0.0
    %2215 = vmatprep.mubr.f32.mxu0 0.0
    %2216 = vmatmul.mubr.f32.gmra.mrb[0].mxu0 %v2149
    %v2217 = vpop.f32.mrb[0].mxu0
    %v2218 = vadd.f32 0.0, %v2217
    %v2219 = vpop.f32.mrb[0].mxu0
    %2220 = vdwg.mxu0
    %v2221 = vadd.f32 %v2148, %v2218
    %v2222 = vxor.u32 %v2221, 2147483648
    %v2223 = vmul.f32 %v2222, 1.442695
    %v2224 = vpow.pop %v2223
    %v2225 = vadd.f32 %v2224, 1.0
    %v2226 = vrcp.pop %v2225
    %v2227 = vmul.f32 1.0, %v2226
    %v2228 = vadd.f32 %v2218, %v1073
    %2230 = vrot.lane.b32.xlu0 %v2228, 64
    %v2231 = vpop.permute.xlu0 %2230
    %v2233 = vmul.f32 %v2227, %v2231
    %2235 = vrot.lane.b32.xlu0 %v2233, 64
    %v2236 = vpop.permute.xlu0 %2235
    %v2238 = vadd.f32 %v2148, %v2236
    %v2239 = vtanh.pop %v2238
    %v2240 = vsub.f32 1.0, %v2227
    %2242 = vrot.lane.b32.xlu0 %v2239, 96
    %v2243 = vpop.permute.xlu0 %2242
    %v2245 = vmul.f32 %v2240, %v2243
    %v2246 = vmul.f32 %v2227, %v1961
    %v2247 = vadd.f32 %v2245, %v2246
    %s2248 = scalar_lea.vmem [#allocation2], 32
    %v2249 = vld [vmem:[%s2248] sm:$0xff]
    %2251 = vrot.lane.b32.xlu0 %v2247, 96
    %v2252 = vpop.permute.xlu0 %2251
    %v2254 = vadd.f32 %v2249, %v2252
    %v2256 = vsel %vm385, %v2254, 0
    %2258 = vmatprep.subr.mxu0 0.0
    %2259 = vmatpush1.msra.mxu0 %v961
    %2260 = vmatprep.subr.mxu0 0.0
    %2261 = vmatpush1.msra.mxu0 %v962
    %2262 = vmatprep.subr.mxu0 0.0
    %2263 = vmatpush1.msra.mxu0 %v963
    %2264 = vmatprep.subr.mxu0 0.0
    %2265 = vmatpush1.msra.mxu0 %v964
    %2266 = vmatprep.subr.mxu0 0.0
    %2267 = vmatpush1.msra.mxu0 0.0
    %2268 = vmatprep.subr.mxu0 0.0
    %2269 = vmatpush1.msra.mxu0 0.0
    %2270 = vmatprep.subr.mxu0 0.0
    %2271 = vmatpush1.msra.mxu0 0.0
    %2272 = vmatprep.subr.mxu0 0.0
    %2273 = vmatpush1.msra.mxu0 0.0
    %2274 = vmatprep.subr.mxu0 0.0
    %2275 = vmatpush1.msra.mxu0 0.0
    %2276 = vmatprep.subr.mxu0 0.0
    %2277 = vmatpush1.msra.mxu0 0.0
    %2278 = vmatprep.subr.mxu0 0.0
    %2279 = vmatpush1.msra.mxu0 0.0
    %2280 = vmatprep.subr.mxu0 0.0
    %2281 = vmatpush1.msra.mxu0 0.0
    %2282 = vmatprep.subr.mxu0 0.0
    %2283 = vmatpush1.msra.mxu0 0.0
    %2284 = vmatprep.subr.mxu0 0.0
    %2285 = vmatpush1.msra.mxu0 0.0
    %2286 = vmatprep.subr.mxu0 0.0
    %2287 = vmatpush1.msra.mxu0 0.0
    %2288 = vmatprep.subr.mxu0 0.0
    %2289 = vmatpush1.msra.mxu0 0.0
    %2290 = vmatprep.subr.mxu0 0.0
    %2291 = vmatpush1.msra.mxu0 0.0
    %2292 = vmatprep.subr.mxu0 0.0
    %2293 = vmatpush1.msra.mxu0 0.0
    %2294 = vmatprep.subr.mxu0 0.0
    %2295 = vmatpush1.msra.mxu0 0.0
    %2296 = vmatprep.subr.mxu0 0.0
    %2297 = vmatpush1.msra.mxu0 0.0
    %2298 = vmatprep.subr.mxu0 0.0
    %2299 = vmatpush1.msra.mxu0 0.0
    %2300 = vmatprep.subr.mxu0 0.0
    %2301 = vmatpush1.msra.mxu0 0.0
    %2302 = vmatprep.subr.mxu0 0.0
    %2303 = vmatpush1.msra.mxu0 0.0
    %2304 = vmatprep.subr.mxu0 0.0
    %2305 = vmatpush1.msra.mxu0 0.0
    %2306 = vmatprep.subr.mxu0 0.0
    %2307 = vmatpush1.msra.mxu0 0.0
    %2308 = vmatprep.subr.mxu0 0.0
    %2309 = vmatpush1.msra.mxu0 0.0
    %2310 = vmatprep.subr.mxu0 0.0
    %2311 = vmatpush1.msra.mxu0 0.0
    %2312 = vmatprep.subr.mxu0 0.0
    %2313 = vmatpush1.msra.mxu0 0.0
    %2314 = vmatprep.subr.mxu0 0.0
    %2315 = vmatpush1.msra.mxu0 0.0
    %2316 = vmatprep.subr.mxu0 0.0
    %2317 = vmatpush1.msra.mxu0 0.0
    %2318 = vmatprep.subr.mxu0 0.0
    %2319 = vmatpush1.msra.mxu0 0.0
    %2320 = vmatprep.subr.mxu0 0.0
    %2321 = vmatpush1.msra.mxu0 0.0
    %2322 = vmatprep.mubr.f32.mxu0 0.0
    %2323 = vmatmul.mubr.f32.gmra.mrb[0].mxu0 %v2256
    %v2324 = vpop.f32.mrb[0].mxu0
    %v2325 = vadd.f32 %v974, %v2324
    %v2326 = vpop.f32.mrb[0].mxu0
    %2327 = vdwg.mxu0
    %v2328 = vsel %vm385, %v2143, 0
    %2330 = vmatprep.subr.mxu0 0.0
    %2331 = vmatpush1.msra.mxu0 %v965
    %2332 = vmatprep.subr.mxu0 0.0
    %2333 = vmatpush1.msra.mxu0 %v966
    %2334 = vmatprep.subr.mxu0 0.0
    %2335 = vmatpush1.msra.mxu0 %v967
    %2336 = vmatprep.subr.mxu0 0.0
    %2337 = vmatpush1.msra.mxu0 %v968
    %2338 = vmatprep.subr.mxu0 0.0
    %2339 = vmatpush1.msra.mxu0 0.0
    %2340 = vmatprep.subr.mxu0 0.0
    %2341 = vmatpush1.msra.mxu0 0.0
    %2342 = vmatprep.subr.mxu0 0.0
    %2343 = vmatpush1.msra.mxu0 0.0
    %2344 = vmatprep.subr.mxu0 0.0
    %2345 = vmatpush1.msra.mxu0 0.0
    %2346 = vmatprep.subr.mxu0 0.0
    %2347 = vmatpush1.msra.mxu0 0.0
    %2348 = vmatprep.subr.mxu0 0.0
    %2349 = vmatpush1.msra.mxu0 0.0
    %2350 = vmatprep.subr.mxu0 0.0
    %2351 = vmatpush1.msra.mxu0 0.0
    %2352 = vmatprep.subr.mxu0 0.0
    %2353 = vmatpush1.msra.mxu0 0.0
    %2354 = vmatprep.subr.mxu0 0.0
    %2355 = vmatpush1.msra.mxu0 0.0
    %2356 = vmatprep.subr.mxu0 0.0
    %2357 = vmatpush1.msra.mxu0 0.0
    %2358 = vmatprep.subr.mxu0 0.0
    %2359 = vmatpush1.msra.mxu0 0.0
    %2360 = vmatprep.subr.mxu0 0.0
    %2361 = vmatpush1.msra.mxu0 0.0
    %2362 = vmatprep.subr.mxu0 0.0
    %2363 = vmatpush1.msra.mxu0 0.0
    %2364 = vmatprep.subr.mxu0 0.0
    %2365 = vmatpush1.msra.mxu0 0.0
    %2366 = vmatprep.subr.mxu0 0.0
    %2367 = vmatpush1.msra.mxu0 0.0
    %2368 = vmatprep.subr.mxu0 0.0
    %2369 = vmatpush1.msra.mxu0 0.0
    %2370 = vmatprep.subr.mxu0 0.0
    %2371 = vmatpush1.msra.mxu0 0.0
    %2372 = vmatprep.subr.mxu0 0.0
    %2373 = vmatpush1.msra.mxu0 0.0
    %2374 = vmatprep.subr.mxu0 0.0
    %2375 = vmatpush1.msra.mxu0 0.0
    %2376 = vmatprep.subr.mxu0 0.0
    %2377 = vmatpush1.msra.mxu0 0.0
    %2378 = vmatprep.subr.mxu0 0.0
    %2379 = vmatpush1.msra.mxu0 0.0
    %2380 = vmatprep.subr.mxu0 0.0
    %2381 = vmatpush1.msra.mxu0 0.0
    %2382 = vmatprep.subr.mxu0 0.0
    %2383 = vmatpush1.msra.mxu0 0.0
    %2384 = vmatprep.subr.mxu0 0.0
    %2385 = vmatpush1.msra.mxu0 0.0
    %2386 = vmatprep.subr.mxu0 0.0
    %2387 = vmatpush1.msra.mxu0 0.0
    %2388 = vmatprep.subr.mxu0 0.0
    %2389 = vmatpush1.msra.mxu0 0.0
    %2390 = vmatprep.subr.mxu0 0.0
    %2391 = vmatpush1.msra.mxu0 0.0
    %2392 = vmatprep.subr.mxu0 0.0
    %2393 = vmatpush1.msra.mxu0 0.0
    %2394 = vmatprep.mubr.f32.mxu0 0.0
    %2395 = vmatmul.mubr.f32.gmra.mrb[0].mxu0 %v2328
    %v2396 = vpop.f32.mrb[0].mxu0
    %v2397 = vadd.f32 0.0, %v2396
    %v2398 = vpop.f32.mrb[0].mxu0
    %2399 = vdwg.mxu0
    %v2400 = vadd.f32 %v2325, %v2397
    %v2401 = vxor.u32 %v2400, 2147483648
    %v2402 = vmul.f32 %v2401, 1.442695
    %v2403 = vpow.pop %v2402
    %v2404 = vadd.f32 %v2403, 1.0
    %v2405 = vrcp.pop %v2404
    %v2406 = vmul.f32 1.0, %v2405
    %v2407 = vadd.f32 %v2397, %v1258
    %2409 = vrot.lane.b32.xlu0 %v2407, 64
    %v2410 = vpop.permute.xlu0 %2409
    %v2412 = vmul.f32 %v2406, %v2410
    %2414 = vrot.lane.b32.xlu0 %v2412, 64
    %v2415 = vpop.permute.xlu0 %2414
    %v2417 = vadd.f32 %v2325, %v2415
    %v2418 = vtanh.pop %v2417
    %v2419 = vsub.f32 1.0, %v2406
    %2421 = vrot.lane.b32.xlu0 %v2418, 96
    %v2422 = vpop.permute.xlu0 %2421
    %v2424 = vmul.f32 %v2419, %v2422
    %v2425 = vmul.f32 %v2406, %v2140
    %v2426 = vadd.f32 %v2424, %v2425
    %2428 = vrot.lane.b32.xlu0 %v2426, 96
    %v2429 = vpop.permute.xlu0 %2428
    %v2431 = vadd.f32 %v2254, %v2429
    %2432 = vst.msk [vmem:[%s2248] sm:$0xff] %vm385, %v2431
    %s2433 = scalar_lea.vmem [#allocation3], 40
    %v2434 = vld [vmem:[%s2433] sm:$0xff]
    %v2435 = vsel %vm385, %v2252, 0
    %2437 = vmatprep.subr.mxu0 0.0
    %2438 = vmatpush1.msra.mxu0 %v957
    %2439 = vmatprep.subr.mxu0 0.0
    %2440 = vmatpush1.msra.mxu0 %v958
    %2441 = vmatprep.subr.mxu0 0.0
    %2442 = vmatpush1.msra.mxu0 %v959
    %2443 = vmatprep.subr.mxu0 0.0
    %2444 = vmatpush1.msra.mxu0 %v960
    %2445 = vmatprep.subr.mxu0 0.0
    %2446 = vmatpush1.msra.mxu0 0.0
    %2447 = vmatprep.subr.mxu0 0.0
    %2448 = vmatpush1.msra.mxu0 0.0
    %2449 = vmatprep.subr.mxu0 0.0
    %2450 = vmatpush1.msra.mxu0 0.0
    %2451 = vmatprep.subr.mxu0 0.0
    %2452 = vmatpush1.msra.mxu0 0.0
    %2453 = vmatprep.subr.mxu0 0.0
    %2454 = vmatpush1.msra.mxu0 0.0
    %2455 = vmatprep.subr.mxu0 0.0
    %2456 = vmatpush1.msra.mxu0 0.0
    %2457 = vmatprep.subr.mxu0 0.0
    %2458 = vmatpush1.msra.mxu0 0.0
    %2459 = vmatprep.subr.mxu0 0.0
    %2460 = vmatpush1.msra.mxu0 0.0
    %2461 = vmatprep.subr.mxu0 0.0
    %2462 = vmatpush1.msra.mxu0 0.0
    %2463 = vmatprep.subr.mxu0 0.0
    %2464 = vmatpush1.msra.mxu0 0.0
    %2465 = vmatprep.subr.mxu0 0.0
    %2466 = vmatpush1.msra.mxu0 0.0
    %2467 = vmatprep.subr.mxu0 0.0
    %2468 = vmatpush1.msra.mxu0 0.0
    %2469 = vmatprep.subr.mxu0 0.0
    %2470 = vmatpush1.msra.mxu0 0.0
    %2471 = vmatprep.subr.mxu0 0.0
    %2472 = vmatpush1.msra.mxu0 0.0
    %2473 = vmatprep.subr.mxu0 0.0
    %2474 = vmatpush1.msra.mxu0 0.0
    %2475 = vmatprep.subr.mxu0 0.0
    %2476 = vmatpush1.msra.mxu0 0.0
    %2477 = vmatprep.subr.mxu0 0.0
    %2478 = vmatpush1.msra.mxu0 0.0
    %2479 = vmatprep.subr.mxu0 0.0
    %2480 = vmatpush1.msra.mxu0 0.0
    %2481 = vmatprep.subr.mxu0 0.0
    %2482 = vmatpush1.msra.mxu0 0.0
    %2483 = vmatprep.subr.mxu0 0.0
    %2484 = vmatpush1.msra.mxu0 0.0
    %2485 = vmatprep.subr.mxu0 0.0
    %2486 = vmatpush1.msra.mxu0 0.0
    %2487 = vmatprep.subr.mxu0 0.0
    %2488 = vmatpush1.msra.mxu0 0.0
    %2489 = vmatprep.subr.mxu0 0.0
    %2490 = vmatpush1.msra.mxu0 0.0
    %2491 = vmatprep.subr.mxu0 0.0
    %2492 = vmatpush1.msra.mxu0 0.0
    %2493 = vmatprep.subr.mxu0 0.0
    %2494 = vmatpush1.msra.mxu0 0.0
    %2495 = vmatprep.subr.mxu0 0.0
    %2496 = vmatpush1.msra.mxu0 0.0
    %2497 = vmatprep.subr.mxu0 0.0
    %2498 = vmatpush1.msra.mxu0 0.0
    %2499 = vmatprep.subr.mxu0 0.0
    %2500 = vmatpush1.msra.mxu0 0.0
    %2501 = vmatprep.mubr.f32.mxu0 0.0
    %2502 = vmatmul.mubr.f32.gmra.mrb[0].mxu0 %v2435
    %v2503 = vpop.f32.mrb[0].mxu0
    %v2504 = vadd.f32 0.0, %v2503
    %v2505 = vpop.f32.mrb[0].mxu0
    %2506 = vdwg.mxu0
    %v2507 = vadd.f32 %v2434, %v2504
    %v2508 = vxor.u32 %v2507, 2147483648
    %v2509 = vmul.f32 %v2508, 1.442695
    %v2510 = vpow.pop %v2509
    %v2511 = vadd.f32 %v2510, 1.0
    %v2512 = vrcp.pop %v2511
    %v2513 = vmul.f32 1.0, %v2512
    %v2514 = vadd.f32 %v2504, %v1073
    %2516 = vrot.lane.b32.xlu0 %v2514, 64
    %v2517 = vpop.permute.xlu0 %2516
    %v2519 = vmul.f32 %v2513, %v2517
    %2521 = vrot.lane.b32.xlu0 %v2519, 64
    %v2522 = vpop.permute.xlu0 %2521
    %v2524 = vadd.f32 %v2434, %v2522
    %v2525 = vtanh.pop %v2524
    %v2526 = vsub.f32 1.0, %v2513
    %2528 = vrot.lane.b32.xlu0 %v2525, 96
    %v2529 = vpop.permute.xlu0 %2528
    %v2531 = vmul.f32 %v2526, %v2529
    %v2532 = vmul.f32 %v2513, %v2247
    %v2533 = vadd.f32 %v2531, %v2532
    %s2534 = scalar_lea.vmem [#allocation2], 40
    %v2535 = vld [vmem:[%s2534] sm:$0xff]
    %2537 = vrot.lane.b32.xlu0 %v2533, 96
    %v2538 = vpop.permute.xlu0 %2537
    %v2540 = vadd.f32 %v2535, %v2538
    %v2542 = vsel %vm385, %v2540, 0
    %2544 = vmatprep.subr.mxu0 0.0
    %2545 = vmatpush1.msra.mxu0 %v961
    %2546 = vmatprep.subr.mxu0 0.0
    %2547 = vmatpush1.msra.mxu0 %v962
    %2548 = vmatprep.subr.mxu0 0.0
    %2549 = vmatpush1.msra.mxu0 %v963
    %2550 = vmatprep.subr.mxu0 0.0
    %2551 = vmatpush1.msra.mxu0 %v964
    %2552 = vmatprep.subr.mxu0 0.0
    %2553 = vmatpush1.msra.mxu0 0.0
    %2554 = vmatprep.subr.mxu0 0.0
    %2555 = vmatpush1.msra.mxu0 0.0
    %2556 = vmatprep.subr.mxu0 0.0
    %2557 = vmatpush1.msra.mxu0 0.0
    %2558 = vmatprep.subr.mxu0 0.0
    %2559 = vmatpush1.msra.mxu0 0.0
    %2560 = vmatprep.subr.mxu0 0.0
    %2561 = vmatpush1.msra.mxu0 0.0
    %2562 = vmatprep.subr.mxu0 0.0
    %2563 = vmatpush1.msra.mxu0 0.0
    %2564 = vmatprep.subr.mxu0 0.0
    %2565 = vmatpush1.msra.mxu0 0.0
    %2566 = vmatprep.subr.mxu0 0.0
    %2567 = vmatpush1.msra.mxu0 0.0
    %2568 = vmatprep.subr.mxu0 0.0
    %2569 = vmatpush1.msra.mxu0 0.0
    %2570 = vmatprep.subr.mxu0 0.0
    %2571 = vmatpush1.msra.mxu0 0.0
    %2572 = vmatprep.subr.mxu0 0.0
    %2573 = vmatpush1.msra.mxu0 0.0
    %2574 = vmatprep.subr.mxu0 0.0
    %2575 = vmatpush1.msra.mxu0 0.0
    %2576 = vmatprep.subr.mxu0 0.0
    %2577 = vmatpush1.msra.mxu0 0.0
    %2578 = vmatprep.subr.mxu0 0.0
    %2579 = vmatpush1.msra.mxu0 0.0
    %2580 = vmatprep.subr.mxu0 0.0
    %2581 = vmatpush1.msra.mxu0 0.0
    %2582 = vmatprep.subr.mxu0 0.0
    %2583 = vmatpush1.msra.mxu0 0.0
    %2584 = vmatprep.subr.mxu0 0.0
    %2585 = vmatpush1.msra.mxu0 0.0
    %2586 = vmatprep.subr.mxu0 0.0
    %2587 = vmatpush1.msra.mxu0 0.0
    %2588 = vmatprep.subr.mxu0 0.0
    %2589 = vmatpush1.msra.mxu0 0.0
    %2590 = vmatprep.subr.mxu0 0.0
    %2591 = vmatpush1.msra.mxu0 0.0
    %2592 = vmatprep.subr.mxu0 0.0
    %2593 = vmatpush1.msra.mxu0 0.0
    %2594 = vmatprep.subr.mxu0 0.0
    %2595 = vmatpush1.msra.mxu0 0.0
    %2596 = vmatprep.subr.mxu0 0.0
    %2597 = vmatpush1.msra.mxu0 0.0
    %2598 = vmatprep.subr.mxu0 0.0
    %2599 = vmatpush1.msra.mxu0 0.0
    %2600 = vmatprep.subr.mxu0 0.0
    %2601 = vmatpush1.msra.mxu0 0.0
    %2602 = vmatprep.subr.mxu0 0.0
    %2603 = vmatpush1.msra.mxu0 0.0
    %2604 = vmatprep.subr.mxu0 0.0
    %2605 = vmatpush1.msra.mxu0 0.0
    %2606 = vmatprep.subr.mxu0 0.0
    %2607 = vmatpush1.msra.mxu0 0.0
    %2608 = vmatprep.mubr.f32.mxu0 0.0
    %2609 = vmatmul.mubr.f32.gmra.mrb[0].mxu0 %v2542
    %v2610 = vpop.f32.mrb[0].mxu0
    %v2611 = vadd.f32 %v974, %v2610
    %v2612 = vpop.f32.mrb[0].mxu0
    %2613 = vdwg.mxu0
    %v2614 = vsel %vm385, %v2429, 0
    %2616 = vmatprep.subr.mxu0 0.0
    %2617 = vmatpush1.msra.mxu0 %v965
    %2618 = vmatprep.subr.mxu0 0.0
    %2619 = vmatpush1.msra.mxu0 %v966
    %2620 = vmatprep.subr.mxu0 0.0
    %2621 = vmatpush1.msra.mxu0 %v967
    %2622 = vmatprep.subr.mxu0 0.0
    %2623 = vmatpush1.msra.mxu0 %v968
    %2624 = vmatprep.subr.mxu0 0.0
    %2625 = vmatpush1.msra.mxu0 0.0
    %2626 = vmatprep.subr.mxu0 0.0
    %2627 = vmatpush1.msra.mxu0 0.0
    %2628 = vmatprep.subr.mxu0 0.0
    %2629 = vmatpush1.msra.mxu0 0.0
    %2630 = vmatprep.subr.mxu0 0.0
    %2631 = vmatpush1.msra.mxu0 0.0
    %2632 = vmatprep.subr.mxu0 0.0
    %2633 = vmatpush1.msra.mxu0 0.0
    %2634 = vmatprep.subr.mxu0 0.0
    %2635 = vmatpush1.msra.mxu0 0.0
    %2636 = vmatprep.subr.mxu0 0.0
    %2637 = vmatpush1.msra.mxu0 0.0
    %2638 = vmatprep.subr.mxu0 0.0
    %2639 = vmatpush1.msra.mxu0 0.0
    %2640 = vmatprep.subr.mxu0 0.0
    %2641 = vmatpush1.msra.mxu0 0.0
    %2642 = vmatprep.subr.mxu0 0.0
    %2643 = vmatpush1.msra.mxu0 0.0
    %2644 = vmatprep.subr.mxu0 0.0
    %2645 = vmatpush1.msra.mxu0 0.0
    %2646 = vmatprep.subr.mxu0 0.0
    %2647 = vmatpush1.msra.mxu0 0.0
    %2648 = vmatprep.subr.mxu0 0.0
    %2649 = vmatpush1.msra.mxu0 0.0
    %2650 = vmatprep.subr.mxu0 0.0
    %2651 = vmatpush1.msra.mxu0 0.0
    %2652 = vmatprep.subr.mxu0 0.0
    %2653 = vmatpush1.msra.mxu0 0.0
    %2654 = vmatprep.subr.mxu0 0.0
    %2655 = vmatpush1.msra.mxu0 0.0
    %2656 = vmatprep.subr.mxu0 0.0
    %2657 = vmatpush1.msra.mxu0 0.0
    %2658 = vmatprep.subr.mxu0 0.0
    %2659 = vmatpush1.msra.mxu0 0.0
    %2660 = vmatprep.subr.mxu0 0.0
    %2661 = vmatpush1.msra.mxu0 0.0
    %2662 = vmatprep.subr.mxu0 0.0
    %2663 = vmatpush1.msra.mxu0 0.0
    %2664 = vmatprep.subr.mxu0 0.0
    %2665 = vmatpush1.msra.mxu0 0.0
    %2666 = vmatprep.subr.mxu0 0.0
    %2667 = vmatpush1.msra.mxu0 0.0
    %2668 = vmatprep.subr.mxu0 0.0
    %2669 = vmatpush1.msra.mxu0 0.0
    %2670 = vmatprep.subr.mxu0 0.0
    %2671 = vmatpush1.msra.mxu0 0.0
    %2672 = vmatprep.subr.mxu0 0.0
    %2673 = vmatpush1.msra.mxu0 0.0
    %2674 = vmatprep.subr.mxu0 0.0
    %2675 = vmatpush1.msra.mxu0 0.0
    %2676 = vmatprep.subr.mxu0 0.0
    %2677 = vmatpush1.msra.mxu0 0.0
    %2678 = vmatprep.subr.mxu0 0.0
    %2679 = vmatpush1.msra.mxu0 0.0
    %2680 = vmatprep.mubr.f32.mxu0 0.0
    %2681 = vmatmul.mubr.f32.gmra.mrb[0].mxu0 %v2614
    %v2682 = vpop.f32.mrb[0].mxu0
    %v2683 = vadd.f32 0.0, %v2682
    %v2684 = vpop.f32.mrb[0].mxu0
    %2685 = vdwg.mxu0
    %v2686 = vadd.f32 %v2611, %v2683
    %v2687 = vxor.u32 %v2686, 2147483648
    %v2688 = vmul.f32 %v2687, 1.442695
    %v2689 = vpow.pop %v2688
    %v2690 = vadd.f32 %v2689, 1.0
    %v2691 = vrcp.pop %v2690
    %v2692 = vmul.f32 1.0, %v2691
    %v2693 = vadd.f32 %v2683, %v1258
    %2695 = vrot.lane.b32.xlu0 %v2693, 64
    %v2696 = vpop.permute.xlu0 %2695
    %v2698 = vmul.f32 %v2692, %v2696
    %2700 = vrot.lane.b32.xlu0 %v2698, 64
    %v2701 = vpop.permute.xlu0 %2700
    %v2703 = vadd.f32 %v2611, %v2701
    %v2704 = vtanh.pop %v2703
    %v2705 = vsub.f32 1.0, %v2692
    %2707 = vrot.lane.b32.xlu0 %v2704, 96
    %v2708 = vpop.permute.xlu0 %2707
    %v2710 = vmul.f32 %v2705, %v2708
    %v2711 = vmul.f32 %v2692, %v2426
    %v2712 = vadd.f32 %v2710, %v2711
    %2714 = vrot.lane.b32.xlu0 %v2712, 96
    %v2715 = vpop.permute.xlu0 %2714
    %v2717 = vadd.f32 %v2540, %v2715
    %2718 = vst.msk [vmem:[%s2534] sm:$0xff] %vm385, %v2717
    %s2719 = scalar_lea.vmem [#allocation3], 48
    %v2720 = vld [vmem:[%s2719] sm:$0xff]
    %v2721 = vsel %vm385, %v2538, 0
    %2723 = vmatprep.subr.mxu0 0.0
    %2724 = vmatpush1.msra.mxu0 %v957
    %2725 = vmatprep.subr.mxu0 0.0
    %2726 = vmatpush1.msra.mxu0 %v958
    %2727 = vmatprep.subr.mxu0 0.0
    %2728 = vmatpush1.msra.mxu0 %v959
    %2729 = vmatprep.subr.mxu0 0.0
    %2730 = vmatpush1.msra.mxu0 %v960
    %2731 = vmatprep.subr.mxu0 0.0
    %2732 = vmatpush1.msra.mxu0 0.0
    %2733 = vmatprep.subr.mxu0 0.0
    %2734 = vmatpush1.msra.mxu0 0.0
    %2735 = vmatprep.subr.mxu0 0.0
    %2736 = vmatpush1.msra.mxu0 0.0
    %2737 = vmatprep.subr.mxu0 0.0
    %2738 = vmatpush1.msra.mxu0 0.0
    %2739 = vmatprep.subr.mxu0 0.0
    %2740 = vmatpush1.msra.mxu0 0.0
    %2741 = vmatprep.subr.mxu0 0.0
    %2742 = vmatpush1.msra.mxu0 0.0
    %2743 = vmatprep.subr.mxu0 0.0
    %2744 = vmatpush1.msra.mxu0 0.0
    %2745 = vmatprep.subr.mxu0 0.0
    %2746 = vmatpush1.msra.mxu0 0.0
    %2747 = vmatprep.subr.mxu0 0.0
    %2748 = vmatpush1.msra.mxu0 0.0
    %2749 = vmatprep.subr.mxu0 0.0
    %2750 = vmatpush1.msra.mxu0 0.0
    %2751 = vmatprep.subr.mxu0 0.0
    %2752 = vmatpush1.msra.mxu0 0.0
    %2753 = vmatprep.subr.mxu0 0.0
    %2754 = vmatpush1.msra.mxu0 0.0
    %2755 = vmatprep.subr.mxu0 0.0
    %2756 = vmatpush1.msra.mxu0 0.0
    %2757 = vmatprep.subr.mxu0 0.0
    %2758 = vmatpush1.msra.mxu0 0.0
    %2759 = vmatprep.subr.mxu0 0.0
    %2760 = vmatpush1.msra.mxu0 0.0
    %2761 = vmatprep.subr.mxu0 0.0
    %2762 = vmatpush1.msra.mxu0 0.0
    %2763 = vmatprep.subr.mxu0 0.0
    %2764 = vmatpush1.msra.mxu0 0.0
    %2765 = vmatprep.subr.mxu0 0.0
    %2766 = vmatpush1.msra.mxu0 0.0
    %2767 = vmatprep.subr.mxu0 0.0
    %2768 = vmatpush1.msra.mxu0 0.0
    %2769 = vmatprep.subr.mxu0 0.0
    %2770 = vmatpush1.msra.mxu0 0.0
    %2771 = vmatprep.subr.mxu0 0.0
    %2772 = vmatpush1.msra.mxu0 0.0
    %2773 = vmatprep.subr.mxu0 0.0
    %2774 = vmatpush1.msra.mxu0 0.0
    %2775 = vmatprep.subr.mxu0 0.0
    %2776 = vmatpush1.msra.mxu0 0.0
    %2777 = vmatprep.subr.mxu0 0.0
    %2778 = vmatpush1.msra.mxu0 0.0
    %2779 = vmatprep.subr.mxu0 0.0
    %2780 = vmatpush1.msra.mxu0 0.0
    %2781 = vmatprep.subr.mxu0 0.0
    %2782 = vmatpush1.msra.mxu0 0.0
    %2783 = vmatprep.subr.mxu0 0.0
    %2784 = vmatpush1.msra.mxu0 0.0
    %2785 = vmatprep.subr.mxu0 0.0
    %2786 = vmatpush1.msra.mxu0 0.0
    %2787 = vmatprep.mubr.f32.mxu0 0.0
    %2788 = vmatmul.mubr.f32.gmra.mrb[0].mxu0 %v2721
    %v2789 = vpop.f32.mrb[0].mxu0
    %v2790 = vadd.f32 0.0, %v2789
    %v2791 = vpop.f32.mrb[0].mxu0
    %2792 = vdwg.mxu0
    %v2793 = vadd.f32 %v2720, %v2790
    %v2794 = vxor.u32 %v2793, 2147483648
    %v2795 = vmul.f32 %v2794, 1.442695
    %v2796 = vpow.pop %v2795
    %v2797 = vadd.f32 %v2796, 1.0
    %v2798 = vrcp.pop %v2797
    %v2799 = vmul.f32 1.0, %v2798
    %v2800 = vadd.f32 %v2790, %v1073
    %2802 = vrot.lane.b32.xlu0 %v2800, 64
    %v2803 = vpop.permute.xlu0 %2802
    %v2805 = vmul.f32 %v2799, %v2803
    %2807 = vrot.lane.b32.xlu0 %v2805, 64
    %v2808 = vpop.permute.xlu0 %2807
    %v2810 = vadd.f32 %v2720, %v2808
    %v2811 = vtanh.pop %v2810
    %v2812 = vsub.f32 1.0, %v2799
    %2814 = vrot.lane.b32.xlu0 %v2811, 96
    %v2815 = vpop.permute.xlu0 %2814
    %v2817 = vmul.f32 %v2812, %v2815
    %v2818 = vmul.f32 %v2799, %v2533
    %v2819 = vadd.f32 %v2817, %v2818
    %s2820 = scalar_lea.vmem [#allocation2], 48
    %v2821 = vld [vmem:[%s2820] sm:$0xff]
    %2823 = vrot.lane.b32.xlu0 %v2819, 96
    %v2824 = vpop.permute.xlu0 %2823
    %v2826 = vadd.f32 %v2821, %v2824
    %v2828 = vsel %vm385, %v2826, 0
    %2830 = vmatprep.subr.mxu0 0.0
    %2831 = vmatpush1.msra.mxu0 %v961
    %2832 = vmatprep.subr.mxu0 0.0
    %2833 = vmatpush1.msra.mxu0 %v962
    %2834 = vmatprep.subr.mxu0 0.0
    %2835 = vmatpush1.msra.mxu0 %v963
    %2836 = vmatprep.subr.mxu0 0.0
    %2837 = vmatpush1.msra.mxu0 %v964
    %2838 = vmatprep.subr.mxu0 0.0
    %2839 = vmatpush1.msra.mxu0 0.0
    %2840 = vmatprep.subr.mxu0 0.0
    %2841 = vmatpush1.msra.mxu0 0.0
    %2842 = vmatprep.subr.mxu0 0.0
    %2843 = vmatpush1.msra.mxu0 0.0
    %2844 = vmatprep.subr.mxu0 0.0
    %2845 = vmatpush1.msra.mxu0 0.0
    %2846 = vmatprep.subr.mxu0 0.0
    %2847 = vmatpush1.msra.mxu0 0.0
    %2848 = vmatprep.subr.mxu0 0.0
    %2849 = vmatpush1.msra.mxu0 0.0
    %2850 = vmatprep.subr.mxu0 0.0
    %2851 = vmatpush1.msra.mxu0 0.0
    %2852 = vmatprep.subr.mxu0 0.0
    %2853 = vmatpush1.msra.mxu0 0.0
    %2854 = vmatprep.subr.mxu0 0.0
    %2855 = vmatpush1.msra.mxu0 0.0
    %2856 = vmatprep.subr.mxu0 0.0
    %2857 = vmatpush1.msra.mxu0 0.0
    %2858 = vmatprep.subr.mxu0 0.0
    %2859 = vmatpush1.msra.mxu0 0.0
    %2860 = vmatprep.subr.mxu0 0.0
    %2861 = vmatpush1.msra.mxu0 0.0
    %2862 = vmatprep.subr.mxu0 0.0
    %2863 = vmatpush1.msra.mxu0 0.0
    %2864 = vmatprep.subr.mxu0 0.0
    %2865 = vmatpush1.msra.mxu0 0.0
    %2866 = vmatprep.subr.mxu0 0.0
    %2867 = vmatpush1.msra.mxu0 0.0
    %2868 = vmatprep.subr.mxu0 0.0
    %2869 = vmatpush1.msra.mxu0 0.0
    %2870 = vmatprep.subr.mxu0 0.0
    %2871 = vmatpush1.msra.mxu0 0.0
    %2872 = vmatprep.subr.mxu0 0.0
    %2873 = vmatpush1.msra.mxu0 0.0
    %2874 = vmatprep.subr.mxu0 0.0
    %2875 = vmatpush1.msra.mxu0 0.0
    %2876 = vmatprep.subr.mxu0 0.0
    %2877 = vmatpush1.msra.mxu0 0.0
    %2878 = vmatprep.subr.mxu0 0.0
    %2879 = vmatpush1.msra.mxu0 0.0
    %2880 = vmatprep.subr.mxu0 0.0
    %2881 = vmatpush1.msra.mxu0 0.0
    %2882 = vmatprep.subr.mxu0 0.0
    %2883 = vmatpush1.msra.mxu0 0.0
    %2884 = vmatprep.subr.mxu0 0.0
    %2885 = vmatpush1.msra.mxu0 0.0
    %2886 = vmatprep.subr.mxu0 0.0
    %2887 = vmatpush1.msra.mxu0 0.0
    %2888 = vmatprep.subr.mxu0 0.0
    %2889 = vmatpush1.msra.mxu0 0.0
    %2890 = vmatprep.subr.mxu0 0.0
    %2891 = vmatpush1.msra.mxu0 0.0
    %2892 = vmatprep.subr.mxu0 0.0
    %2893 = vmatpush1.msra.mxu0 0.0
    %2894 = vmatprep.mubr.f32.mxu0 0.0
    %2895 = vmatmul.mubr.f32.gmra.mrb[0].mxu0 %v2828
    %v2896 = vpop.f32.mrb[0].mxu0
    %v2897 = vadd.f32 %v974, %v2896
    %v2898 = vpop.f32.mrb[0].mxu0
    %2899 = vdwg.mxu0
    %v2900 = vsel %vm385, %v2715, 0
    %2902 = vmatprep.subr.mxu0 0.0
    %2903 = vmatpush1.msra.mxu0 %v965
    %2904 = vmatprep.subr.mxu0 0.0
    %2905 = vmatpush1.msra.mxu0 %v966
    %2906 = vmatprep.subr.mxu0 0.0
    %2907 = vmatpush1.msra.mxu0 %v967
    %2908 = vmatprep.subr.mxu0 0.0
    %2909 = vmatpush1.msra.mxu0 %v968
    %2910 = vmatprep.subr.mxu0 0.0
    %2911 = vmatpush1.msra.mxu0 0.0
    %2912 = vmatprep.subr.mxu0 0.0
    %2913 = vmatpush1.msra.mxu0 0.0
    %2914 = vmatprep.subr.mxu0 0.0
    %2915 = vmatpush1.msra.mxu0 0.0
    %2916 = vmatprep.subr.mxu0 0.0
    %2917 = vmatpush1.msra.mxu0 0.0
    %2918 = vmatprep.subr.mxu0 0.0
    %2919 = vmatpush1.msra.mxu0 0.0
    %2920 = vmatprep.subr.mxu0 0.0
    %2921 = vmatpush1.msra.mxu0 0.0
    %2922 = vmatprep.subr.mxu0 0.0
    %2923 = vmatpush1.msra.mxu0 0.0
    %2924 = vmatprep.subr.mxu0 0.0
    %2925 = vmatpush1.msra.mxu0 0.0
    %2926 = vmatprep.subr.mxu0 0.0
    %2927 = vmatpush1.msra.mxu0 0.0
    %2928 = vmatprep.subr.mxu0 0.0
    %2929 = vmatpush1.msra.mxu0 0.0
    %2930 = vmatprep.subr.mxu0 0.0
    %2931 = vmatpush1.msra.mxu0 0.0
    %2932 = vmatprep.subr.mxu0 0.0
    %2933 = vmatpush1.msra.mxu0 0.0
    %2934 = vmatprep.subr.mxu0 0.0
    %2935 = vmatpush1.msra.mxu0 0.0
    %2936 = vmatprep.subr.mxu0 0.0
    %2937 = vmatpush1.msra.mxu0 0.0
    %2938 = vmatprep.subr.mxu0 0.0
    %2939 = vmatpush1.msra.mxu0 0.0
    %2940 = vmatprep.subr.mxu0 0.0
    %2941 = vmatpush1.msra.mxu0 0.0
    %2942 = vmatprep.subr.mxu0 0.0
    %2943 = vmatpush1.msra.mxu0 0.0
    %2944 = vmatprep.subr.mxu0 0.0
    %2945 = vmatpush1.msra.mxu0 0.0
    %2946 = vmatprep.subr.mxu0 0.0
    %2947 = vmatpush1.msra.mxu0 0.0
    %2948 = vmatprep.subr.mxu0 0.0
    %2949 = vmatpush1.msra.mxu0 0.0
    %2950 = vmatprep.subr.mxu0 0.0
    %2951 = vmatpush1.msra.mxu0 0.0
    %2952 = vmatprep.subr.mxu0 0.0
    %2953 = vmatpush1.msra.mxu0 0.0
    %2954 = vmatprep.subr.mxu0 0.0
    %2955 = vmatpush1.msra.mxu0 0.0
    %2956 = vmatprep.subr.mxu0 0.0
    %2957 = vmatpush1.msra.mxu0 0.0
    %2958 = vmatprep.subr.mxu0 0.0
    %2959 = vmatpush1.msra.mxu0 0.0
    %2960 = vmatprep.subr.mxu0 0.0
    %2961 = vmatpush1.msra.mxu0 0.0
    %2962 = vmatprep.subr.mxu0 0.0
    %2963 = vmatpush1.msra.mxu0 0.0
    %2964 = vmatprep.subr.mxu0 0.0
    %2965 = vmatpush1.msra.mxu0 0.0
    %2966 = vmatprep.mubr.f32.mxu0 0.0
    %2967 = vmatmul.mubr.f32.gmra.mrb[0].mxu0 %v2900
    %v2968 = vpop.f32.mrb[0].mxu0
    %v2969 = vadd.f32 0.0, %v2968
    %v2970 = vpop.f32.mrb[0].mxu0
    %2971 = vdwg.mxu0
    %v2972 = vadd.f32 %v2897, %v2969
    %v2973 = vxor.u32 %v2972, 2147483648
    %v2974 = vmul.f32 %v2973, 1.442695
    %v2975 = vpow.pop %v2974
    %v2976 = vadd.f32 %v2975, 1.0
    %v2977 = vrcp.pop %v2976
    %v2978 = vmul.f32 1.0, %v2977
    %v2979 = vadd.f32 %v2969, %v1258
    %2981 = vrot.lane.b32.xlu0 %v2979, 64
    %v2982 = vpop.permute.xlu0 %2981
    %v2984 = vmul.f32 %v2978, %v2982
    %2986 = vrot.lane.b32.xlu0 %v2984, 64
    %v2987 = vpop.permute.xlu0 %2986
    %v2989 = vadd.f32 %v2897, %v2987
    %v2990 = vtanh.pop %v2989
    %v2991 = vsub.f32 1.0, %v2978
    %2993 = vrot.lane.b32.xlu0 %v2990, 96
    %v2994 = vpop.permute.xlu0 %2993
    %v2996 = vmul.f32 %v2991, %v2994
    %v2997 = vmul.f32 %v2978, %v2712
    %v2998 = vadd.f32 %v2996, %v2997
    %3000 = vrot.lane.b32.xlu0 %v2998, 96
    %v3001 = vpop.permute.xlu0 %3000
    %v3003 = vadd.f32 %v2826, %v3001
    %3004 = vst.msk [vmem:[%s2820] sm:$0xff] %vm385, %v3003
    %s3005 = scalar_lea.vmem [#allocation3], 56
    %v3006 = vld [vmem:[%s3005] sm:$0xff]
    %v3007 = vsel %vm385, %v2824, 0
    %3009 = vmatprep.subr.mxu0 0.0
    %3010 = vmatpush1.msra.mxu0 %v957
    %3011 = vmatprep.subr.mxu0 0.0
    %3012 = vmatpush1.msra.mxu0 %v958
    %3013 = vmatprep.subr.mxu0 0.0
    %3014 = vmatpush1.msra.mxu0 %v959
    %3015 = vmatprep.subr.mxu0 0.0
    %3016 = vmatpush1.msra.mxu0 %v960
    %3017 = vmatprep.subr.mxu0 0.0
    %3018 = vmatpush1.msra.mxu0 0.0
    %3019 = vmatprep.subr.mxu0 0.0
    %3020 = vmatpush1.msra.mxu0 0.0
    %3021 = vmatprep.subr.mxu0 0.0
    %3022 = vmatpush1.msra.mxu0 0.0
    %3023 = vmatprep.subr.mxu0 0.0
    %3024 = vmatpush1.msra.mxu0 0.0
    %3025 = vmatprep.subr.mxu0 0.0
    %3026 = vmatpush1.msra.mxu0 0.0
    %3027 = vmatprep.subr.mxu0 0.0
    %3028 = vmatpush1.msra.mxu0 0.0
    %3029 = vmatprep.subr.mxu0 0.0
    %3030 = vmatpush1.msra.mxu0 0.0
    %3031 = vmatprep.subr.mxu0 0.0
    %3032 = vmatpush1.msra.mxu0 0.0
    %3033 = vmatprep.subr.mxu0 0.0
    %3034 = vmatpush1.msra.mxu0 0.0
    %3035 = vmatprep.subr.mxu0 0.0
    %3036 = vmatpush1.msra.mxu0 0.0
    %3037 = vmatprep.subr.mxu0 0.0
    %3038 = vmatpush1.msra.mxu0 0.0
    %3039 = vmatprep.subr.mxu0 0.0
    %3040 = vmatpush1.msra.mxu0 0.0
    %3041 = vmatprep.subr.mxu0 0.0
    %3042 = vmatpush1.msra.mxu0 0.0
    %3043 = vmatprep.subr.mxu0 0.0
    %3044 = vmatpush1.msra.mxu0 0.0
    %3045 = vmatprep.subr.mxu0 0.0
    %3046 = vmatpush1.msra.mxu0 0.0
    %3047 = vmatprep.subr.mxu0 0.0
    %3048 = vmatpush1.msra.mxu0 0.0
    %3049 = vmatprep.subr.mxu0 0.0
    %3050 = vmatpush1.msra.mxu0 0.0
    %3051 = vmatprep.subr.mxu0 0.0
    %3052 = vmatpush1.msra.mxu0 0.0
    %3053 = vmatprep.subr.mxu0 0.0
    %3054 = vmatpush1.msra.mxu0 0.0
    %3055 = vmatprep.subr.mxu0 0.0
    %3056 = vmatpush1.msra.mxu0 0.0
    %3057 = vmatprep.subr.mxu0 0.0
    %3058 = vmatpush1.msra.mxu0 0.0
    %3059 = vmatprep.subr.mxu0 0.0
    %3060 = vmatpush1.msra.mxu0 0.0
    %3061 = vmatprep.subr.mxu0 0.0
    %3062 = vmatpush1.msra.mxu0 0.0
    %3063 = vmatprep.subr.mxu0 0.0
    %3064 = vmatpush1.msra.mxu0 0.0
    %3065 = vmatprep.subr.mxu0 0.0
    %3066 = vmatpush1.msra.mxu0 0.0
    %3067 = vmatprep.subr.mxu0 0.0
    %3068 = vmatpush1.msra.mxu0 0.0
    %3069 = vmatprep.subr.mxu0 0.0
    %3070 = vmatpush1.msra.mxu0 0.0
    %3071 = vmatprep.subr.mxu0 0.0
    %3072 = vmatpush1.msra.mxu0 0.0
    %3073 = vmatprep.mubr.f32.mxu0 0.0
    %3074 = vmatmul.mubr.f32.gmra.mrb[0].mxu0 %v3007
    %v3075 = vpop.f32.mrb[0].mxu0
    %v3076 = vadd.f32 0.0, %v3075
    %v3077 = vpop.f32.mrb[0].mxu0
    %3078 = vdwg.mxu0
    %v3079 = vadd.f32 %v3006, %v3076
    %v3080 = vxor.u32 %v3079, 2147483648
    %v3081 = vmul.f32 %v3080, 1.442695
    %v3082 = vpow.pop %v3081
    %v3083 = vadd.f32 %v3082, 1.0
    %v3084 = vrcp.pop %v3083
    %v3085 = vmul.f32 1.0, %v3084
    %v3086 = vadd.f32 %v3076, %v1073
    %3088 = vrot.lane.b32.xlu0 %v3086, 64
    %v3089 = vpop.permute.xlu0 %3088
    %v3091 = vmul.f32 %v3085, %v3089
    %3093 = vrot.lane.b32.xlu0 %v3091, 64
    %v3094 = vpop.permute.xlu0 %3093
    %v3096 = vadd.f32 %v3006, %v3094
    %v3097 = vtanh.pop %v3096
    %v3098 = vsub.f32 1.0, %v3085
    %3100 = vrot.lane.b32.xlu0 %v3097, 96
    %v3101 = vpop.permute.xlu0 %3100
    %v3103 = vmul.f32 %v3098, %v3101
    %v3104 = vmul.f32 %v3085, %v2819
    %v3105 = vadd.f32 %v3103, %v3104
    %s3106 = scalar_lea.vmem [#allocation2], 56
    %v3107 = vld [vmem:[%s3106] sm:$0xff]
    %3109 = vrot.lane.b32.xlu0 %v3105, 96
    %v3110 = vpop.permute.xlu0 %3109
    %v3112 = vadd.f32 %v3107, %v3110
    %v3114 = vsel %vm385, %v3112, 0
    %3116 = vmatprep.subr.mxu0 0.0
    %3117 = vmatpush1.msra.mxu0 %v961
    %3118 = vmatprep.subr.mxu0 0.0
    %3119 = vmatpush1.msra.mxu0 %v962
    %3120 = vmatprep.subr.mxu0 0.0
    %3121 = vmatpush1.msra.mxu0 %v963
    %3122 = vmatprep.subr.mxu0 0.0
    %3123 = vmatpush1.msra.mxu0 %v964
    %3124 = vmatprep.subr.mxu0 0.0
    %3125 = vmatpush1.msra.mxu0 0.0
    %3126 = vmatprep.subr.mxu0 0.0
    %3127 = vmatpush1.msra.mxu0 0.0
    %3128 = vmatprep.subr.mxu0 0.0
    %3129 = vmatpush1.msra.mxu0 0.0
    %3130 = vmatprep.subr.mxu0 0.0
    %3131 = vmatpush1.msra.mxu0 0.0
    %3132 = vmatprep.subr.mxu0 0.0
    %3133 = vmatpush1.msra.mxu0 0.0
    %3134 = vmatprep.subr.mxu0 0.0
    %3135 = vmatpush1.msra.mxu0 0.0
    %3136 = vmatprep.subr.mxu0 0.0
    %3137 = vmatpush1.msra.mxu0 0.0
    %3138 = vmatprep.subr.mxu0 0.0
    %3139 = vmatpush1.msra.mxu0 0.0
    %3140 = vmatprep.subr.mxu0 0.0
    %3141 = vmatpush1.msra.mxu0 0.0
    %3142 = vmatprep.subr.mxu0 0.0
    %3143 = vmatpush1.msra.mxu0 0.0
    %3144 = vmatprep.subr.mxu0 0.0
    %3145 = vmatpush1.msra.mxu0 0.0
    %3146 = vmatprep.subr.mxu0 0.0
    %3147 = vmatpush1.msra.mxu0 0.0
    %3148 = vmatprep.subr.mxu0 0.0
    %3149 = vmatpush1.msra.mxu0 0.0
    %3150 = vmatprep.subr.mxu0 0.0
    %3151 = vmatpush1.msra.mxu0 0.0
    %3152 = vmatprep.subr.mxu0 0.0
    %3153 = vmatpush1.msra.mxu0 0.0
    %3154 = vmatprep.subr.mxu0 0.0
    %3155 = vmatpush1.msra.mxu0 0.0
    %3156 = vmatprep.subr.mxu0 0.0
    %3157 = vmatpush1.msra.mxu0 0.0
    %3158 = vmatprep.subr.mxu0 0.0
    %3159 = vmatpush1.msra.mxu0 0.0
    %3160 = vmatprep.subr.mxu0 0.0
    %3161 = vmatpush1.msra.mxu0 0.0
    %3162 = vmatprep.subr.mxu0 0.0
    %3163 = vmatpush1.msra.mxu0 0.0
    %3164 = vmatprep.subr.mxu0 0.0
    %3165 = vmatpush1.msra.mxu0 0.0
    %3166 = vmatprep.subr.mxu0 0.0
    %3167 = vmatpush1.msra.mxu0 0.0
    %3168 = vmatprep.subr.mxu0 0.0
    %3169 = vmatpush1.msra.mxu0 0.0
    %3170 = vmatprep.subr.mxu0 0.0
    %3171 = vmatpush1.msra.mxu0 0.0
    %3172 = vmatprep.subr.mxu0 0.0
    %3173 = vmatpush1.msra.mxu0 0.0
    %3174 = vmatprep.subr.mxu0 0.0
    %3175 = vmatpush1.msra.mxu0 0.0
    %3176 = vmatprep.subr.mxu0 0.0
    %3177 = vmatpush1.msra.mxu0 0.0
    %3178 = vmatprep.subr.mxu0 0.0
    %3179 = vmatpush1.msra.mxu0 0.0
    %3180 = vmatprep.mubr.f32.mxu0 0.0
    %3181 = vmatmul.mubr.f32.gmra.mrb[0].mxu0 %v3114
    %v3182 = vpop.f32.mrb[0].mxu0
    %v3183 = vadd.f32 %v974, %v3182
    %v3184 = vpop.f32.mrb[0].mxu0
    %3185 = vdwg.mxu0
    %v3186 = vsel %vm385, %v3001, 0
    %3188 = vmatprep.subr.mxu0 0.0
    %3189 = vmatpush1.msra.mxu0 %v965
    %3190 = vmatprep.subr.mxu0 0.0
    %3191 = vmatpush1.msra.mxu0 %v966
    %3192 = vmatprep.subr.mxu0 0.0
    %3193 = vmatpush1.msra.mxu0 %v967
    %3194 = vmatprep.subr.mxu0 0.0
    %3195 = vmatpush1.msra.mxu0 %v968
    %3196 = vmatprep.subr.mxu0 0.0
    %3197 = vmatpush1.msra.mxu0 0.0
    %3198 = vmatprep.subr.mxu0 0.0
    %3199 = vmatpush1.msra.mxu0 0.0
    %3200 = vmatprep.subr.mxu0 0.0
    %3201 = vmatpush1.msra.mxu0 0.0
    %3202 = vmatprep.subr.mxu0 0.0
    %3203 = vmatpush1.msra.mxu0 0.0
    %3204 = vmatprep.subr.mxu0 0.0
    %3205 = vmatpush1.msra.mxu0 0.0
    %3206 = vmatprep.subr.mxu0 0.0
    %3207 = vmatpush1.msra.mxu0 0.0
    %3208 = vmatprep.subr.mxu0 0.0
    %3209 = vmatpush1.msra.mxu0 0.0
    %3210 = vmatprep.subr.mxu0 0.0
    %3211 = vmatpush1.msra.mxu0 0.0
    %3212 = vmatprep.subr.mxu0 0.0
    %3213 = vmatpush1.msra.mxu0 0.0
    %3214 = vmatprep.subr.mxu0 0.0
    %3215 = vmatpush1.msra.mxu0 0.0
    %3216 = vmatprep.subr.mxu0 0.0
    %3217 = vmatpush1.msra.mxu0 0.0
    %3218 = vmatprep.subr.mxu0 0.0
    %3219 = vmatpush1.msra.mxu0 0.0
    %3220 = vmatprep.subr.mxu0 0.0
    %3221 = vmatpush1.msra.mxu0 0.0
    %3222 = vmatprep.subr.mxu0 0.0
    %3223 = vmatpush1.msra.mxu0 0.0
    %3224 = vmatprep.subr.mxu0 0.0
    %3225 = vmatpush1.msra.mxu0 0.0
    %3226 = vmatprep.subr.mxu0 0.0
    %3227 = vmatpush1.msra.mxu0 0.0
    %3228 = vmatprep.subr.mxu0 0.0
    %3229 = vmatpush1.msra.mxu0 0.0
    %3230 = vmatprep.subr.mxu0 0.0
    %3231 = vmatpush1.msra.mxu0 0.0
    %3232 = vmatprep.subr.mxu0 0.0
    %3233 = vmatpush1.msra.mxu0 0.0
    %3234 = vmatprep.subr.mxu0 0.0
    %3235 = vmatpush1.msra.mxu0 0.0
    %3236 = vmatprep.subr.mxu0 0.0
    %3237 = vmatpush1.msra.mxu0 0.0
    %3238 = vmatprep.subr.mxu0 0.0
    %3239 = vmatpush1.msra.mxu0 0.0
    %3240 = vmatprep.subr.mxu0 0.0
    %3241 = vmatpush1.msra.mxu0 0.0
    %3242 = vmatprep.subr.mxu0 0.0
    %3243 = vmatpush1.msra.mxu0 0.0
    %3244 = vmatprep.subr.mxu0 0.0
    %3245 = vmatpush1.msra.mxu0 0.0
    %3246 = vmatprep.subr.mxu0 0.0
    %3247 = vmatpush1.msra.mxu0 0.0
    %3248 = vmatprep.subr.mxu0 0.0
    %3249 = vmatpush1.msra.mxu0 0.0
    %3250 = vmatprep.subr.mxu0 0.0
    %3251 = vmatpush1.msra.mxu0 0.0
    %3252 = vmatprep.mubr.f32.mxu0 0.0
    %3253 = vmatmul.mubr.f32.gmra.mrb[0].mxu0 %v3186
    %v3254 = vpop.f32.mrb[0].mxu0
    %v3255 = vadd.f32 0.0, %v3254
    %v3256 = vpop.f32.mrb[0].mxu0
    %3257 = vdwg.mxu0
    %v3258 = vadd.f32 %v3183, %v3255
    %v3259 = vxor.u32 %v3258, 2147483648
    %v3260 = vmul.f32 %v3259, 1.442695
    %v3261 = vpow.pop %v3260
    %v3262 = vadd.f32 %v3261, 1.0
    %v3263 = vrcp.pop %v3262
    %v3264 = vmul.f32 1.0, %v3263
    %v3265 = vadd.f32 %v3255, %v1258
    %3267 = vrot.lane.b32.xlu0 %v3265, 64
    %v3268 = vpop.permute.xlu0 %3267
    %v3270 = vmul.f32 %v3264, %v3268
    %3272 = vrot.lane.b32.xlu0 %v3270, 64
    %v3273 = vpop.permute.xlu0 %3272
    %v3275 = vadd.f32 %v3183, %v3273
    %v3276 = vtanh.pop %v3275
    %v3277 = vsub.f32 1.0, %v3264
    %3279 = vrot.lane.b32.xlu0 %v3276, 96
    %v3280 = vpop.permute.xlu0 %3279
    %v3282 = vmul.f32 %v3277, %v3280
    %v3283 = vmul.f32 %v3264, %v2998
    %v3284 = vadd.f32 %v3282, %v3283
    %3286 = vrot.lane.b32.xlu0 %v3284, 96
    %v3287 = vpop.permute.xlu0 %3286
    %v3289 = vadd.f32 %v3112, %v3287
    %3290 = vst.msk [vmem:[%s3106] sm:$0xff] %vm385, %v3289
    %3291 = vst.msk [vmem:[#allocation4] sm:$0xff] %vm385, %v3110
    %3292 = vst.msk [vmem:[%s989] sm:$0xff] %vm385, %v3287
    %v3293 = vld [vmem:[#allocation2] sm:$0xff]
    %v3294 = vld [vmem:[#allocation2 + $0x8] sm:$0xff]
    %v3295 = vld [vmem:[#allocation2 + $0x10] sm:$0xff]
    %v3296 = vld [vmem:[#allocation2 + $0x18] sm:$0xff]
    %v3297 = vld [vmem:[#allocation2 + $0x20] sm:$0xff]
    %v3298 = vld [vmem:[#allocation2 + $0x28] sm:$0xff]
    %v3299 = vld [vmem:[#allocation2 + $0x30] sm:$0xff]
    %v3300 = vld [vmem:[#allocation2 + $0x38] sm:$0xff]
    %v3301 = vld [vmem:[#allocation22] sm:$0xff]
    %v3302 = vld [vmem:[#allocation22 + $0x8] sm:$0xff]
    %v3303 = vld [vmem:[#allocation22 + $0x10] sm:$0xff]
    %v3304 = vld [vmem:[#allocation22 + $0x18] sm:$0xff]
    %v3305 = vld [vmem:[%s18] sm:$0x1]
    %v3307 = vlaneseq
    %v3308 = vshrl.u32 %v3307, 7
    %v3309 = vsub.s32 0, %v3308
    %v3310 = vrot.slane %v3305, %v3309
    %v3313 = vsel %vm385, %v3293, 0
    %v3316 = vsel %vm385, %v3294, 0
    %v3319 = vsel %vm385, %v3295, 0
    %v3322 = vsel %vm385, %v3296, 0
    %v3325 = vsel %vm385, %v3297, 0
    %v3328 = vsel %vm385, %v3298, 0
    %v3331 = vsel %vm385, %v3299, 0
    %v3334 = vsel %vm385, %v3300, 0
    %3336 = vmatprep.subr.mxu0 0.0
    %3337 = vmatpush1.msra.mxu0 %v3301
    %3338 = vmatprep.subr.mxu0 0.0
    %3339 = vmatpush1.msra.mxu0 %v3302
    %3340 = vmatprep.subr.mxu0 0.0
    %3341 = vmatpush1.msra.mxu0 %v3303
    %3342 = vmatprep.subr.mxu0 0.0
    %3343 = vmatpush1.msra.mxu0 %v3304
    %3344 = vmatprep.subr.mxu0 0.0
    %3345 = vmatpush1.msra.mxu0 0.0
    %3346 = vmatprep.subr.mxu0 0.0
    %3347 = vmatpush1.msra.mxu0 0.0
    %3348 = vmatprep.subr.mxu0 0.0
    %3349 = vmatpush1.msra.mxu0 0.0
    %3350 = vmatprep.subr.mxu0 0.0
    %3351 = vmatpush1.msra.mxu0 0.0
    %3352 = vmatprep.subr.mxu0 0.0
    %3353 = vmatpush1.msra.mxu0 0.0
    %3354 = vmatprep.subr.mxu0 0.0
    %3355 = vmatpush1.msra.mxu0 0.0
    %3356 = vmatprep.subr.mxu0 0.0
    %3357 = vmatpush1.msra.mxu0 0.0
    %3358 = vmatprep.subr.mxu0 0.0
    %3359 = vmatpush1.msra.mxu0 0.0
    %3360 = vmatprep.subr.mxu0 0.0
    %3361 = vmatpush1.msra.mxu0 0.0
    %3362 = vmatprep.subr.mxu0 0.0
    %3363 = vmatpush1.msra.mxu0 0.0
    %3364 = vmatprep.subr.mxu0 0.0
    %3365 = vmatpush1.msra.mxu0 0.0
    %3366 = vmatprep.subr.mxu0 0.0
    %3367 = vmatpush1.msra.mxu0 0.0
    %3368 = vmatprep.subr.mxu0 0.0
    %3369 = vmatpush1.msra.mxu0 0.0
    %3370 = vmatprep.subr.mxu0 0.0
    %3371 = vmatpush1.msra.mxu0 0.0
    %3372 = vmatprep.subr.mxu0 0.0
    %3373 = vmatpush1.msra.mxu0 0.0
    %3374 = vmatprep.subr.mxu0 0.0
    %3375 = vmatpush1.msra.mxu0 0.0
    %3376 = vmatprep.subr.mxu0 0.0
    %3377 = vmatpush1.msra.mxu0 0.0
    %3378 = vmatprep.subr.mxu0 0.0
    %3379 = vmatpush1.msra.mxu0 0.0
    %3380 = vmatprep.subr.mxu0 0.0
    %3381 = vmatpush1.msra.mxu0 0.0
    %3382 = vmatprep.subr.mxu0 0.0
    %3383 = vmatpush1.msra.mxu0 0.0
    %3384 = vmatprep.subr.mxu0 0.0
    %3385 = vmatpush1.msra.mxu0 0.0
    %3386 = vmatprep.subr.mxu0 0.0
    %3387 = vmatpush1.msra.mxu0 0.0
    %3388 = vmatprep.subr.mxu0 0.0
    %3389 = vmatpush1.msra.mxu0 0.0
    %3390 = vmatprep.subr.mxu0 0.0
    %3391 = vmatpush1.msra.mxu0 0.0
    %3392 = vmatprep.subr.mxu0 0.0
    %3393 = vmatpush1.msra.mxu0 0.0
    %3394 = vmatprep.subr.mxu0 0.0
    %3395 = vmatpush1.msra.mxu0 0.0
    %3396 = vmatprep.subr.mxu0 0.0
    %3397 = vmatpush1.msra.mxu0 0.0
    %3398 = vmatprep.subr.mxu0 0.0
    %3399 = vmatpush1.msra.mxu0 0.0
    %3400 = vmatprep.mubr.f32.mxu0 0.0
    %3401 = vmatmul.mubr.f32.gmra.mrb[0].mxu0 %v3313
    %v3402 = vpop.f32.mrb[0].mxu0
    %v3403 = vadd.f32 %v3310, %v3402
    %v3404 = vpop.f32.mrb[0].mxu0
    %3405 = vmatprep.mubr.f32.mxu0 0.0
    %3406 = vmatmul.mubr.f32.gmra.mrb[0].mxu0 %v3316
    %v3407 = vpop.f32.mrb[0].mxu0
    %v3408 = vadd.f32 %v3310, %v3407
    %v3409 = vpop.f32.mrb[0].mxu0
    %3410 = vmatprep.mubr.f32.mxu0 0.0
    %3411 = vmatmul.mubr.f32.gmra.mrb[0].mxu0 %v3319
    %v3412 = vpop.f32.mrb[0].mxu0
    %v3413 = vadd.f32 %v3310, %v3412
    %v3414 = vpop.f32.mrb[0].mxu0
    %3415 = vmatprep.mubr.f32.mxu0 0.0
    %3416 = vmatmul.mubr.f32.gmra.mrb[0].mxu0 %v3322
    %v3417 = vpop.f32.mrb[0].mxu0
    %v3418 = vadd.f32 %v3310, %v3417
    %v3419 = vpop.f32.mrb[0].mxu0
    %3420 = vmatprep.mubr.f32.mxu0 0.0
    %3421 = vmatmul.mubr.f32.gmra.mrb[0].mxu0 %v3325
    %v3422 = vpop.f32.mrb[0].mxu0
    %v3423 = vadd.f32 %v3310, %v3422
    %v3424 = vpop.f32.mrb[0].mxu0
    %3425 = vmatprep.mubr.f32.mxu0 0.0
    %3426 = vmatmul.mubr.f32.gmra.mrb[0].mxu0 %v3328
    %v3427 = vpop.f32.mrb[0].mxu0
    %v3428 = vadd.f32 %v3310, %v3427
    %v3429 = vpop.f32.mrb[0].mxu0
    %3430 = vmatprep.mubr.f32.mxu0 0.0
    %3431 = vmatmul.mubr.f32.gmra.mrb[0].mxu0 %v3331
    %v3432 = vpop.f32.mrb[0].mxu0
    %v3433 = vadd.f32 %v3310, %v3432
    %v3434 = vpop.f32.mrb[0].mxu0
    %3435 = vmatprep.mubr.f32.mxu0 0.0
    %3436 = vmatmul.mubr.f32.gmra.mrb[0].mxu0 %v3334
    %v3437 = vpop.f32.mrb[0].mxu0
    %v3438 = vadd.f32 %v3310, %v3437
    %v3439 = vpop.f32.mrb[0].mxu0
    %3440 = vdwg.mxu0
    %3441 = vst.msk [vmem:[#allocation23] sm:$0xff] %vm385, %v3403
    %3442 = vst.msk [vmem:[#allocation23 + $0x8] sm:$0xff] %vm385, %v3408
    %3443 = vst.msk [vmem:[#allocation23 + $0x10] sm:$0xff] %vm385, %v3413
    %3444 = vst.msk [vmem:[#allocation23 + $0x18] sm:$0xff] %vm385, %v3418
    %3445 = vst.msk [vmem:[#allocation23 + $0x20] sm:$0xff] %vm385, %v3423
    %3446 = vst.msk [vmem:[#allocation23 + $0x28] sm:$0xff] %vm385, %v3428
    %3447 = vst.msk [vmem:[#allocation23 + $0x30] sm:$0xff] %vm385, %v3433
    %3448 = vst.msk [vmem:[#allocation23 + $0x38] sm:$0xff] %vm385, %v3438
    // Predicated region
    $region126: #{tpu_custom_call.1} parent=1 // pred_check
      _
    $region127: #{tpu_custom_call.1} parent=1 // pred_check_branch
      %3450 = sbr.rel (0) target = $region129
    $region128: #{tpu_custom_call.1} parent=1 // pred_region
      %s3452 = ssub.s32 1024, 1024
      %3453 = vsyncadd [#allocation7], %s3452
      %s3454 = sshll.u32 [#allocation23], 4
      %s3455 = int_to_ptr.vmem [resolvable:$true] %s3454
      %3460 = dma.vmem_to_hbm [thread:$0]  %s3455, 1024, %s19, [#allocation7], 128, 128, 8
    $region129: #{tpu_custom_call.1} parent=1 // pred_fallthru
      _
    // Predicated region
    $region130: #{tpu_custom_call.1} parent=1 // pred_check
      _
    $region131: #{tpu_custom_call.1} parent=1 // pred_check_branch
      %3462 = sbr.rel (0) target = $region133
    $region132: #{tpu_custom_call.1} parent=1 // pred_region
      %3463 = dma.done [#allocation7], 1024
    $region133: #{tpu_custom_call.1} parent=1 // pred_fallthru
      _
    %3464 = vsyncpa [#allocation6], 1
    %3465 = vsyncpa [#allocation9], 1
    %3466 = vsyncpa [#allocation12], 1
    %3467 = vsyncpa [#allocation15], 1
    %3468 = vsyncpa [#allocation18], 1
    %3469 = vsyncpa [#allocation21], 1
    %3470 = vsyncpa [#allocation7], 1

</llo_original>
